<compile_context>
chip_gen: v5e
topology: v5e:2x2
jax: 0.10.0
libtpu: 0.0.40
codegen_flags: <defaults>
</compile_context>

<pallas_src>
import math
from functools import partial

import jax
import jax.numpy as jnp
from jax import lax
from jax.experimental import pallas as pl
from jax.experimental.pallas import tpu as pltpu


# ---------------------------------------------------------------------------
# helpers (traced inside the kernel)
# ---------------------------------------------------------------------------
def _layernorm_rows(x, gamma, beta, eps=1e-5):
    mu = jnp.mean(x, axis=-1, keepdims=True)
    var = jnp.mean(jnp.square(x - mu), axis=-1, keepdims=True)
    y = (x - mu) * lax.rsqrt(var + eps) * gamma
    if beta is not None:
        y = y + beta
    return y


def _encoder_block(x, ln1_g, wqkv, wo, ln2_g, wf1, wf2, ctx_ref, *, nhead):
    """One pre-norm TransformerEncoderLayer (bias=False, ReLU FFN, eval mode)."""
    seq_len, d = x.shape
    hd = d // nhead
    scale = 1.0 / math.sqrt(hd)

    # --- self-attention block (pre-norm), fused QKV projection ---
    xn = _layernorm_rows(x, ln1_g, None)
    qkv = jnp.dot(xn, wqkv, preferred_element_type=jnp.float32)          # (L, 3D)
    for h in range(nhead):
        qs = qkv[:, h * hd:(h + 1) * hd]
        ks = qkv[:, d + h * hd:d + (h + 1) * hd]
        vs = qkv[:, 2 * d + h * hd:2 * d + (h + 1) * hd]
        s = lax.dot_general(qs, ks, (((1,), (1,)), ((), ())),
                            preferred_element_type=jnp.float32) * scale
        s = s - jnp.max(s, axis=-1, keepdims=True)
        e = jnp.exp(s)
        p = e / jnp.sum(e, axis=-1, keepdims=True)
        # each head writes its own lane slice of the VMEM slab (no lane concat)
        ctx_ref[:, h * hd:(h + 1) * hd] = jnp.dot(
            p, vs, preferred_element_type=jnp.float32)
    x = x + jnp.dot(ctx_ref[...], wo, preferred_element_type=jnp.float32)

    # --- feed-forward block (pre-norm, ReLU) ---
    xn2 = _layernorm_rows(x, ln2_g, None)
    h1 = jnp.maximum(jnp.dot(xn2, wf1, preferred_element_type=jnp.float32), 0.0)
    return x + jnp.dot(h1, wf2, preferred_element_type=jnp.float32)


# ---------------------------------------------------------------------------
# fused forward kernel
# ---------------------------------------------------------------------------
def _fused_kernel(w1_ref, w2_ref, u_ref, v_ref,
                  ng_ref, nb_ref, w3_ref, pb_ref, cls_ref, pos_ref,
                  e1ln1_ref, e1qkv_ref, e1wo_ref, e1ln2_ref, e1f1_ref, e1f2_ref,
                  e2ln1_ref, e2qkv_ref, e2wo_ref, e2ln2_ref, e2f1_ref, e2f2_ref,
                  hlnw_ref, hlnb_ref, hw_ref, hb_ref,
                  o_ref,
                  xn_sc, acc_sc, xseq_sc, ctx_sc,
                  *, bs, l, d, nhead):
    n_items = bs * l
    d2 = d * d
    seq_len = l + 1

    # ---- Phase 1: EquivariantLinear2 + outer product + LayerNorm(d^2) ----
    g2 = ng_ref[...]                                   # (d, d) = gamma reshaped
    b2 = nb_ref[...]                                   # (d, d) = beta reshaped
    for b in range(bs):
        for j in range(l):
            idx = b * l + j
            uh = jnp.dot(w1_ref[j], u_ref[b, j],
                         preferred_element_type=jnp.float32)             # (d, r)
            vh = jnp.dot(w2_ref[j], v_ref[b, j],
                         preferred_element_type=jnp.float32)             # (d, r)
            inv = lax.dot_general(uh, vh, (((1,), (1,)), ((), ())),
                                  preferred_element_type=jnp.float32)    # (d, d)
            mu = jnp.sum(jnp.sum(inv, axis=1, keepdims=True),
                         axis=0, keepdims=True) / d2
            cen = inv - mu
            var = jnp.sum(jnp.sum(cen * cen, axis=1, keepdims=True),
                          axis=0, keepdims=True) / d2
            # row block [idx*d, idx*d+d) of the flattened (n_items*d, d) slab
            xn_sc[pl.ds(idx * d, d), :] = cen * lax.rsqrt(var + 1e-5) * g2 + b2

    # ---- Phase 2: in_proj Linear(d^2 -> d), batched over all bs*l items ----
    # y[n, o] = sum_i ( xn[n, i, :] @ W3[i] )[o]; rows of fixed i are gathered
    # with a strided pl.ds load from the VMEM slab (no reshape needed).
    acc = jnp.zeros((n_items, d), jnp.float32) + pb_ref[...]
    for i in range(d):
        acc = acc + jnp.dot(xn_sc[pl.ds(i, n_items, stride=d), :], w3_ref[i],
                            preferred_element_type=jnp.float32)
    acc_sc[...] = acc

    # hoist weight loads out of the batch loop
    e1 = (e1ln1_ref[...], e1qkv_ref[...], e1wo_ref[...],
          e1ln2_ref[...], e1f1_ref[...], e1f2_ref[...])
    e2 = (e2ln1_ref[...], e2qkv_ref[...], e2wo_ref[...],
          e2ln2_ref[...], e2f1_ref[...], e2f2_ref[...])
    hlnw = hlnw_ref[...]
    hlnb = hlnb_ref[...]
    hw = hw_ref[...]
    hb = hb_ref[...]
    cls_row = cls_ref[...] + pos_ref[0:1, :]

    # ---- Phase 3: cls/pos assembly, 2 encoder layers, output head ----
    for b in range(bs):
        xseq_sc[0:1, :] = cls_row
        xseq_sc[1:seq_len, :] = acc_sc[pl.ds(b * l, l), :] + pos_ref[1:seq_len, :]
        x = xseq_sc[...]                               # (seq_len, d)
        x = _encoder_block(x, *e1, ctx_sc, nhead=nhead)
        x = _encoder_block(x, *e2, ctx_sc, nhead=nhead)
        xseq_sc[...] = x                               # round-trip for safe row slice
        cls_out = xseq_sc[0:1, :]                      # (1, d)
        hn = _layernorm_rows(cls_out, hlnw, hlnb)
        o_ref[b:b + 1, :] = jnp.dot(hn, hw,
                                    preferred_element_type=jnp.float32) + hb


# ---------------------------------------------------------------------------
# wrapper: a single grid-less pallas_call, everything resident in VMEM
# ---------------------------------------------------------------------------
def temp_glmlp_forward(up, vp, params, *, nhead):
    bs, l, _, _ = up.shape
    d = params["w1p"].shape[1]
    seq_len = l + 1
    out_dim = params["head_w_t"].shape[1]
    return pl.pallas_call(
        partial(_fused_kernel, bs=bs, l=l, d=d, nhead=nhead),
        out_shape=jax.ShapeDtypeStruct((bs, out_dim), jnp.float32),
        scratch_shapes=[
            pltpu.VMEM((bs * l * d, d), jnp.float32),   # normalized invariants
            pltpu.VMEM((bs * l, d), jnp.float32),       # in_proj outputs
            pltpu.VMEM((seq_len, d), jnp.float32),      # per-batch sequence
            pltpu.VMEM((seq_len, d), jnp.float32),      # attention context slab
        ],
    )(params["w1p"], params["w2p"], up, vp,
      params["norm_g2"], params["norm_b2"],
      params["inproj_w3"], params["inproj_b"],
      params["cls_token"], params["pos_embed"],
      *params["enc1"], *params["enc2"],
      params["head_ln_w"], params["head_ln_b"],
      params["head_w_t"], params["head_b"])


# ---------------------------------------------------------------------------
# pure-JAX reference (same math, used only for a correctness check)
# ---------------------------------------------------------------------------
def reference_forward(up, vp, params, *, nhead):
    P = lax.Precision.HIGHEST
    bs, l, _, _ = up.shape
    d = params["w1p"].shape[1]
    d2 = d * d
    hd = d // nhead
    seq_len = l + 1

    def ln(x, g, b, eps=1e-5):
        mu = x.mean(-1, keepdims=True)
        var = ((x - mu) ** 2).mean(-1, keepdims=True)
        y = (x - mu) / jnp.sqrt(var + eps) * g
        return y if b is None else y + b

    uh = jnp.einsum("jdn,bjnr->bjdr", params["w1p"], up, precision=P)
    vh = jnp.einsum("jdm,bjmr->bjdr", params["w2p"], vp, precision=P)
    inv = jnp.einsum("bjdr,bjer->bjde", uh, vh, precision=P).reshape(bs, l, d2)
    x = ln(inv, params["norm_g2"].reshape(d2), params["norm_b2"].reshape(d2))
    x = jnp.einsum("blk,kd->bld", x, params["inproj_w3"].reshape(d2, d),
                   precision=P) + params["inproj_b"][0]
    cls = jnp.broadcast_to(params["cls_token"][None], (bs, 1, d))
    x = jnp.concatenate([cls, x], axis=1) + params["pos_embed"][None]
    for (ln1, wqkv, wo, ln2, wf1, wf2) in (params["enc1"], params["enc2"]):
        xn = ln(x, ln1[0], None)
        qkv = jnp.einsum("bld,df->blf", xn, wqkv, precision=P)
        q = qkv[..., :d].reshape(bs, seq_len, nhead, hd)
        k = qkv[..., d:2 * d].reshape(bs, seq_len, nhead, hd)
        v = qkv[..., 2 * d:].reshape(bs, seq_len, nhead, hd)
        s = jnp.einsum("bqhe,bkhe->bhqk", q, k, precision=P) / math.sqrt(hd)
        p = jax.nn.softmax(s, axis=-1)
        ctx = jnp.einsum("bhqk,bkhe->bqhe", p, v, precision=P).reshape(bs, seq_len, d)
        x = x + jnp.einsum("bld,de->ble", ctx, wo, precision=P)
        xn2 = ln(x, ln2[0], None)
        h1 = jax.nn.relu(jnp.einsum("bld,df->blf", xn2, wf1, precision=P))
        x = x + jnp.einsum("blf,fd->bld", h1, wf2, precision=P)
    cls_out = x[:, 0]
    out = ln(cls_out, params["head_ln_w"][0], params["head_ln_b"][0])
    return jnp.einsum("bd,do->bo", out, params["head_w_t"],
                      precision=P) + params["head_b"][0]


# ---------------------------------------------------------------------------
if __name__ == "__main__":
    bs = 2
    hidden_dim = 32                     # D; nhead = hidden_dim // 16 = 2
    out_dim = 8
    n_list = [8, 6, 8]
    m_list = [8, 8, 6]
    r = 4
    l = len(n_list)
    d = hidden_dim
    d2 = d * d
    nmax, mmax = max(n_list), max(m_list)
    nhead = hidden_dim // 16
    seq_len = l + 1

    keys = iter(jax.random.split(jax.random.PRNGKey(0), 64))

    # --- first-layer weights, zero-padded over ragged n_j / m_j (exact) ---
    w1p = jnp.zeros((l, d, nmax), jnp.float32)
    w2p = jnp.zeros((l, d, mmax), jnp.float32)
    for j, (nj, mj) in enumerate(zip(n_list, m_list)):
        w1p = w1p.at[j, :, :nj].set(
            jax.random.normal(next(keys), (d, nj), jnp.float32) / math.sqrt(nj))
        w2p = w2p.at[j, :, :mj].set(
            jax.random.normal(next(keys), (d, mj), jnp.float32) / math.sqrt(mj))

    def lin_t(key, in_f, out_f):        # weights stored as (in, out) for x @ W
        return jax.random.normal(key, (in_f, out_f), jnp.float32) / math.sqrt(in_f)

    def make_encoder():
        return (
            1.0 + 0.1 * jax.random.normal(next(keys), (1, d), jnp.float32),  # norm1 w
            lin_t(next(keys), d, 3 * d),                                     # Wq|Wk|Wv
            lin_t(next(keys), d, d),                                         # Wo^T
            1.0 + 0.1 * jax.random.normal(next(keys), (1, d), jnp.float32),  # norm2 w
            lin_t(next(keys), d, 2 * d),                                     # linear1^T
            lin_t(next(keys), 2 * d, d),                                     # linear2^T
        )

    params = {
        "w1p": w1p,
        "w2p": w2p,
        "norm_g2": 1.0 + 0.1 * jax.random.normal(next(keys), (d, d), jnp.float32),
        "norm_b2": 0.05 * jax.random.normal(next(keys), (d, d), jnp.float32),
        "inproj_w3": lin_t(next(keys), d2, d).reshape(d, d, d),
        "inproj_b": 0.01 * jax.random.normal(next(keys), (1, d), jnp.float32),
        "cls_token": jax.random.normal(next(keys), (1, d), jnp.float32) / math.sqrt(d),
        "pos_embed": jax.random.normal(next(keys), (seq_len, d), jnp.float32) / math.sqrt(d),
        "enc1": make_encoder(),
        "enc2": make_encoder(),
        "head_ln_w": 1.0 + 0.1 * jax.random.normal(next(keys), (1, d), jnp.float32),
        "head_ln_b": 0.05 * jax.random.normal(next(keys), (1, d), jnp.float32),
        "head_w_t": lin_t(next(keys), d, out_dim),
        "head_b": 0.01 * jax.random.normal(next(keys), (1, out_dim), jnp.float32),
    }

    # --- inputs uvs = [(u_j, v_j)] zero-padded into dense (bs, l, Nmax/Mmax, r) ---
    up = jnp.zeros((bs, l, nmax, r), jnp.float32)
    vp = jnp.zeros((bs, l, mmax, r), jnp.float32)
    for j, (nj, mj) in enumerate(zip(n_list, m_list)):
        up = up.at[:, j, :nj, :].set(
            jax.random.normal(next(keys), (bs, nj, r), jnp.float32))
        vp = vp.at[:, j, :mj, :].set(
            jax.random.normal(next(keys), (bs, mj, r), jnp.float32))

    out = temp_glmlp_forward(up, vp, params, nhead=nhead)
    out = jax.block_until_ready(out)

    ref = reference_forward(up, vp, params, nhead=nhead)
    assert out.shape == (bs, out_dim)
    err = float(jnp.max(jnp.abs(out - ref)))
    assert jnp.allclose(out, ref, rtol=2e-3, atol=2e-3), f"max abs diff {err}"

    print("KERNEL_OK")
</pallas_src>

<mosaic_0001>
module attributes {stable_mosaic.version = 11 : i64} {
  func.func @_fused_kernel(%arg0: memref<3x32x8xf32, #tpu.memory_space<vmem>>, %arg1: memref<3x32x8xf32, #tpu.memory_space<vmem>>, %arg2: memref<2x3x8x4xf32, #tpu.memory_space<vmem>>, %arg3: memref<2x3x8x4xf32, #tpu.memory_space<vmem>>, %arg4: memref<32x32xf32, #tpu.memory_space<vmem>>, %arg5: memref<32x32xf32, #tpu.memory_space<vmem>>, %arg6: memref<32x32x32xf32, #tpu.memory_space<vmem>>, %arg7: memref<1x32xf32, #tpu.memory_space<vmem>>, %arg8: memref<1x32xf32, #tpu.memory_space<vmem>>, %arg9: memref<4x32xf32, #tpu.memory_space<vmem>>, %arg10: memref<1x32xf32, #tpu.memory_space<vmem>>, %arg11: memref<32x96xf32, #tpu.memory_space<vmem>>, %arg12: memref<32x32xf32, #tpu.memory_space<vmem>>, %arg13: memref<1x32xf32, #tpu.memory_space<vmem>>, %arg14: memref<32x64xf32, #tpu.memory_space<vmem>>, %arg15: memref<64x32xf32, #tpu.memory_space<vmem>>, %arg16: memref<1x32xf32, #tpu.memory_space<vmem>>, %arg17: memref<32x96xf32, #tpu.memory_space<vmem>>, %arg18: memref<32x32xf32, #tpu.memory_space<vmem>>, %arg19: memref<1x32xf32, #tpu.memory_space<vmem>>, %arg20: memref<32x64xf32, #tpu.memory_space<vmem>>, %arg21: memref<64x32xf32, #tpu.memory_space<vmem>>, %arg22: memref<1x32xf32, #tpu.memory_space<vmem>>, %arg23: memref<1x32xf32, #tpu.memory_space<vmem>>, %arg24: memref<32x8xf32, #tpu.memory_space<vmem>>, %arg25: memref<1x8xf32, #tpu.memory_space<vmem>>, %arg26: memref<2x8xf32, #tpu.memory_space<vmem>>, %arg27: memref<192x32xf32, #tpu.memory_space<vmem>>, %arg28: memref<6x32xf32, #tpu.memory_space<vmem>>, %arg29: memref<4x32xf32, #tpu.memory_space<vmem>>, %arg30: memref<4x32xf32, #tpu.memory_space<vmem>>) attributes {dimension_semantics = [], scalar_prefetch = 0 : i64, scratch_operands = 4 : i64, tpu.core_type = #tpu.core_type<tc>} {
    %c0 = arith.constant 0 : index
    %c0_0 = arith.constant 0 : index
    %0 = vector.load %arg4[%c0, %c0_0] : memref<32x32xf32, #tpu.memory_space<vmem>>, vector<32x32xf32>
    %c0_1 = arith.constant 0 : index
    %c0_2 = arith.constant 0 : index
    %1 = vector.load %arg5[%c0_1, %c0_2] : memref<32x32xf32, #tpu.memory_space<vmem>>, vector<32x32xf32>
    %c0_3 = arith.constant 0 : index
    %c0_4 = arith.constant 0 : index
    %c0_5 = arith.constant 0 : index
    %2 = vector.load %arg0[%c0_3, %c0_4, %c0_5] : memref<3x32x8xf32, #tpu.memory_space<vmem>>, vector<1x32x8xf32>
    %3 = vector.shape_cast %2 : vector<1x32x8xf32> to vector<32x8xf32>
    %c0_6 = arith.constant 0 : index
    %c0_7 = arith.constant 0 : index
    %c0_8 = arith.constant 0 : index
    %c0_9 = arith.constant 0 : index
    %4 = vector.load %arg2[%c0_6, %c0_7, %c0_8, %c0_9] : memref<2x3x8x4xf32, #tpu.memory_space<vmem>>, vector<1x1x8x4xf32>
    %5 = vector.shape_cast %4 : vector<1x1x8x4xf32> to vector<8x4xf32>
    %cst = arith.constant dense<0.000000e+00> : vector<32x4xf32>
    %6 = tpu.matmul %3, %5, %cst {dimension_numbers = #tpu.dot_dimension_numbers<[1], [0], [0], [1], [0, 0, 1, 1], [], []>} : vector<32x8xf32>, vector<8x4xf32>, vector<32x4xf32> -> vector<32x4xf32>
    %c0_10 = arith.constant 0 : index
    %c0_11 = arith.constant 0 : index
    %c0_12 = arith.constant 0 : index
    %7 = vector.load %arg1[%c0_10, %c0_11, %c0_12] : memref<3x32x8xf32, #tpu.memory_space<vmem>>, vector<1x32x8xf32>
    %8 = vector.shape_cast %7 : vector<1x32x8xf32> to vector<32x8xf32>
    %c0_13 = arith.constant 0 : index
    %c0_14 = arith.constant 0 : index
    %c0_15 = arith.constant 0 : index
    %c0_16 = arith.constant 0 : index
    %9 = vector.load %arg3[%c0_13, %c0_14, %c0_15, %c0_16] : memref<2x3x8x4xf32, #tpu.memory_space<vmem>>, vector<1x1x8x4xf32>
    %10 = vector.shape_cast %9 : vector<1x1x8x4xf32> to vector<8x4xf32>
    %cst_17 = arith.constant dense<0.000000e+00> : vector<32x4xf32>
    %11 = tpu.matmul %8, %10, %cst_17 {dimension_numbers = #tpu.dot_dimension_numbers<[1], [0], [0], [1], [0, 0, 1, 1], [], []>} : vector<32x8xf32>, vector<8x4xf32>, vector<32x4xf32> -> vector<32x4xf32>
    %cst_18 = arith.constant dense<0.000000e+00> : vector<32x32xf32>
    %12 = tpu.matmul %6, %11, %cst_18 {dimension_numbers = #tpu.dot_dimension_numbers<[1], [1], [0], [0], [0, 0, 1, 0], [], []>} : vector<32x4xf32>, vector<32x4xf32>, vector<32x32xf32> -> vector<32x32xf32>
    %cst_19 = arith.constant dense<0.000000e+00> : vector<32xf32>
    %13 = vector.multi_reduction <add>, %12, %cst_19 [1] : vector<32x32xf32> to vector<32xf32>
    %14 = vector.shape_cast %13 : vector<32xf32> to vector<32x1xf32>
    %cst_20 = arith.constant dense<0.000000e+00> : vector<1xf32>
    %15 = vector.multi_reduction <add>, %14, %cst_20 [0] : vector<32x1xf32> to vector<1xf32>
    %16 = vector.shape_cast %15 : vector<1xf32> to vector<1x1xf32>
    %cst_21 = arith.constant 1.024000e+03 : f32
    %17 = vector.broadcast %cst_21 : f32 to vector<1x1xf32>
    %18 = arith.divf %16, %17 : vector<1x1xf32>
    %19 = vector.broadcast %18 : vector<1x1xf32> to vector<32x32xf32>
    %20 = arith.subf %12, %19 : vector<32x32xf32>
    %21 = arith.mulf %20, %20 : vector<32x32xf32>
    %cst_22 = arith.constant dense<0.000000e+00> : vector<32xf32>
    %22 = vector.multi_reduction <add>, %21, %cst_22 [1] : vector<32x32xf32> to vector<32xf32>
    %23 = vector.shape_cast %22 : vector<32xf32> to vector<32x1xf32>
    %cst_23 = arith.constant dense<0.000000e+00> : vector<1xf32>
    %24 = vector.multi_reduction <add>, %23, %cst_23 [0] : vector<32x1xf32> to vector<1xf32>
    %25 = vector.shape_cast %24 : vector<1xf32> to vector<1x1xf32>
    %cst_24 = arith.constant 1.024000e+03 : f32
    %26 = vector.broadcast %cst_24 : f32 to vector<1x1xf32>
    %27 = arith.divf %25, %26 : vector<1x1xf32>
    %cst_25 = arith.constant 9.99999974E-6 : f32
    %28 = vector.broadcast %cst_25 : f32 to vector<1x1xf32>
    %29 = arith.addf %27, %28 : vector<1x1xf32>
    %30 = math.rsqrt %29 : vector<1x1xf32>
    %31 = vector.broadcast %30 : vector<1x1xf32> to vector<32x32xf32>
    %32 = arith.mulf %20, %31 : vector<32x32xf32>
    %33 = arith.mulf %32, %0 : vector<32x32xf32>
    %34 = arith.addf %33, %1 : vector<32x32xf32>
    %c0_26 = arith.constant 0 : index
    %c0_27 = arith.constant 0 : index
    %35 = vector.load %arg27[%c0_26, %c0_27] : memref<192x32xf32, #tpu.memory_space<vmem>>, vector<32x32xf32>
    tpu.vector_store %arg27[%c0_26, %c0_27], %34 {strides = array<i32>} : memref<192x32xf32, #tpu.memory_space<vmem>>, vector<32x32xf32>,
    %c1 = arith.constant 1 : index
    %c0_28 = arith.constant 0 : index
    %c0_29 = arith.constant 0 : index
    %36 = vector.load %arg0[%c1, %c0_28, %c0_29] : memref<3x32x8xf32, #tpu.memory_space<vmem>>, vector<1x32x8xf32>
    %37 = vector.shape_cast %36 : vector<1x32x8xf32> to vector<32x8xf32>
    %c0_30 = arith.constant 0 : index
    %c1_31 = arith.constant 1 : index
    %c0_32 = arith.constant 0 : index
    %c0_33 = arith.constant 0 : index
    %38 = vector.load %arg2[%c0_30, %c1_31, %c0_32, %c0_33] : memref<2x3x8x4xf32, #tpu.memory_space<vmem>>, vector<1x1x8x4xf32>
    %39 = vector.shape_cast %38 : vector<1x1x8x4xf32> to vector<8x4xf32>
    %cst_34 = arith.constant dense<0.000000e+00> : vector<32x4xf32>
    %40 = tpu.matmul %37, %39, %cst_34 {dimension_numbers = #tpu.dot_dimension_numbers<[1], [0], [0], [1], [0, 0, 1, 1], [], []>} : vector<32x8xf32>, vector<8x4xf32>, vector<32x4xf32> -> vector<32x4xf32>
    %c1_35 = arith.constant 1 : index
    %c0_36 = arith.constant 0 : index
    %c0_37 = arith.constant 0 : index
    %41 = vector.load %arg1[%c1_35, %c0_36, %c0_37] : memref<3x32x8xf32, #tpu.memory_space<vmem>>, vector<1x32x8xf32>
    %42 = vector.shape_cast %41 : vector<1x32x8xf32> to vector<32x8xf32>
    %c0_38 = arith.constant 0 : index
    %c1_39 = arith.constant 1 : index
    %c0_40 = arith.constant 0 : index
    %c0_41 = arith.constant 0 : index
    %43 = vector.load %arg3[%c0_38, %c1_39, %c0_40, %c0_41] : memref<2x3x8x4xf32, #tpu.memory_space<vmem>>, vector<1x1x8x4xf32>
    %44 = vector.shape_cast %43 : vector<1x1x8x4xf32> to vector<8x4xf32>
    %cst_42 = arith.constant dense<0.000000e+00> : vector<32x4xf32>
    %45 = tpu.matmul %42, %44, %cst_42 {dimension_numbers = #tpu.dot_dimension_numbers<[1], [0], [0], [1], [0, 0, 1, 1], [], []>} : vector<32x8xf32>, vector<8x4xf32>, vector<32x4xf32> -> vector<32x4xf32>
    %cst_43 = arith.constant dense<0.000000e+00> : vector<32x32xf32>
    %46 = tpu.matmul %40, %45, %cst_43 {dimension_numbers = #tpu.dot_dimension_numbers<[1], [1], [0], [0], [0, 0, 1, 0], [], []>} : vector<32x4xf32>, vector<32x4xf32>, vector<32x32xf32> -> vector<32x32xf32>
    %cst_44 = arith.constant dense<0.000000e+00> : vector<32xf32>
    %47 = vector.multi_reduction <add>, %46, %cst_44 [1] : vector<32x32xf32> to vector<32xf32>
    %48 = vector.shape_cast %47 : vector<32xf32> to vector<32x1xf32>
    %cst_45 = arith.constant dense<0.000000e+00> : vector<1xf32>
    %49 = vector.multi_reduction <add>, %48, %cst_45 [0] : vector<32x1xf32> to vector<1xf32>
    %50 = vector.shape_cast %49 : vector<1xf32> to vector<1x1xf32>
    %cst_46 = arith.constant 1.024000e+03 : f32
    %51 = vector.broadcast %cst_46 : f32 to vector<1x1xf32>
    %52 = arith.divf %50, %51 : vector<1x1xf32>
    %53 = vector.broadcast %52 : vector<1x1xf32> to vector<32x32xf32>
    %54 = arith.subf %46, %53 : vector<32x32xf32>
    %55 = arith.mulf %54, %54 : vector<32x32xf32>
    %cst_47 = arith.constant dense<0.000000e+00> : vector<32xf32>
    %56 = vector.multi_reduction <add>, %55, %cst_47 [1] : vector<32x32xf32> to vector<32xf32>
    %57 = vector.shape_cast %56 : vector<32xf32> to vector<32x1xf32>
    %cst_48 = arith.constant dense<0.000000e+00> : vector<1xf32>
    %58 = vector.multi_reduction <add>, %57, %cst_48 [0] : vector<32x1xf32> to vector<1xf32>
    %59 = vector.shape_cast %58 : vector<1xf32> to vector<1x1xf32>
    %cst_49 = arith.constant 1.024000e+03 : f32
    %60 = vector.broadcast %cst_49 : f32 to vector<1x1xf32>
    %61 = arith.divf %59, %60 : vector<1x1xf32>
    %cst_50 = arith.constant 9.99999974E-6 : f32
    %62 = vector.broadcast %cst_50 : f32 to vector<1x1xf32>
    %63 = arith.addf %61, %62 : vector<1x1xf32>
    %64 = math.rsqrt %63 : vector<1x1xf32>
    %65 = vector.broadcast %64 : vector<1x1xf32> to vector<32x32xf32>
    %66 = arith.mulf %54, %65 : vector<32x32xf32>
    %67 = arith.mulf %66, %0 : vector<32x32xf32>
    %68 = arith.addf %67, %1 : vector<32x32xf32>
    %c32 = arith.constant 32 : index
    %c0_51 = arith.constant 0 : index
    %69 = vector.load %arg27[%c32, %c0_51] : memref<192x32xf32, #tpu.memory_space<vmem>>, vector<32x32xf32>
    tpu.vector_store %arg27[%c32, %c0_51], %68 {strides = array<i32>} : memref<192x32xf32, #tpu.memory_space<vmem>>, vector<32x32xf32>,
    %c2 = arith.constant 2 : index
    %c0_52 = arith.constant 0 : index
    %c0_53 = arith.constant 0 : index
    %70 = vector.load %arg0[%c2, %c0_52, %c0_53] : memref<3x32x8xf32, #tpu.memory_space<vmem>>, vector<1x32x8xf32>
    %71 = vector.shape_cast %70 : vector<1x32x8xf32> to vector<32x8xf32>
    %c0_54 = arith.constant 0 : index
    %c2_55 = arith.constant 2 : index
    %c0_56 = arith.constant 0 : index
    %c0_57 = arith.constant 0 : index
    %72 = vector.load %arg2[%c0_54, %c2_55, %c0_56, %c0_57] : memref<2x3x8x4xf32, #tpu.memory_space<vmem>>, vector<1x1x8x4xf32>
    %73 = vector.shape_cast %72 : vector<1x1x8x4xf32> to vector<8x4xf32>
    %cst_58 = arith.constant dense<0.000000e+00> : vector<32x4xf32>
    %74 = tpu.matmul %71, %73, %cst_58 {dimension_numbers = #tpu.dot_dimension_numbers<[1], [0], [0], [1], [0, 0, 1, 1], [], []>} : vector<32x8xf32>, vector<8x4xf32>, vector<32x4xf32> -> vector<32x4xf32>
    %c2_59 = arith.constant 2 : index
    %c0_60 = arith.constant 0 : index
    %c0_61 = arith.constant 0 : index
    %75 = vector.load %arg1[%c2_59, %c0_60, %c0_61] : memref<3x32x8xf32, #tpu.memory_space<vmem>>, vector<1x32x8xf32>
    %76 = vector.shape_cast %75 : vector<1x32x8xf32> to vector<32x8xf32>
    %c0_62 = arith.constant 0 : index
    %c2_63 = arith.constant 2 : index
    %c0_64 = arith.constant 0 : index
    %c0_65 = arith.constant 0 : index
    %77 = vector.load %arg3[%c0_62, %c2_63, %c0_64, %c0_65] : memref<2x3x8x4xf32, #tpu.memory_space<vmem>>, vector<1x1x8x4xf32>
    %78 = vector.shape_cast %77 : vector<1x1x8x4xf32> to vector<8x4xf32>
    %cst_66 = arith.constant dense<0.000000e+00> : vector<32x4xf32>
    %79 = tpu.matmul %76, %78, %cst_66 {dimension_numbers = #tpu.dot_dimension_numbers<[1], [0], [0], [1], [0, 0, 1, 1], [], []>} : vector<32x8xf32>, vector<8x4xf32>, vector<32x4xf32> -> vector<32x4xf32>
    %cst_67 = arith.constant dense<0.000000e+00> : vector<32x32xf32>
    %80 = tpu.matmul %74, %79, %cst_67 {dimension_numbers = #tpu.dot_dimension_numbers<[1], [1], [0], [0], [0, 0, 1, 0], [], []>} : vector<32x4xf32>, vector<32x4xf32>, vector<32x32xf32> -> vector<32x32xf32>
    %cst_68 = arith.constant dense<0.000000e+00> : vector<32xf32>
    %81 = vector.multi_reduction <add>, %80, %cst_68 [1] : vector<32x32xf32> to vector<32xf32>
    %82 = vector.shape_cast %81 : vector<32xf32> to vector<32x1xf32>
    %cst_69 = arith.constant dense<0.000000e+00> : vector<1xf32>
    %83 = vector.multi_reduction <add>, %82, %cst_69 [0] : vector<32x1xf32> to vector<1xf32>
    %84 = vector.shape_cast %83 : vector<1xf32> to vector<1x1xf32>
    %cst_70 = arith.constant 1.024000e+03 : f32
    %85 = vector.broadcast %cst_70 : f32 to vector<1x1xf32>
    %86 = arith.divf %84, %85 : vector<1x1xf32>
    %87 = vector.broadcast %86 : vector<1x1xf32> to vector<32x32xf32>
    %88 = arith.subf %80, %87 : vector<32x32xf32>
    %89 = arith.mulf %88, %88 : vector<32x32xf32>
    %cst_71 = arith.constant dense<0.000000e+00> : vector<32xf32>
    %90 = vector.multi_reduction <add>, %89, %cst_71 [1] : vector<32x32xf32> to vector<32xf32>
    %91 = vector.shape_cast %90 : vector<32xf32> to vector<32x1xf32>
    %cst_72 = arith.constant dense<0.000000e+00> : vector<1xf32>
    %92 = vector.multi_reduction <add>, %91, %cst_72 [0] : vector<32x1xf32> to vector<1xf32>
    %93 = vector.shape_cast %92 : vector<1xf32> to vector<1x1xf32>
    %cst_73 = arith.constant 1.024000e+03 : f32
    %94 = vector.broadcast %cst_73 : f32 to vector<1x1xf32>
    %95 = arith.divf %93, %94 : vector<1x1xf32>
    %cst_74 = arith.constant 9.99999974E-6 : f32
    %96 = vector.broadcast %cst_74 : f32 to vector<1x1xf32>
    %97 = arith.addf %95, %96 : vector<1x1xf32>
    %98 = math.rsqrt %97 : vector<1x1xf32>
    %99 = vector.broadcast %98 : vector<1x1xf32> to vector<32x32xf32>
    %100 = arith.mulf %88, %99 : vector<32x32xf32>
    %101 = arith.mulf %100, %0 : vector<32x32xf32>
    %102 = arith.addf %101, %1 : vector<32x32xf32>
    %c64 = arith.constant 64 : index
    %c0_75 = arith.constant 0 : index
    %103 = vector.load %arg27[%c64, %c0_75] : memref<192x32xf32, #tpu.memory_space<vmem>>, vector<32x32xf32>
    tpu.vector_store %arg27[%c64, %c0_75], %102 {strides = array<i32>} : memref<192x32xf32, #tpu.memory_space<vmem>>, vector<32x32xf32>,
    %c0_76 = arith.constant 0 : index
    %c0_77 = arith.constant 0 : index
    %c0_78 = arith.constant 0 : index
    %104 = vector.load %arg0[%c0_76, %c0_77, %c0_78] : memref<3x32x8xf32, #tpu.memory_space<vmem>>, vector<1x32x8xf32>
    %105 = vector.shape_cast %104 : vector<1x32x8xf32> to vector<32x8xf32>
    %c1_79 = arith.constant 1 : index
    %c0_80 = arith.constant 0 : index
    %c0_81 = arith.constant 0 : index
    %c0_82 = arith.constant 0 : index
    %106 = vector.load %arg2[%c1_79, %c0_80, %c0_81, %c0_82] : memref<2x3x8x4xf32, #tpu.memory_space<vmem>>, vector<1x1x8x4xf32>
    %107 = vector.shape_cast %106 : vector<1x1x8x4xf32> to vector<8x4xf32>
    %cst_83 = arith.constant dense<0.000000e+00> : vector<32x4xf32>
    %108 = tpu.matmul %105, %107, %cst_83 {dimension_numbers = #tpu.dot_dimension_numbers<[1], [0], [0], [1], [0, 0, 1, 1], [], []>} : vector<32x8xf32>, vector<8x4xf32>, vector<32x4xf32> -> vector<32x4xf32>
    %c0_84 = arith.constant 0 : index
    %c0_85 = arith.constant 0 : index
    %c0_86 = arith.constant 0 : index
    %109 = vector.load %arg1[%c0_84, %c0_85, %c0_86] : memref<3x32x8xf32, #tpu.memory_space<vmem>>, vector<1x32x8xf32>
    %110 = vector.shape_cast %109 : vector<1x32x8xf32> to vector<32x8xf32>
    %c1_87 = arith.constant 1 : index
    %c0_88 = arith.constant 0 : index
    %c0_89 = arith.constant 0 : index
    %c0_90 = arith.constant 0 : index
    %111 = vector.load %arg3[%c1_87, %c0_88, %c0_89, %c0_90] : memref<2x3x8x4xf32, #tpu.memory_space<vmem>>, vector<1x1x8x4xf32>
    %112 = vector.shape_cast %111 : vector<1x1x8x4xf32> to vector<8x4xf32>
    %cst_91 = arith.constant dense<0.000000e+00> : vector<32x4xf32>
    %113 = tpu.matmul %110, %112, %cst_91 {dimension_numbers = #tpu.dot_dimension_numbers<[1], [0], [0], [1], [0, 0, 1, 1], [], []>} : vector<32x8xf32>, vector<8x4xf32>, vector<32x4xf32> -> vector<32x4xf32>
    %cst_92 = arith.constant dense<0.000000e+00> : vector<32x32xf32>
    %114 = tpu.matmul %108, %113, %cst_92 {dimension_numbers = #tpu.dot_dimension_numbers<[1], [1], [0], [0], [0, 0, 1, 0], [], []>} : vector<32x4xf32>, vector<32x4xf32>, vector<32x32xf32> -> vector<32x32xf32>
    %cst_93 = arith.constant dense<0.000000e+00> : vector<32xf32>
    %115 = vector.multi_reduction <add>, %114, %cst_93 [1] : vector<32x32xf32> to vector<32xf32>
    %116 = vector.shape_cast %115 : vector<32xf32> to vector<32x1xf32>
    %cst_94 = arith.constant dense<0.000000e+00> : vector<1xf32>
    %117 = vector.multi_reduction <add>, %116, %cst_94 [0] : vector<32x1xf32> to vector<1xf32>
    %118 = vector.shape_cast %117 : vector<1xf32> to vector<1x1xf32>
    %cst_95 = arith.constant 1.024000e+03 : f32
    %119 = vector.broadcast %cst_95 : f32 to vector<1x1xf32>
    %120 = arith.divf %118, %119 : vector<1x1xf32>
    %121 = vector.broadcast %120 : vector<1x1xf32> to vector<32x32xf32>
    %122 = arith.subf %114, %121 : vector<32x32xf32>
    %123 = arith.mulf %122, %122 : vector<32x32xf32>
    %cst_96 = arith.constant dense<0.000000e+00> : vector<32xf32>
    %124 = vector.multi_reduction <add>, %123, %cst_96 [1] : vector<32x32xf32> to vector<32xf32>
    %125 = vector.shape_cast %124 : vector<32xf32> to vector<32x1xf32>
    %cst_97 = arith.constant dense<0.000000e+00> : vector<1xf32>
    %126 = vector.multi_reduction <add>, %125, %cst_97 [0] : vector<32x1xf32> to vector<1xf32>
    %127 = vector.shape_cast %126 : vector<1xf32> to vector<1x1xf32>
    %cst_98 = arith.constant 1.024000e+03 : f32
    %128 = vector.broadcast %cst_98 : f32 to vector<1x1xf32>
    %129 = arith.divf %127, %128 : vector<1x1xf32>
    %cst_99 = arith.constant 9.99999974E-6 : f32
    %130 = vector.broadcast %cst_99 : f32 to vector<1x1xf32>
    %131 = arith.addf %129, %130 : vector<1x1xf32>
    %132 = math.rsqrt %131 : vector<1x1xf32>
    %133 = vector.broadcast %132 : vector<1x1xf32> to vector<32x32xf32>
    %134 = arith.mulf %122, %133 : vector<32x32xf32>
    %135 = arith.mulf %134, %0 : vector<32x32xf32>
    %136 = arith.addf %135, %1 : vector<32x32xf32>
    %c96 = arith.constant 96 : index
    %c0_100 = arith.constant 0 : index
    %137 = vector.load %arg27[%c96, %c0_100] : memref<192x32xf32, #tpu.memory_space<vmem>>, vector<32x32xf32>
    tpu.vector_store %arg27[%c96, %c0_100], %136 {strides = array<i32>} : memref<192x32xf32, #tpu.memory_space<vmem>>, vector<32x32xf32>,
    %c1_101 = arith.constant 1 : index
    %c0_102 = arith.constant 0 : index
    %c0_103 = arith.constant 0 : index
    %138 = vector.load %arg0[%c1_101, %c0_102, %c0_103] : memref<3x32x8xf32, #tpu.memory_space<vmem>>, vector<1x32x8xf32>
    %139 = vector.shape_cast %138 : vector<1x32x8xf32> to vector<32x8xf32>
    %c1_104 = arith.constant 1 : index
    %c1_105 = arith.constant 1 : index
    %c0_106 = arith.constant 0 : index
    %c0_107 = arith.constant 0 : index
    %140 = vector.load %arg2[%c1_104, %c1_105, %c0_106, %c0_107] : memref<2x3x8x4xf32, #tpu.memory_space<vmem>>, vector<1x1x8x4xf32>
    %141 = vector.shape_cast %140 : vector<1x1x8x4xf32> to vector<8x4xf32>
    %cst_108 = arith.constant dense<0.000000e+00> : vector<32x4xf32>
    %142 = tpu.matmul %139, %141, %cst_108 {dimension_numbers = #tpu.dot_dimension_numbers<[1], [0], [0], [1], [0, 0, 1, 1], [], []>} : vector<32x8xf32>, vector<8x4xf32>, vector<32x4xf32> -> vector<32x4xf32>
    %c1_109 = arith.constant 1 : index
    %c0_110 = arith.constant 0 : index
    %c0_111 = arith.constant 0 : index
    %143 = vector.load %arg1[%c1_109, %c0_110, %c0_111] : memref<3x32x8xf32, #tpu.memory_space<vmem>>, vector<1x32x8xf32>
    %144 = vector.shape_cast %143 : vector<1x32x8xf32> to vector<32x8xf32>
    %c1_112 = arith.constant 1 : index
    %c1_113 = arith.constant 1 : index
    %c0_114 = arith.constant 0 : index
    %c0_115 = arith.constant 0 : index
    %145 = vector.load %arg3[%c1_112, %c1_113, %c0_114, %c0_115] : memref<2x3x8x4xf32, #tpu.memory_space<vmem>>, vector<1x1x8x4xf32>
    %146 = vector.shape_cast %145 : vector<1x1x8x4xf32> to vector<8x4xf32>
    %cst_116 = arith.constant dense<0.000000e+00> : vector<32x4xf32>
    %147 = tpu.matmul %144, %146, %cst_116 {dimension_numbers = #tpu.dot_dimension_numbers<[1], [0], [0], [1], [0, 0, 1, 1], [], []>} : vector<32x8xf32>, vector<8x4xf32>, vector<32x4xf32> -> vector<32x4xf32>
    %cst_117 = arith.constant dense<0.000000e+00> : vector<32x32xf32>
    %148 = tpu.matmul %142, %147, %cst_117 {dimension_numbers = #tpu.dot_dimension_numbers<[1], [1], [0], [0], [0, 0, 1, 0], [], []>} : vector<32x4xf32>, vector<32x4xf32>, vector<32x32xf32> -> vector<32x32xf32>
    %cst_118 = arith.constant dense<0.000000e+00> : vector<32xf32>
    %149 = vector.multi_reduction <add>, %148, %cst_118 [1] : vector<32x32xf32> to vector<32xf32>
    %150 = vector.shape_cast %149 : vector<32xf32> to vector<32x1xf32>
    %cst_119 = arith.constant dense<0.000000e+00> : vector<1xf32>
    %151 = vector.multi_reduction <add>, %150, %cst_119 [0] : vector<32x1xf32> to vector<1xf32>
    %152 = vector.shape_cast %151 : vector<1xf32> to vector<1x1xf32>
    %cst_120 = arith.constant 1.024000e+03 : f32
    %153 = vector.broadcast %cst_120 : f32 to vector<1x1xf32>
    %154 = arith.divf %152, %153 : vector<1x1xf32>
    %155 = vector.broadcast %154 : vector<1x1xf32> to vector<32x32xf32>
    %156 = arith.subf %148, %155 : vector<32x32xf32>
    %157 = arith.mulf %156, %156 : vector<32x32xf32>
    %cst_121 = arith.constant dense<0.000000e+00> : vector<32xf32>
    %158 = vector.multi_reduction <add>, %157, %cst_121 [1] : vector<32x32xf32> to vector<32xf32>
    %159 = vector.shape_cast %158 : vector<32xf32> to vector<32x1xf32>
    %cst_122 = arith.constant dense<0.000000e+00> : vector<1xf32>
    %160 = vector.multi_reduction <add>, %159, %cst_122 [0] : vector<32x1xf32> to vector<1xf32>
    %161 = vector.shape_cast %160 : vector<1xf32> to vector<1x1xf32>
    %cst_123 = arith.constant 1.024000e+03 : f32
    %162 = vector.broadcast %cst_123 : f32 to vector<1x1xf32>
    %163 = arith.divf %161, %162 : vector<1x1xf32>
    %cst_124 = arith.constant 9.99999974E-6 : f32
    %164 = vector.broadcast %cst_124 : f32 to vector<1x1xf32>
    %165 = arith.addf %163, %164 : vector<1x1xf32>
    %166 = math.rsqrt %165 : vector<1x1xf32>
    %167 = vector.broadcast %166 : vector<1x1xf32> to vector<32x32xf32>
    %168 = arith.mulf %156, %167 : vector<32x32xf32>
    %169 = arith.mulf %168, %0 : vector<32x32xf32>
    %170 = arith.addf %169, %1 : vector<32x32xf32>
    %c128 = arith.constant 128 : index
    %c0_125 = arith.constant 0 : index
    %171 = vector.load %arg27[%c128, %c0_125] : memref<192x32xf32, #tpu.memory_space<vmem>>, vector<32x32xf32>
    tpu.vector_store %arg27[%c128, %c0_125], %170 {strides = array<i32>} : memref<192x32xf32, #tpu.memory_space<vmem>>, vector<32x32xf32>,
    %c2_126 = arith.constant 2 : index
    %c0_127 = arith.constant 0 : index
    %c0_128 = arith.constant 0 : index
    %172 = vector.load %arg0[%c2_126, %c0_127, %c0_128] : memref<3x32x8xf32, #tpu.memory_space<vmem>>, vector<1x32x8xf32>
    %173 = vector.shape_cast %172 : vector<1x32x8xf32> to vector<32x8xf32>
    %c1_129 = arith.constant 1 : index
    %c2_130 = arith.constant 2 : index
    %c0_131 = arith.constant 0 : index
    %c0_132 = arith.constant 0 : index
    %174 = vector.load %arg2[%c1_129, %c2_130, %c0_131, %c0_132] : memref<2x3x8x4xf32, #tpu.memory_space<vmem>>, vector<1x1x8x4xf32>
    %175 = vector.shape_cast %174 : vector<1x1x8x4xf32> to vector<8x4xf32>
    %cst_133 = arith.constant dense<0.000000e+00> : vector<32x4xf32>
    %176 = tpu.matmul %173, %175, %cst_133 {dimension_numbers = #tpu.dot_dimension_numbers<[1], [0], [0], [1], [0, 0, 1, 1], [], []>} : vector<32x8xf32>, vector<8x4xf32>, vector<32x4xf32> -> vector<32x4xf32>
    %c2_134 = arith.constant 2 : index
    %c0_135 = arith.constant 0 : index
    %c0_136 = arith.constant 0 : index
    %177 = vector.load %arg1[%c2_134, %c0_135, %c0_136] : memref<3x32x8xf32, #tpu.memory_space<vmem>>, vector<1x32x8xf32>
    %178 = vector.shape_cast %177 : vector<1x32x8xf32> to vector<32x8xf32>
    %c1_137 = arith.constant 1 : index
    %c2_138 = arith.constant 2 : index
    %c0_139 = arith.constant 0 : index
    %c0_140 = arith.constant 0 : index
    %179 = vector.load %arg3[%c1_137, %c2_138, %c0_139, %c0_140] : memref<2x3x8x4xf32, #tpu.memory_space<vmem>>, vector<1x1x8x4xf32>
    %180 = vector.shape_cast %179 : vector<1x1x8x4xf32> to vector<8x4xf32>
    %cst_141 = arith.constant dense<0.000000e+00> : vector<32x4xf32>
    %181 = tpu.matmul %178, %180, %cst_141 {dimension_numbers = #tpu.dot_dimension_numbers<[1], [0], [0], [1], [0, 0, 1, 1], [], []>} : vector<32x8xf32>, vector<8x4xf32>, vector<32x4xf32> -> vector<32x4xf32>
    %cst_142 = arith.constant dense<0.000000e+00> : vector<32x32xf32>
    %182 = tpu.matmul %176, %181, %cst_142 {dimension_numbers = #tpu.dot_dimension_numbers<[1], [1], [0], [0], [0, 0, 1, 0], [], []>} : vector<32x4xf32>, vector<32x4xf32>, vector<32x32xf32> -> vector<32x32xf32>
    %cst_143 = arith.constant dense<0.000000e+00> : vector<32xf32>
    %183 = vector.multi_reduction <add>, %182, %cst_143 [1] : vector<32x32xf32> to vector<32xf32>
    %184 = vector.shape_cast %183 : vector<32xf32> to vector<32x1xf32>
    %cst_144 = arith.constant dense<0.000000e+00> : vector<1xf32>
    %185 = vector.multi_reduction <add>, %184, %cst_144 [0] : vector<32x1xf32> to vector<1xf32>
    %186 = vector.shape_cast %185 : vector<1xf32> to vector<1x1xf32>
    %cst_145 = arith.constant 1.024000e+03 : f32
    %187 = vector.broadcast %cst_145 : f32 to vector<1x1xf32>
    %188 = arith.divf %186, %187 : vector<1x1xf32>
    %189 = vector.broadcast %188 : vector<1x1xf32> to vector<32x32xf32>
    %190 = arith.subf %182, %189 : vector<32x32xf32>
    %191 = arith.mulf %190, %190 : vector<32x32xf32>
    %cst_146 = arith.constant dense<0.000000e+00> : vector<32xf32>
    %192 = vector.multi_reduction <add>, %191, %cst_146 [1] : vector<32x32xf32> to vector<32xf32>
    %193 = vector.shape_cast %192 : vector<32xf32> to vector<32x1xf32>
    %cst_147 = arith.constant dense<0.000000e+00> : vector<1xf32>
    %194 = vector.multi_reduction <add>, %193, %cst_147 [0] : vector<32x1xf32> to vector<1xf32>
    %195 = vector.shape_cast %194 : vector<1xf32> to vector<1x1xf32>
    %cst_148 = arith.constant 1.024000e+03 : f32
    %196 = vector.broadcast %cst_148 : f32 to vector<1x1xf32>
    %197 = arith.divf %195, %196 : vector<1x1xf32>
    %cst_149 = arith.constant 9.99999974E-6 : f32
    %198 = vector.broadcast %cst_149 : f32 to vector<1x1xf32>
    %199 = arith.addf %197, %198 : vector<1x1xf32>
    %200 = math.rsqrt %199 : vector<1x1xf32>
    %201 = vector.broadcast %200 : vector<1x1xf32> to vector<32x32xf32>
    %202 = arith.mulf %190, %201 : vector<32x32xf32>
    %203 = arith.mulf %202, %0 : vector<32x32xf32>
    %204 = arith.addf %203, %1 : vector<32x32xf32>
    %c160 = arith.constant 160 : index
    %c0_150 = arith.constant 0 : index
    %205 = vector.load %arg27[%c160, %c0_150] : memref<192x32xf32, #tpu.memory_space<vmem>>, vector<32x32xf32>
    tpu.vector_store %arg27[%c160, %c0_150], %204 {strides = array<i32>} : memref<192x32xf32, #tpu.memory_space<vmem>>, vector<32x32xf32>,
    %cst_151 = arith.constant 0.000000e+00 : f32
    %206 = vector.broadcast %cst_151 : f32 to vector<6x32xf32>
    %c0_152 = arith.constant 0 : index
    %c0_153 = arith.constant 0 : index
    %207 = vector.load %arg7[%c0_152, %c0_153] : memref<1x32xf32, #tpu.memory_space<vmem>>, vector<1x32xf32>
    %208 = vector.broadcast %207 : vector<1x32xf32> to vector<6x32xf32>
    %209 = arith.addf %206, %208 : vector<6x32xf32>
    %c0_154 = arith.constant 0 : index
    %c0_155 = arith.constant 0 : index
    %210 = tpu.strided_load %arg27[%c0_154, %c0_155] {strides = array<i32: 32, 1>} : memref<192x32xf32, #tpu.memory_space<vmem>>, vector<6x32xf32>
    %c0_156 = arith.constant 0 : index
    %c0_157 = arith.constant 0 : index
    %c0_158 = arith.constant 0 : index
    %211 = vector.load %arg6[%c0_156, %c0_157, %c0_158] : memref<32x32x32xf32, #tpu.memory_space<vmem>>, vector<1x32x32xf32>
    %212 = vector.shape_cast %211 : vector<1x32x32xf32> to vector<32x32xf32>
    %cst_159 = arith.constant dense<0.000000e+00> : vector<6x32xf32>
    %213 = tpu.matmul %210, %212, %cst_159 {dimension_numbers = #tpu.dot_dimension_numbers<[1], [0], [0], [1], [0, 0, 1, 1], [], []>} : vector<6x32xf32>, vector<32x32xf32>, vector<6x32xf32> -> vector<6x32xf32>
    %214 = arith.addf %209, %213 : vector<6x32xf32>
    %c1_160 = arith.constant 1 : index
    %c0_161 = arith.constant 0 : index
    %215 = tpu.strided_load %arg27[%c1_160, %c0_161] {strides = array<i32: 32, 1>} : memref<192x32xf32, #tpu.memory_space<vmem>>, vector<6x32xf32>
    %c1_162 = arith.constant 1 : index
    %c0_163 = arith.constant 0 : index
    %c0_164 = arith.constant 0 : index
    %216 = vector.load %arg6[%c1_162, %c0_163, %c0_164] : memref<32x32x32xf32, #tpu.memory_space<vmem>>, vector<1x32x32xf32>
    %217 = vector.shape_cast %216 : vector<1x32x32xf32> to vector<32x32xf32>
    %cst_165 = arith.constant dense<0.000000e+00> : vector<6x32xf32>
    %218 = tpu.matmul %215, %217, %cst_165 {dimension_numbers = #tpu.dot_dimension_numbers<[1], [0], [0], [1], [0, 0, 1, 1], [], []>} : vector<6x32xf32>, vector<32x32xf32>, vector<6x32xf32> -> vector<6x32xf32>
    %219 = arith.addf %214, %218 : vector<6x32xf32>
    %c2_166 = arith.constant 2 : index
    %c0_167 = arith.constant 0 : index
    %220 = tpu.strided_load %arg27[%c2_166, %c0_167] {strides = array<i32: 32, 1>} : memref<192x32xf32, #tpu.memory_space<vmem>>, vector<6x32xf32>
    %c2_168 = arith.constant 2 : index
    %c0_169 = arith.constant 0 : index
    %c0_170 = arith.constant 0 : index
    %221 = vector.load %arg6[%c2_168, %c0_169, %c0_170] : memref<32x32x32xf32, #tpu.memory_space<vmem>>, vector<1x32x32xf32>
    %222 = vector.shape_cast %221 : vector<1x32x32xf32> to vector<32x32xf32>
    %cst_171 = arith.constant dense<0.000000e+00> : vector<6x32xf32>
    %223 = tpu.matmul %220, %222, %cst_171 {dimension_numbers = #tpu.dot_dimension_numbers<[1], [0], [0], [1], [0, 0, 1, 1], [], []>} : vector<6x32xf32>, vector<32x32xf32>, vector<6x32xf32> -> vector<6x32xf32>
    %224 = arith.addf %219, %223 : vector<6x32xf32>
    %c3 = arith.constant 3 : index
    %c0_172 = arith.constant 0 : index
    %225 = tpu.strided_load %arg27[%c3, %c0_172] {strides = array<i32: 32, 1>} : memref<192x32xf32, #tpu.memory_space<vmem>>, vector<6x32xf32>
    %c3_173 = arith.constant 3 : index
    %c0_174 = arith.constant 0 : index
    %c0_175 = arith.constant 0 : index
    %226 = vector.load %arg6[%c3_173, %c0_174, %c0_175] : memref<32x32x32xf32, #tpu.memory_space<vmem>>, vector<1x32x32xf32>
    %227 = vector.shape_cast %226 : vector<1x32x32xf32> to vector<32x32xf32>
    %cst_176 = arith.constant dense<0.000000e+00> : vector<6x32xf32>
    %228 = tpu.matmul %225, %227, %cst_176 {dimension_numbers = #tpu.dot_dimension_numbers<[1], [0], [0], [1], [0, 0, 1, 1], [], []>} : vector<6x32xf32>, vector<32x32xf32>, vector<6x32xf32> -> vector<6x32xf32>
    %229 = arith.addf %224, %228 : vector<6x32xf32>
    %c4 = arith.constant 4 : index
    %c0_177 = arith.constant 0 : index
    %230 = tpu.strided_load %arg27[%c4, %c0_177] {strides = array<i32: 32, 1>} : memref<192x32xf32, #tpu.memory_space<vmem>>, vector<6x32xf32>
    %c4_178 = arith.constant 4 : index
    %c0_179 = arith.constant 0 : index
    %c0_180 = arith.constant 0 : index
    %231 = vector.load %arg6[%c4_178, %c0_179, %c0_180] : memref<32x32x32xf32, #tpu.memory_space<vmem>>, vector<1x32x32xf32>
    %232 = vector.shape_cast %231 : vector<1x32x32xf32> to vector<32x32xf32>
    %cst_181 = arith.constant dense<0.000000e+00> : vector<6x32xf32>
    %233 = tpu.matmul %230, %232, %cst_181 {dimension_numbers = #tpu.dot_dimension_numbers<[1], [0], [0], [1], [0, 0, 1, 1], [], []>} : vector<6x32xf32>, vector<32x32xf32>, vector<6x32xf32> -> vector<6x32xf32>
    %234 = arith.addf %229, %233 : vector<6x32xf32>
    %c5 = arith.constant 5 : index
    %c0_182 = arith.constant 0 : index
    %235 = tpu.strided_load %arg27[%c5, %c0_182] {strides = array<i32: 32, 1>} : memref<192x32xf32, #tpu.memory_space<vmem>>, vector<6x32xf32>
    %c5_183 = arith.constant 5 : index
    %c0_184 = arith.constant 0 : index
    %c0_185 = arith.constant 0 : index
    %236 = vector.load %arg6[%c5_183, %c0_184, %c0_185] : memref<32x32x32xf32, #tpu.memory_space<vmem>>, vector<1x32x32xf32>
    %237 = vector.shape_cast %236 : vector<1x32x32xf32> to vector<32x32xf32>
    %cst_186 = arith.constant dense<0.000000e+00> : vector<6x32xf32>
    %238 = tpu.matmul %235, %237, %cst_186 {dimension_numbers = #tpu.dot_dimension_numbers<[1], [0], [0], [1], [0, 0, 1, 1], [], []>} : vector<6x32xf32>, vector<32x32xf32>, vector<6x32xf32> -> vector<6x32xf32>
    %239 = arith.addf %234, %238 : vector<6x32xf32>
    %c6 = arith.constant 6 : index
    %c0_187 = arith.constant 0 : index
    %240 = tpu.strided_load %arg27[%c6, %c0_187] {strides = array<i32: 32, 1>} : memref<192x32xf32, #tpu.memory_space<vmem>>, vector<6x32xf32>
    %c6_188 = arith.constant 6 : index
    %c0_189 = arith.constant 0 : index
    %c0_190 = arith.constant 0 : index
    %241 = vector.load %arg6[%c6_188, %c0_189, %c0_190] : memref<32x32x32xf32, #tpu.memory_space<vmem>>, vector<1x32x32xf32>
    %242 = vector.shape_cast %241 : vector<1x32x32xf32> to vector<32x32xf32>
    %cst_191 = arith.constant dense<0.000000e+00> : vector<6x32xf32>
    %243 = tpu.matmul %240, %242, %cst_191 {dimension_numbers = #tpu.dot_dimension_numbers<[1], [0], [0], [1], [0, 0, 1, 1], [], []>} : vector<6x32xf32>, vector<32x32xf32>, vector<6x32xf32> -> vector<6x32xf32>
    %244 = arith.addf %239, %243 : vector<6x32xf32>
    %c7 = arith.constant 7 : index
    %c0_192 = arith.constant 0 : index
    %245 = tpu.strided_load %arg27[%c7, %c0_192] {strides = array<i32: 32, 1>} : memref<192x32xf32, #tpu.memory_space<vmem>>, vector<6x32xf32>
    %c7_193 = arith.constant 7 : index
    %c0_194 = arith.constant 0 : index
    %c0_195 = arith.constant 0 : index
    %246 = vector.load %arg6[%c7_193, %c0_194, %c0_195] : memref<32x32x32xf32, #tpu.memory_space<vmem>>, vector<1x32x32xf32>
    %247 = vector.shape_cast %246 : vector<1x32x32xf32> to vector<32x32xf32>
    %cst_196 = arith.constant dense<0.000000e+00> : vector<6x32xf32>
    %248 = tpu.matmul %245, %247, %cst_196 {dimension_numbers = #tpu.dot_dimension_numbers<[1], [0], [0], [1], [0, 0, 1, 1], [], []>} : vector<6x32xf32>, vector<32x32xf32>, vector<6x32xf32> -> vector<6x32xf32>
    %249 = arith.addf %244, %248 : vector<6x32xf32>
    %c8 = arith.constant 8 : index
    %c0_197 = arith.constant 0 : index
    %250 = tpu.strided_load %arg27[%c8, %c0_197] {strides = array<i32: 32, 1>} : memref<192x32xf32, #tpu.memory_space<vmem>>, vector<6x32xf32>
    %c8_198 = arith.constant 8 : index
    %c0_199 = arith.constant 0 : index
    %c0_200 = arith.constant 0 : index
    %251 = vector.load %arg6[%c8_198, %c0_199, %c0_200] : memref<32x32x32xf32, #tpu.memory_space<vmem>>, vector<1x32x32xf32>
    %252 = vector.shape_cast %251 : vector<1x32x32xf32> to vector<32x32xf32>
    %cst_201 = arith.constant dense<0.000000e+00> : vector<6x32xf32>
    %253 = tpu.matmul %250, %252, %cst_201 {dimension_numbers = #tpu.dot_dimension_numbers<[1], [0], [0], [1], [0, 0, 1, 1], [], []>} : vector<6x32xf32>, vector<32x32xf32>, vector<6x32xf32> -> vector<6x32xf32>
    %254 = arith.addf %249, %253 : vector<6x32xf32>
    %c9 = arith.constant 9 : index
    %c0_202 = arith.constant 0 : index
    %255 = tpu.strided_load %arg27[%c9, %c0_202] {strides = array<i32: 32, 1>} : memref<192x32xf32, #tpu.memory_space<vmem>>, vector<6x32xf32>
    %c9_203 = arith.constant 9 : index
    %c0_204 = arith.constant 0 : index
    %c0_205 = arith.constant 0 : index
    %256 = vector.load %arg6[%c9_203, %c0_204, %c0_205] : memref<32x32x32xf32, #tpu.memory_space<vmem>>, vector<1x32x32xf32>
    %257 = vector.shape_cast %256 : vector<1x32x32xf32> to vector<32x32xf32>
    %cst_206 = arith.constant dense<0.000000e+00> : vector<6x32xf32>
    %258 = tpu.matmul %255, %257, %cst_206 {dimension_numbers = #tpu.dot_dimension_numbers<[1], [0], [0], [1], [0, 0, 1, 1], [], []>} : vector<6x32xf32>, vector<32x32xf32>, vector<6x32xf32> -> vector<6x32xf32>
    %259 = arith.addf %254, %258 : vector<6x32xf32>
    %c10 = arith.constant 10 : index
    %c0_207 = arith.constant 0 : index
    %260 = tpu.strided_load %arg27[%c10, %c0_207] {strides = array<i32: 32, 1>} : memref<192x32xf32, #tpu.memory_space<vmem>>, vector<6x32xf32>
    %c10_208 = arith.constant 10 : index
    %c0_209 = arith.constant 0 : index
    %c0_210 = arith.constant 0 : index
    %261 = vector.load %arg6[%c10_208, %c0_209, %c0_210] : memref<32x32x32xf32, #tpu.memory_space<vmem>>, vector<1x32x32xf32>
    %262 = vector.shape_cast %261 : vector<1x32x32xf32> to vector<32x32xf32>
    %cst_211 = arith.constant dense<0.000000e+00> : vector<6x32xf32>
    %263 = tpu.matmul %260, %262, %cst_211 {dimension_numbers = #tpu.dot_dimension_numbers<[1], [0], [0], [1], [0, 0, 1, 1], [], []>} : vector<6x32xf32>, vector<32x32xf32>, vector<6x32xf32> -> vector<6x32xf32>
    %264 = arith.addf %259, %263 : vector<6x32xf32>
    %c11 = arith.constant 11 : index
    %c0_212 = arith.constant 0 : index
    %265 = tpu.strided_load %arg27[%c11, %c0_212] {strides = array<i32: 32, 1>} : memref<192x32xf32, #tpu.memory_space<vmem>>, vector<6x32xf32>
    %c11_213 = arith.constant 11 : index
    %c0_214 = arith.constant 0 : index
    %c0_215 = arith.constant 0 : index
    %266 = vector.load %arg6[%c11_213, %c0_214, %c0_215] : memref<32x32x32xf32, #tpu.memory_space<vmem>>, vector<1x32x32xf32>
    %267 = vector.shape_cast %266 : vector<1x32x32xf32> to vector<32x32xf32>
    %cst_216 = arith.constant dense<0.000000e+00> : vector<6x32xf32>
    %268 = tpu.matmul %265, %267, %cst_216 {dimension_numbers = #tpu.dot_dimension_numbers<[1], [0], [0], [1], [0, 0, 1, 1], [], []>} : vector<6x32xf32>, vector<32x32xf32>, vector<6x32xf32> -> vector<6x32xf32>
    %269 = arith.addf %264, %268 : vector<6x32xf32>
    %c12 = arith.constant 12 : index
    %c0_217 = arith.constant 0 : index
    %270 = tpu.strided_load %arg27[%c12, %c0_217] {strides = array<i32: 32, 1>} : memref<192x32xf32, #tpu.memory_space<vmem>>, vector<6x32xf32>
    %c12_218 = arith.constant 12 : index
    %c0_219 = arith.constant 0 : index
    %c0_220 = arith.constant 0 : index
    %271 = vector.load %arg6[%c12_218, %c0_219, %c0_220] : memref<32x32x32xf32, #tpu.memory_space<vmem>>, vector<1x32x32xf32>
    %272 = vector.shape_cast %271 : vector<1x32x32xf32> to vector<32x32xf32>
    %cst_221 = arith.constant dense<0.000000e+00> : vector<6x32xf32>
    %273 = tpu.matmul %270, %272, %cst_221 {dimension_numbers = #tpu.dot_dimension_numbers<[1], [0], [0], [1], [0, 0, 1, 1], [], []>} : vector<6x32xf32>, vector<32x32xf32>, vector<6x32xf32> -> vector<6x32xf32>
    %274 = arith.addf %269, %273 : vector<6x32xf32>
    %c13 = arith.constant 13 : index
    %c0_222 = arith.constant 0 : index
    %275 = tpu.strided_load %arg27[%c13, %c0_222] {strides = array<i32: 32, 1>} : memref<192x32xf32, #tpu.memory_space<vmem>>, vector<6x32xf32>
    %c13_223 = arith.constant 13 : index
    %c0_224 = arith.constant 0 : index
    %c0_225 = arith.constant 0 : index
    %276 = vector.load %arg6[%c13_223, %c0_224, %c0_225] : memref<32x32x32xf32, #tpu.memory_space<vmem>>, vector<1x32x32xf32>
    %277 = vector.shape_cast %276 : vector<1x32x32xf32> to vector<32x32xf32>
    %cst_226 = arith.constant dense<0.000000e+00> : vector<6x32xf32>
    %278 = tpu.matmul %275, %277, %cst_226 {dimension_numbers = #tpu.dot_dimension_numbers<[1], [0], [0], [1], [0, 0, 1, 1], [], []>} : vector<6x32xf32>, vector<32x32xf32>, vector<6x32xf32> -> vector<6x32xf32>
    %279 = arith.addf %274, %278 : vector<6x32xf32>
    %c14 = arith.constant 14 : index
    %c0_227 = arith.constant 0 : index
    %280 = tpu.strided_load %arg27[%c14, %c0_227] {strides = array<i32: 32, 1>} : memref<192x32xf32, #tpu.memory_space<vmem>>, vector<6x32xf32>
    %c14_228 = arith.constant 14 : index
    %c0_229 = arith.constant 0 : index
    %c0_230 = arith.constant 0 : index
    %281 = vector.load %arg6[%c14_228, %c0_229, %c0_230] : memref<32x32x32xf32, #tpu.memory_space<vmem>>, vector<1x32x32xf32>
    %282 = vector.shape_cast %281 : vector<1x32x32xf32> to vector<32x32xf32>
    %cst_231 = arith.constant dense<0.000000e+00> : vector<6x32xf32>
    %283 = tpu.matmul %280, %282, %cst_231 {dimension_numbers = #tpu.dot_dimension_numbers<[1], [0], [0], [1], [0, 0, 1, 1], [], []>} : vector<6x32xf32>, vector<32x32xf32>, vector<6x32xf32> -> vector<6x32xf32>
    %284 = arith.addf %279, %283 : vector<6x32xf32>
    %c15 = arith.constant 15 : index
    %c0_232 = arith.constant 0 : index
    %285 = tpu.strided_load %arg27[%c15, %c0_232] {strides = array<i32: 32, 1>} : memref<192x32xf32, #tpu.memory_space<vmem>>, vector<6x32xf32>
    %c15_233 = arith.constant 15 : index
    %c0_234 = arith.constant 0 : index
    %c0_235 = arith.constant 0 : index
    %286 = vector.load %arg6[%c15_233, %c0_234, %c0_235] : memref<32x32x32xf32, #tpu.memory_space<vmem>>, vector<1x32x32xf32>
    %287 = vector.shape_cast %286 : vector<1x32x32xf32> to vector<32x32xf32>
    %cst_236 = arith.constant dense<0.000000e+00> : vector<6x32xf32>
    %288 = tpu.matmul %285, %287, %cst_236 {dimension_numbers = #tpu.dot_dimension_numbers<[1], [0], [0], [1], [0, 0, 1, 1], [], []>} : vector<6x32xf32>, vector<32x32xf32>, vector<6x32xf32> -> vector<6x32xf32>
    %289 = arith.addf %284, %288 : vector<6x32xf32>
    %c16 = arith.constant 16 : index
    %c0_237 = arith.constant 0 : index
    %290 = tpu.strided_load %arg27[%c16, %c0_237] {strides = array<i32: 32, 1>} : memref<192x32xf32, #tpu.memory_space<vmem>>, vector<6x32xf32>
    %c16_238 = arith.constant 16 : index
    %c0_239 = arith.constant 0 : index
    %c0_240 = arith.constant 0 : index
    %291 = vector.load %arg6[%c16_238, %c0_239, %c0_240] : memref<32x32x32xf32, #tpu.memory_space<vmem>>, vector<1x32x32xf32>
    %292 = vector.shape_cast %291 : vector<1x32x32xf32> to vector<32x32xf32>
    %cst_241 = arith.constant dense<0.000000e+00> : vector<6x32xf32>
    %293 = tpu.matmul %290, %292, %cst_241 {dimension_numbers = #tpu.dot_dimension_numbers<[1], [0], [0], [1], [0, 0, 1, 1], [], []>} : vector<6x32xf32>, vector<32x32xf32>, vector<6x32xf32> -> vector<6x32xf32>
    %294 = arith.addf %289, %293 : vector<6x32xf32>
    %c17 = arith.constant 17 : index
    %c0_242 = arith.constant 0 : index
    %295 = tpu.strided_load %arg27[%c17, %c0_242] {strides = array<i32: 32, 1>} : memref<192x32xf32, #tpu.memory_space<vmem>>, vector<6x32xf32>
    %c17_243 = arith.constant 17 : index
    %c0_244 = arith.constant 0 : index
    %c0_245 = arith.constant 0 : index
    %296 = vector.load %arg6[%c17_243, %c0_244, %c0_245] : memref<32x32x32xf32, #tpu.memory_space<vmem>>, vector<1x32x32xf32>
    %297 = vector.shape_cast %296 : vector<1x32x32xf32> to vector<32x32xf32>
    %cst_246 = arith.constant dense<0.000000e+00> : vector<6x32xf32>
    %298 = tpu.matmul %295, %297, %cst_246 {dimension_numbers = #tpu.dot_dimension_numbers<[1], [0], [0], [1], [0, 0, 1, 1], [], []>} : vector<6x32xf32>, vector<32x32xf32>, vector<6x32xf32> -> vector<6x32xf32>
    %299 = arith.addf %294, %298 : vector<6x32xf32>
    %c18 = arith.constant 18 : index
    %c0_247 = arith.constant 0 : index
    %300 = tpu.strided_load %arg27[%c18, %c0_247] {strides = array<i32: 32, 1>} : memref<192x32xf32, #tpu.memory_space<vmem>>, vector<6x32xf32>
    %c18_248 = arith.constant 18 : index
    %c0_249 = arith.constant 0 : index
    %c0_250 = arith.constant 0 : index
    %301 = vector.load %arg6[%c18_248, %c0_249, %c0_250] : memref<32x32x32xf32, #tpu.memory_space<vmem>>, vector<1x32x32xf32>
    %302 = vector.shape_cast %301 : vector<1x32x32xf32> to vector<32x32xf32>
    %cst_251 = arith.constant dense<0.000000e+00> : vector<6x32xf32>
    %303 = tpu.matmul %300, %302, %cst_251 {dimension_numbers = #tpu.dot_dimension_numbers<[1], [0], [0], [1], [0, 0, 1, 1], [], []>} : vector<6x32xf32>, vector<32x32xf32>, vector<6x32xf32> -> vector<6x32xf32>
    %304 = arith.addf %299, %303 : vector<6x32xf32>
    %c19 = arith.constant 19 : index
    %c0_252 = arith.constant 0 : index
    %305 = tpu.strided_load %arg27[%c19, %c0_252] {strides = array<i32: 32, 1>} : memref<192x32xf32, #tpu.memory_space<vmem>>, vector<6x32xf32>
    %c19_253 = arith.constant 19 : index
    %c0_254 = arith.constant 0 : index
    %c0_255 = arith.constant 0 : index
    %306 = vector.load %arg6[%c19_253, %c0_254, %c0_255] : memref<32x32x32xf32, #tpu.memory_space<vmem>>, vector<1x32x32xf32>
    %307 = vector.shape_cast %306 : vector<1x32x32xf32> to vector<32x32xf32>
    %cst_256 = arith.constant dense<0.000000e+00> : vector<6x32xf32>
    %308 = tpu.matmul %305, %307, %cst_256 {dimension_numbers = #tpu.dot_dimension_numbers<[1], [0], [0], [1], [0, 0, 1, 1], [], []>} : vector<6x32xf32>, vector<32x32xf32>, vector<6x32xf32> -> vector<6x32xf32>
    %309 = arith.addf %304, %308 : vector<6x32xf32>
    %c20 = arith.constant 20 : index
    %c0_257 = arith.constant 0 : index
    %310 = tpu.strided_load %arg27[%c20, %c0_257] {strides = array<i32: 32, 1>} : memref<192x32xf32, #tpu.memory_space<vmem>>, vector<6x32xf32>
    %c20_258 = arith.constant 20 : index
    %c0_259 = arith.constant 0 : index
    %c0_260 = arith.constant 0 : index
    %311 = vector.load %arg6[%c20_258, %c0_259, %c0_260] : memref<32x32x32xf32, #tpu.memory_space<vmem>>, vector<1x32x32xf32>
    %312 = vector.shape_cast %311 : vector<1x32x32xf32> to vector<32x32xf32>
    %cst_261 = arith.constant dense<0.000000e+00> : vector<6x32xf32>
    %313 = tpu.matmul %310, %312, %cst_261 {dimension_numbers = #tpu.dot_dimension_numbers<[1], [0], [0], [1], [0, 0, 1, 1], [], []>} : vector<6x32xf32>, vector<32x32xf32>, vector<6x32xf32> -> vector<6x32xf32>
    %314 = arith.addf %309, %313 : vector<6x32xf32>
    %c21 = arith.constant 21 : index
    %c0_262 = arith.constant 0 : index
    %315 = tpu.strided_load %arg27[%c21, %c0_262] {strides = array<i32: 32, 1>} : memref<192x32xf32, #tpu.memory_space<vmem>>, vector<6x32xf32>
    %c21_263 = arith.constant 21 : index
    %c0_264 = arith.constant 0 : index
    %c0_265 = arith.constant 0 : index
    %316 = vector.load %arg6[%c21_263, %c0_264, %c0_265] : memref<32x32x32xf32, #tpu.memory_space<vmem>>, vector<1x32x32xf32>
    %317 = vector.shape_cast %316 : vector<1x32x32xf32> to vector<32x32xf32>
    %cst_266 = arith.constant dense<0.000000e+00> : vector<6x32xf32>
    %318 = tpu.matmul %315, %317, %cst_266 {dimension_numbers = #tpu.dot_dimension_numbers<[1], [0], [0], [1], [0, 0, 1, 1], [], []>} : vector<6x32xf32>, vector<32x32xf32>, vector<6x32xf32> -> vector<6x32xf32>
    %319 = arith.addf %314, %318 : vector<6x32xf32>
    %c22 = arith.constant 22 : index
    %c0_267 = arith.constant 0 : index
    %320 = tpu.strided_load %arg27[%c22, %c0_267] {strides = array<i32: 32, 1>} : memref<192x32xf32, #tpu.memory_space<vmem>>, vector<6x32xf32>
    %c22_268 = arith.constant 22 : index
    %c0_269 = arith.constant 0 : index
    %c0_270 = arith.constant 0 : index
    %321 = vector.load %arg6[%c22_268, %c0_269, %c0_270] : memref<32x32x32xf32, #tpu.memory_space<vmem>>, vector<1x32x32xf32>
    %322 = vector.shape_cast %321 : vector<1x32x32xf32> to vector<32x32xf32>
    %cst_271 = arith.constant dense<0.000000e+00> : vector<6x32xf32>
    %323 = tpu.matmul %320, %322, %cst_271 {dimension_numbers = #tpu.dot_dimension_numbers<[1], [0], [0], [1], [0, 0, 1, 1], [], []>} : vector<6x32xf32>, vector<32x32xf32>, vector<6x32xf32> -> vector<6x32xf32>
    %324 = arith.addf %319, %323 : vector<6x32xf32>
    %c23 = arith.constant 23 : index
    %c0_272 = arith.constant 0 : index
    %325 = tpu.strided_load %arg27[%c23, %c0_272] {strides = array<i32: 32, 1>} : memref<192x32xf32, #tpu.memory_space<vmem>>, vector<6x32xf32>
    %c23_273 = arith.constant 23 : index
    %c0_274 = arith.constant 0 : index
    %c0_275 = arith.constant 0 : index
    %326 = vector.load %arg6[%c23_273, %c0_274, %c0_275] : memref<32x32x32xf32, #tpu.memory_space<vmem>>, vector<1x32x32xf32>
    %327 = vector.shape_cast %326 : vector<1x32x32xf32> to vector<32x32xf32>
    %cst_276 = arith.constant dense<0.000000e+00> : vector<6x32xf32>
    %328 = tpu.matmul %325, %327, %cst_276 {dimension_numbers = #tpu.dot_dimension_numbers<[1], [0], [0], [1], [0, 0, 1, 1], [], []>} : vector<6x32xf32>, vector<32x32xf32>, vector<6x32xf32> -> vector<6x32xf32>
    %329 = arith.addf %324, %328 : vector<6x32xf32>
    %c24 = arith.constant 24 : index
    %c0_277 = arith.constant 0 : index
    %330 = tpu.strided_load %arg27[%c24, %c0_277] {strides = array<i32: 32, 1>} : memref<192x32xf32, #tpu.memory_space<vmem>>, vector<6x32xf32>
    %c24_278 = arith.constant 24 : index
    %c0_279 = arith.constant 0 : index
    %c0_280 = arith.constant 0 : index
    %331 = vector.load %arg6[%c24_278, %c0_279, %c0_280] : memref<32x32x32xf32, #tpu.memory_space<vmem>>, vector<1x32x32xf32>
    %332 = vector.shape_cast %331 : vector<1x32x32xf32> to vector<32x32xf32>
    %cst_281 = arith.constant dense<0.000000e+00> : vector<6x32xf32>
    %333 = tpu.matmul %330, %332, %cst_281 {dimension_numbers = #tpu.dot_dimension_numbers<[1], [0], [0], [1], [0, 0, 1, 1], [], []>} : vector<6x32xf32>, vector<32x32xf32>, vector<6x32xf32> -> vector<6x32xf32>
    %334 = arith.addf %329, %333 : vector<6x32xf32>
    %c25 = arith.constant 25 : index
    %c0_282 = arith.constant 0 : index
    %335 = tpu.strided_load %arg27[%c25, %c0_282] {strides = array<i32: 32, 1>} : memref<192x32xf32, #tpu.memory_space<vmem>>, vector<6x32xf32>
    %c25_283 = arith.constant 25 : index
    %c0_284 = arith.constant 0 : index
    %c0_285 = arith.constant 0 : index
    %336 = vector.load %arg6[%c25_283, %c0_284, %c0_285] : memref<32x32x32xf32, #tpu.memory_space<vmem>>, vector<1x32x32xf32>
    %337 = vector.shape_cast %336 : vector<1x32x32xf32> to vector<32x32xf32>
    %cst_286 = arith.constant dense<0.000000e+00> : vector<6x32xf32>
    %338 = tpu.matmul %335, %337, %cst_286 {dimension_numbers = #tpu.dot_dimension_numbers<[1], [0], [0], [1], [0, 0, 1, 1], [], []>} : vector<6x32xf32>, vector<32x32xf32>, vector<6x32xf32> -> vector<6x32xf32>
    %339 = arith.addf %334, %338 : vector<6x32xf32>
    %c26 = arith.constant 26 : index
    %c0_287 = arith.constant 0 : index
    %340 = tpu.strided_load %arg27[%c26, %c0_287] {strides = array<i32: 32, 1>} : memref<192x32xf32, #tpu.memory_space<vmem>>, vector<6x32xf32>
    %c26_288 = arith.constant 26 : index
    %c0_289 = arith.constant 0 : index
    %c0_290 = arith.constant 0 : index
    %341 = vector.load %arg6[%c26_288, %c0_289, %c0_290] : memref<32x32x32xf32, #tpu.memory_space<vmem>>, vector<1x32x32xf32>
    %342 = vector.shape_cast %341 : vector<1x32x32xf32> to vector<32x32xf32>
    %cst_291 = arith.constant dense<0.000000e+00> : vector<6x32xf32>
    %343 = tpu.matmul %340, %342, %cst_291 {dimension_numbers = #tpu.dot_dimension_numbers<[1], [0], [0], [1], [0, 0, 1, 1], [], []>} : vector<6x32xf32>, vector<32x32xf32>, vector<6x32xf32> -> vector<6x32xf32>
    %344 = arith.addf %339, %343 : vector<6x32xf32>
    %c27 = arith.constant 27 : index
    %c0_292 = arith.constant 0 : index
    %345 = tpu.strided_load %arg27[%c27, %c0_292] {strides = array<i32: 32, 1>} : memref<192x32xf32, #tpu.memory_space<vmem>>, vector<6x32xf32>
    %c27_293 = arith.constant 27 : index
    %c0_294 = arith.constant 0 : index
    %c0_295 = arith.constant 0 : index
    %346 = vector.load %arg6[%c27_293, %c0_294, %c0_295] : memref<32x32x32xf32, #tpu.memory_space<vmem>>, vector<1x32x32xf32>
    %347 = vector.shape_cast %346 : vector<1x32x32xf32> to vector<32x32xf32>
    %cst_296 = arith.constant dense<0.000000e+00> : vector<6x32xf32>
    %348 = tpu.matmul %345, %347, %cst_296 {dimension_numbers = #tpu.dot_dimension_numbers<[1], [0], [0], [1], [0, 0, 1, 1], [], []>} : vector<6x32xf32>, vector<32x32xf32>, vector<6x32xf32> -> vector<6x32xf32>
    %349 = arith.addf %344, %348 : vector<6x32xf32>
    %c28 = arith.constant 28 : index
    %c0_297 = arith.constant 0 : index
    %350 = tpu.strided_load %arg27[%c28, %c0_297] {strides = array<i32: 32, 1>} : memref<192x32xf32, #tpu.memory_space<vmem>>, vector<6x32xf32>
    %c28_298 = arith.constant 28 : index
    %c0_299 = arith.constant 0 : index
    %c0_300 = arith.constant 0 : index
    %351 = vector.load %arg6[%c28_298, %c0_299, %c0_300] : memref<32x32x32xf32, #tpu.memory_space<vmem>>, vector<1x32x32xf32>
    %352 = vector.shape_cast %351 : vector<1x32x32xf32> to vector<32x32xf32>
    %cst_301 = arith.constant dense<0.000000e+00> : vector<6x32xf32>
    %353 = tpu.matmul %350, %352, %cst_301 {dimension_numbers = #tpu.dot_dimension_numbers<[1], [0], [0], [1], [0, 0, 1, 1], [], []>} : vector<6x32xf32>, vector<32x32xf32>, vector<6x32xf32> -> vector<6x32xf32>
    %354 = arith.addf %349, %353 : vector<6x32xf32>
    %c29 = arith.constant 29 : index
    %c0_302 = arith.constant 0 : index
    %355 = tpu.strided_load %arg27[%c29, %c0_302] {strides = array<i32: 32, 1>} : memref<192x32xf32, #tpu.memory_space<vmem>>, vector<6x32xf32>
    %c29_303 = arith.constant 29 : index
    %c0_304 = arith.constant 0 : index
    %c0_305 = arith.constant 0 : index
    %356 = vector.load %arg6[%c29_303, %c0_304, %c0_305] : memref<32x32x32xf32, #tpu.memory_space<vmem>>, vector<1x32x32xf32>
    %357 = vector.shape_cast %356 : vector<1x32x32xf32> to vector<32x32xf32>
    %cst_306 = arith.constant dense<0.000000e+00> : vector<6x32xf32>
    %358 = tpu.matmul %355, %357, %cst_306 {dimension_numbers = #tpu.dot_dimension_numbers<[1], [0], [0], [1], [0, 0, 1, 1], [], []>} : vector<6x32xf32>, vector<32x32xf32>, vector<6x32xf32> -> vector<6x32xf32>
    %359 = arith.addf %354, %358 : vector<6x32xf32>
    %c30 = arith.constant 30 : index
    %c0_307 = arith.constant 0 : index
    %360 = tpu.strided_load %arg27[%c30, %c0_307] {strides = array<i32: 32, 1>} : memref<192x32xf32, #tpu.memory_space<vmem>>, vector<6x32xf32>
    %c30_308 = arith.constant 30 : index
    %c0_309 = arith.constant 0 : index
    %c0_310 = arith.constant 0 : index
    %361 = vector.load %arg6[%c30_308, %c0_309, %c0_310] : memref<32x32x32xf32, #tpu.memory_space<vmem>>, vector<1x32x32xf32>
    %362 = vector.shape_cast %361 : vector<1x32x32xf32> to vector<32x32xf32>
    %cst_311 = arith.constant dense<0.000000e+00> : vector<6x32xf32>
    %363 = tpu.matmul %360, %362, %cst_311 {dimension_numbers = #tpu.dot_dimension_numbers<[1], [0], [0], [1], [0, 0, 1, 1], [], []>} : vector<6x32xf32>, vector<32x32xf32>, vector<6x32xf32> -> vector<6x32xf32>
    %364 = arith.addf %359, %363 : vector<6x32xf32>
    %c31 = arith.constant 31 : index
    %c0_312 = arith.constant 0 : index
    %365 = tpu.strided_load %arg27[%c31, %c0_312] {strides = array<i32: 32, 1>} : memref<192x32xf32, #tpu.memory_space<vmem>>, vector<6x32xf32>
    %c31_313 = arith.constant 31 : index
    %c0_314 = arith.constant 0 : index
    %c0_315 = arith.constant 0 : index
    %366 = vector.load %arg6[%c31_313, %c0_314, %c0_315] : memref<32x32x32xf32, #tpu.memory_space<vmem>>, vector<1x32x32xf32>
    %367 = vector.shape_cast %366 : vector<1x32x32xf32> to vector<32x32xf32>
    %cst_316 = arith.constant dense<0.000000e+00> : vector<6x32xf32>
    %368 = tpu.matmul %365, %367, %cst_316 {dimension_numbers = #tpu.dot_dimension_numbers<[1], [0], [0], [1], [0, 0, 1, 1], [], []>} : vector<6x32xf32>, vector<32x32xf32>, vector<6x32xf32> -> vector<6x32xf32>
    %369 = arith.addf %364, %368 : vector<6x32xf32>
    %c0_317 = arith.constant 0 : index
    %c0_318 = arith.constant 0 : index
    %370 = vector.load %arg28[%c0_317, %c0_318] : memref<6x32xf32, #tpu.memory_space<vmem>>, vector<6x32xf32>
    tpu.vector_store %arg28[%c0_317, %c0_318], %369 {strides = array<i32>} : memref<6x32xf32, #tpu.memory_space<vmem>>, vector<6x32xf32>,
    %c0_319 = arith.constant 0 : index
    %c0_320 = arith.constant 0 : index
    %371 = vector.load %arg10[%c0_319, %c0_320] : memref<1x32xf32, #tpu.memory_space<vmem>>, vector<1x32xf32>
    %c0_321 = arith.constant 0 : index
    %c0_322 = arith.constant 0 : index
    %372 = vector.load %arg11[%c0_321, %c0_322] : memref<32x96xf32, #tpu.memory_space<vmem>>, vector<32x96xf32>
    %c0_323 = arith.constant 0 : index
    %c0_324 = arith.constant 0 : index
    %373 = vector.load %arg12[%c0_323, %c0_324] : memref<32x32xf32, #tpu.memory_space<vmem>>, vector<32x32xf32>
    %c0_325 = arith.constant 0 : index
    %c0_326 = arith.constant 0 : index
    %374 = vector.load %arg13[%c0_325, %c0_326] : memref<1x32xf32, #tpu.memory_space<vmem>>, vector<1x32xf32>
    %c0_327 = arith.constant 0 : index
    %c0_328 = arith.constant 0 : index
    %375 = vector.load %arg14[%c0_327, %c0_328] : memref<32x64xf32, #tpu.memory_space<vmem>>, vector<32x64xf32>
    %c0_329 = arith.constant 0 : index
    %c0_330 = arith.constant 0 : index
    %376 = vector.load %arg15[%c0_329, %c0_330] : memref<64x32xf32, #tpu.memory_space<vmem>>, vector<64x32xf32>
    %c0_331 = arith.constant 0 : index
    %c0_332 = arith.constant 0 : index
    %377 = vector.load %arg16[%c0_331, %c0_332] : memref<1x32xf32, #tpu.memory_space<vmem>>, vector<1x32xf32>
    %c0_333 = arith.constant 0 : index
    %c0_334 = arith.constant 0 : index
    %378 = vector.load %arg17[%c0_333, %c0_334] : memref<32x96xf32, #tpu.memory_space<vmem>>, vector<32x96xf32>
    %c0_335 = arith.constant 0 : index
    %c0_336 = arith.constant 0 : index
    %379 = vector.load %arg18[%c0_335, %c0_336] : memref<32x32xf32, #tpu.memory_space<vmem>>, vector<32x32xf32>
    %c0_337 = arith.constant 0 : index
    %c0_338 = arith.constant 0 : index
    %380 = vector.load %arg19[%c0_337, %c0_338] : memref<1x32xf32, #tpu.memory_space<vmem>>, vector<1x32xf32>
    %c0_339 = arith.constant 0 : index
    %c0_340 = arith.constant 0 : index
    %381 = vector.load %arg20[%c0_339, %c0_340] : memref<32x64xf32, #tpu.memory_space<vmem>>, vector<32x64xf32>
    %c0_341 = arith.constant 0 : index
    %c0_342 = arith.constant 0 : index
    %382 = vector.load %arg21[%c0_341, %c0_342] : memref<64x32xf32, #tpu.memory_space<vmem>>, vector<64x32xf32>
    %c0_343 = arith.constant 0 : index
    %c0_344 = arith.constant 0 : index
    %383 = vector.load %arg22[%c0_343, %c0_344] : memref<1x32xf32, #tpu.memory_space<vmem>>, vector<1x32xf32>
    %c0_345 = arith.constant 0 : index
    %c0_346 = arith.constant 0 : index
    %384 = vector.load %arg23[%c0_345, %c0_346] : memref<1x32xf32, #tpu.memory_space<vmem>>, vector<1x32xf32>
    %c0_347 = arith.constant 0 : index
    %c0_348 = arith.constant 0 : index
    %385 = vector.load %arg24[%c0_347, %c0_348] : memref<32x8xf32, #tpu.memory_space<vmem>>, vector<32x8xf32>
    %c0_349 = arith.constant 0 : index
    %c0_350 = arith.constant 0 : index
    %386 = vector.load %arg25[%c0_349, %c0_350] : memref<1x8xf32, #tpu.memory_space<vmem>>, vector<1x8xf32>
    %c0_351 = arith.constant 0 : index
    %c0_352 = arith.constant 0 : index
    %387 = vector.load %arg8[%c0_351, %c0_352] : memref<1x32xf32, #tpu.memory_space<vmem>>, vector<1x32xf32>
    %c0_353 = arith.constant 0 : index
    %c0_354 = arith.constant 0 : index
    %388 = vector.load %arg9[%c0_353, %c0_354] : memref<4x32xf32, #tpu.memory_space<vmem>>, vector<1x32xf32>
    %389 = arith.addf %387, %388 : vector<1x32xf32>
    %c0_355 = arith.constant 0 : index
    %c0_356 = arith.constant 0 : index
    %390 = vector.load %arg29[%c0_355, %c0_356] : memref<4x32xf32, #tpu.memory_space<vmem>>, vector<1x32xf32>
    tpu.vector_store %arg29[%c0_355, %c0_356], %389 {strides = array<i32>} : memref<4x32xf32, #tpu.memory_space<vmem>>, vector<1x32xf32>,
    %c0_357 = arith.constant 0 : index
    %c0_358 = arith.constant 0 : index
    %391 = vector.load %arg28[%c0_357, %c0_358] : memref<6x32xf32, #tpu.memory_space<vmem>>, vector<3x32xf32>
    %c1_359 = arith.constant 1 : index
    %c0_360 = arith.constant 0 : index
    %392 = vector.load %arg9[%c1_359, %c0_360] : memref<4x32xf32, #tpu.memory_space<vmem>>, vector<3x32xf32>
    %393 = arith.addf %391, %392 : vector<3x32xf32>
    %c1_361 = arith.constant 1 : index
    %c0_362 = arith.constant 0 : index
    %394 = vector.load %arg29[%c1_361, %c0_362] : memref<4x32xf32, #tpu.memory_space<vmem>>, vector<3x32xf32>
    tpu.vector_store %arg29[%c1_361, %c0_362], %393 {strides = array<i32>} : memref<4x32xf32, #tpu.memory_space<vmem>>, vector<3x32xf32>,
    %c0_363 = arith.constant 0 : index
    %c0_364 = arith.constant 0 : index
    %395 = vector.load %arg29[%c0_363, %c0_364] : memref<4x32xf32, #tpu.memory_space<vmem>>, vector<4x32xf32>
    %cst_365 = arith.constant dense<0.000000e+00> : vector<4xf32>
    %396 = vector.multi_reduction <add>, %395, %cst_365 [1] : vector<4x32xf32> to vector<4xf32>
    %397 = vector.shape_cast %396 : vector<4xf32> to vector<4x1xf32>
    %cst_366 = arith.constant 3.200000e+01 : f32
    %398 = vector.broadcast %cst_366 : f32 to vector<4x1xf32>
    %399 = arith.divf %397, %398 : vector<4x1xf32>
    %400 = vector.broadcast %399 : vector<4x1xf32> to vector<4x32xf32>
    %401 = arith.subf %395, %400 : vector<4x32xf32>
    %402 = arith.mulf %401, %401 : vector<4x32xf32>
    %cst_367 = arith.constant dense<0.000000e+00> : vector<4xf32>
    %403 = vector.multi_reduction <add>, %402, %cst_367 [1] : vector<4x32xf32> to vector<4xf32>
    %404 = vector.shape_cast %403 : vector<4xf32> to vector<4x1xf32>
    %cst_368 = arith.constant 3.200000e+01 : f32
    %405 = vector.broadcast %cst_368 : f32 to vector<4x1xf32>
    %406 = arith.divf %404, %405 : vector<4x1xf32>
    %407 = vector.broadcast %399 : vector<4x1xf32> to vector<4x32xf32>
    %408 = arith.subf %395, %407 : vector<4x32xf32>
    %cst_369 = arith.constant 9.99999974E-6 : f32
    %409 = vector.broadcast %cst_369 : f32 to vector<4x1xf32>
    %410 = arith.addf %406, %409 : vector<4x1xf32>
    %411 = math.rsqrt %410 : vector<4x1xf32>
    %412 = vector.broadcast %411 : vector<4x1xf32> to vector<4x32xf32>
    %413 = arith.mulf %408, %412 : vector<4x32xf32>
    %414 = vector.broadcast %371 : vector<1x32xf32> to vector<4x32xf32>
    %415 = arith.mulf %413, %414 : vector<4x32xf32>
    %cst_370 = arith.constant dense<0.000000e+00> : vector<4x96xf32>
    %416 = tpu.matmul %415, %372, %cst_370 {dimension_numbers = #tpu.dot_dimension_numbers<[1], [0], [0], [1], [0, 0, 1, 1], [], []>} : vector<4x32xf32>, vector<32x96xf32>, vector<4x96xf32> -> vector<4x96xf32>
    %417 = vector.extract_strided_slice %416 {offsets = [0, 0], sizes = [4, 16], strides = [1, 1]} : vector<4x96xf32> to vector<4x16xf32>
    %418 = vector.extract_strided_slice %416 {offsets = [0, 32], sizes = [4, 16], strides = [1, 1]} : vector<4x96xf32> to vector<4x16xf32>
    %419 = vector.extract_strided_slice %416 {offsets = [0, 64], sizes = [4, 16], strides = [1, 1]} : vector<4x96xf32> to vector<4x16xf32>
    %cst_371 = arith.constant dense<0.000000e+00> : vector<4x4xf32>
    %420 = tpu.matmul %417, %418, %cst_371 {dimension_numbers = #tpu.dot_dimension_numbers<[1], [1], [0], [0], [0, 0, 1, 0], [], []>} : vector<4x16xf32>, vector<4x16xf32>, vector<4x4xf32> -> vector<4x4xf32>
    %cst_372 = arith.constant 2.500000e-01 : f32
    %421 = vector.broadcast %cst_372 : f32 to vector<4x4xf32>
    %422 = arith.mulf %420, %421 : vector<4x4xf32>
    %cst_373 = arith.constant dense<0xFF800000> : vector<4xf32>
    %423 = vector.multi_reduction <maximumf>, %422, %cst_373 [1] : vector<4x4xf32> to vector<4xf32>
    %424 = vector.shape_cast %423 : vector<4xf32> to vector<4x1xf32>
    %425 = vector.broadcast %424 : vector<4x1xf32> to vector<4x4xf32>
    %426 = arith.subf %422, %425 : vector<4x4xf32>
    %427 = math.exp %426 : vector<4x4xf32>
    %cst_374 = arith.constant dense<0.000000e+00> : vector<4xf32>
    %428 = vector.multi_reduction <add>, %427, %cst_374 [1] : vector<4x4xf32> to vector<4xf32>
    %429 = vector.shape_cast %428 : vector<4xf32> to vector<4x1xf32>
    %430 = vector.broadcast %429 : vector<4x1xf32> to vector<4x4xf32>
    %431 = arith.divf %427, %430 : vector<4x4xf32>
    %cst_375 = arith.constant dense<0.000000e+00> : vector<4x16xf32>
    %432 = tpu.matmul %431, %419, %cst_375 {dimension_numbers = #tpu.dot_dimension_numbers<[1], [0], [0], [1], [0, 0, 1, 1], [], []>} : vector<4x4xf32>, vector<4x16xf32>, vector<4x16xf32> -> vector<4x16xf32>
    %c0_376 = arith.constant 0 : index
    %c0_377 = arith.constant 0 : index
    %433 = vector.load %arg30[%c0_376, %c0_377] : memref<4x32xf32, #tpu.memory_space<vmem>>, vector<4x16xf32>
    tpu.vector_store %arg30[%c0_376, %c0_377], %432 {strides = array<i32>} : memref<4x32xf32, #tpu.memory_space<vmem>>, vector<4x16xf32>,
    %434 = vector.extract_strided_slice %416 {offsets = [0, 16], sizes = [4, 16], strides = [1, 1]} : vector<4x96xf32> to vector<4x16xf32>
    %435 = vector.extract_strided_slice %416 {offsets = [0, 48], sizes = [4, 16], strides = [1, 1]} : vector<4x96xf32> to vector<4x16xf32>
    %436 = vector.extract_strided_slice %416 {offsets = [0, 80], sizes = [4, 16], strides = [1, 1]} : vector<4x96xf32> to vector<4x16xf32>
    %cst_378 = arith.constant dense<0.000000e+00> : vector<4x4xf32>
    %437 = tpu.matmul %434, %435, %cst_378 {dimension_numbers = #tpu.dot_dimension_numbers<[1], [1], [0], [0], [0, 0, 1, 0], [], []>} : vector<4x16xf32>, vector<4x16xf32>, vector<4x4xf32> -> vector<4x4xf32>
    %cst_379 = arith.constant 2.500000e-01 : f32
    %438 = vector.broadcast %cst_379 : f32 to vector<4x4xf32>
    %439 = arith.mulf %437, %438 : vector<4x4xf32>
    %cst_380 = arith.constant dense<0xFF800000> : vector<4xf32>
    %440 = vector.multi_reduction <maximumf>, %439, %cst_380 [1] : vector<4x4xf32> to vector<4xf32>
    %441 = vector.shape_cast %440 : vector<4xf32> to vector<4x1xf32>
    %442 = vector.broadcast %441 : vector<4x1xf32> to vector<4x4xf32>
    %443 = arith.subf %439, %442 : vector<4x4xf32>
    %444 = math.exp %443 : vector<4x4xf32>
    %cst_381 = arith.constant dense<0.000000e+00> : vector<4xf32>
    %445 = vector.multi_reduction <add>, %444, %cst_381 [1] : vector<4x4xf32> to vector<4xf32>
    %446 = vector.shape_cast %445 : vector<4xf32> to vector<4x1xf32>
    %447 = vector.broadcast %446 : vector<4x1xf32> to vector<4x4xf32>
    %448 = arith.divf %444, %447 : vector<4x4xf32>
    %cst_382 = arith.constant dense<0.000000e+00> : vector<4x16xf32>
    %449 = tpu.matmul %448, %436, %cst_382 {dimension_numbers = #tpu.dot_dimension_numbers<[1], [0], [0], [1], [0, 0, 1, 1], [], []>} : vector<4x4xf32>, vector<4x16xf32>, vector<4x16xf32> -> vector<4x16xf32>
    %c0_383 = arith.constant 0 : index
    %c16_384 = arith.constant 16 : index
    %450 = vector.load %arg30[%c0_383, %c16_384] : memref<4x32xf32, #tpu.memory_space<vmem>>, vector<4x16xf32>
    tpu.vector_store %arg30[%c0_383, %c16_384], %449 {strides = array<i32>} : memref<4x32xf32, #tpu.memory_space<vmem>>, vector<4x16xf32>,
    %c0_385 = arith.constant 0 : index
    %c0_386 = arith.constant 0 : index
    %451 = vector.load %arg30[%c0_385, %c0_386] : memref<4x32xf32, #tpu.memory_space<vmem>>, vector<4x32xf32>
    %cst_387 = arith.constant dense<0.000000e+00> : vector<4x32xf32>
    %452 = tpu.matmul %451, %373, %cst_387 {dimension_numbers = #tpu.dot_dimension_numbers<[1], [0], [0], [1], [0, 0, 1, 1], [], []>} : vector<4x32xf32>, vector<32x32xf32>, vector<4x32xf32> -> vector<4x32xf32>
    %453 = arith.addf %395, %452 : vector<4x32xf32>
    %cst_388 = arith.constant dense<0.000000e+00> : vector<4xf32>
    %454 = vector.multi_reduction <add>, %453, %cst_388 [1] : vector<4x32xf32> to vector<4xf32>
    %455 = vector.shape_cast %454 : vector<4xf32> to vector<4x1xf32>
    %cst_389 = arith.constant 3.200000e+01 : f32
    %456 = vector.broadcast %cst_389 : f32 to vector<4x1xf32>
    %457 = arith.divf %455, %456 : vector<4x1xf32>
    %458 = vector.broadcast %457 : vector<4x1xf32> to vector<4x32xf32>
    %459 = arith.subf %453, %458 : vector<4x32xf32>
    %460 = arith.mulf %459, %459 : vector<4x32xf32>
    %cst_390 = arith.constant dense<0.000000e+00> : vector<4xf32>
    %461 = vector.multi_reduction <add>, %460, %cst_390 [1] : vector<4x32xf32> to vector<4xf32>
    %462 = vector.shape_cast %461 : vector<4xf32> to vector<4x1xf32>
    %cst_391 = arith.constant 3.200000e+01 : f32
    %463 = vector.broadcast %cst_391 : f32 to vector<4x1xf32>
    %464 = arith.divf %462, %463 : vector<4x1xf32>
    %465 = vector.broadcast %457 : vector<4x1xf32> to vector<4x32xf32>
    %466 = arith.subf %453, %465 : vector<4x32xf32>
    %cst_392 = arith.constant 9.99999974E-6 : f32
    %467 = vector.broadcast %cst_392 : f32 to vector<4x1xf32>
    %468 = arith.addf %464, %467 : vector<4x1xf32>
    %469 = math.rsqrt %468 : vector<4x1xf32>
    %470 = vector.broadcast %469 : vector<4x1xf32> to vector<4x32xf32>
    %471 = arith.mulf %466, %470 : vector<4x32xf32>
    %472 = vector.broadcast %374 : vector<1x32xf32> to vector<4x32xf32>
    %473 = arith.mulf %471, %472 : vector<4x32xf32>
    %cst_393 = arith.constant dense<0.000000e+00> : vector<4x64xf32>
    %474 = tpu.matmul %473, %375, %cst_393 {dimension_numbers = #tpu.dot_dimension_numbers<[1], [0], [0], [1], [0, 0, 1, 1], [], []>} : vector<4x32xf32>, vector<32x64xf32>, vector<4x64xf32> -> vector<4x64xf32>
    %cst_394 = arith.constant 0.000000e+00 : f32
    %475 = vector.broadcast %cst_394 : f32 to vector<4x64xf32>
    %476 = arith.maximumf %474, %475 : vector<4x64xf32>
    %cst_395 = arith.constant dense<0.000000e+00> : vector<4x32xf32>
    %477 = tpu.matmul %476, %376, %cst_395 {dimension_numbers = #tpu.dot_dimension_numbers<[1], [0], [0], [1], [0, 0, 1, 1], [], []>} : vector<4x64xf32>, vector<64x32xf32>, vector<4x32xf32> -> vector<4x32xf32>
    %478 = arith.addf %453, %477 : vector<4x32xf32>
    %cst_396 = arith.constant dense<0.000000e+00> : vector<4xf32>
    %479 = vector.multi_reduction <add>, %478, %cst_396 [1] : vector<4x32xf32> to vector<4xf32>
    %480 = vector.shape_cast %479 : vector<4xf32> to vector<4x1xf32>
    %cst_397 = arith.constant 3.200000e+01 : f32
    %481 = vector.broadcast %cst_397 : f32 to vector<4x1xf32>
    %482 = arith.divf %480, %481 : vector<4x1xf32>
    %483 = vector.broadcast %482 : vector<4x1xf32> to vector<4x32xf32>
    %484 = arith.subf %478, %483 : vector<4x32xf32>
    %485 = arith.mulf %484, %484 : vector<4x32xf32>
    %cst_398 = arith.constant dense<0.000000e+00> : vector<4xf32>
    %486 = vector.multi_reduction <add>, %485, %cst_398 [1] : vector<4x32xf32> to vector<4xf32>
    %487 = vector.shape_cast %486 : vector<4xf32> to vector<4x1xf32>
    %cst_399 = arith.constant 3.200000e+01 : f32
    %488 = vector.broadcast %cst_399 : f32 to vector<4x1xf32>
    %489 = arith.divf %487, %488 : vector<4x1xf32>
    %490 = vector.broadcast %482 : vector<4x1xf32> to vector<4x32xf32>
    %491 = arith.subf %478, %490 : vector<4x32xf32>
    %cst_400 = arith.constant 9.99999974E-6 : f32
    %492 = vector.broadcast %cst_400 : f32 to vector<4x1xf32>
    %493 = arith.addf %489, %492 : vector<4x1xf32>
    %494 = math.rsqrt %493 : vector<4x1xf32>
    %495 = vector.broadcast %494 : vector<4x1xf32> to vector<4x32xf32>
    %496 = arith.mulf %491, %495 : vector<4x32xf32>
    %497 = vector.broadcast %377 : vector<1x32xf32> to vector<4x32xf32>
    %498 = arith.mulf %496, %497 : vector<4x32xf32>
    %cst_401 = arith.constant dense<0.000000e+00> : vector<4x96xf32>
    %499 = tpu.matmul %498, %378, %cst_401 {dimension_numbers = #tpu.dot_dimension_numbers<[1], [0], [0], [1], [0, 0, 1, 1], [], []>} : vector<4x32xf32>, vector<32x96xf32>, vector<4x96xf32> -> vector<4x96xf32>
    %500 = vector.extract_strided_slice %499 {offsets = [0, 0], sizes = [4, 16], strides = [1, 1]} : vector<4x96xf32> to vector<4x16xf32>
    %501 = vector.extract_strided_slice %499 {offsets = [0, 32], sizes = [4, 16], strides = [1, 1]} : vector<4x96xf32> to vector<4x16xf32>
    %502 = vector.extract_strided_slice %499 {offsets = [0, 64], sizes = [4, 16], strides = [1, 1]} : vector<4x96xf32> to vector<4x16xf32>
    %cst_402 = arith.constant dense<0.000000e+00> : vector<4x4xf32>
    %503 = tpu.matmul %500, %501, %cst_402 {dimension_numbers = #tpu.dot_dimension_numbers<[1], [1], [0], [0], [0, 0, 1, 0], [], []>} : vector<4x16xf32>, vector<4x16xf32>, vector<4x4xf32> -> vector<4x4xf32>
    %cst_403 = arith.constant 2.500000e-01 : f32
    %504 = vector.broadcast %cst_403 : f32 to vector<4x4xf32>
    %505 = arith.mulf %503, %504 : vector<4x4xf32>
    %cst_404 = arith.constant dense<0xFF800000> : vector<4xf32>
    %506 = vector.multi_reduction <maximumf>, %505, %cst_404 [1] : vector<4x4xf32> to vector<4xf32>
    %507 = vector.shape_cast %506 : vector<4xf32> to vector<4x1xf32>
    %508 = vector.broadcast %507 : vector<4x1xf32> to vector<4x4xf32>
    %509 = arith.subf %505, %508 : vector<4x4xf32>
    %510 = math.exp %509 : vector<4x4xf32>
    %cst_405 = arith.constant dense<0.000000e+00> : vector<4xf32>
    %511 = vector.multi_reduction <add>, %510, %cst_405 [1] : vector<4x4xf32> to vector<4xf32>
    %512 = vector.shape_cast %511 : vector<4xf32> to vector<4x1xf32>
    %513 = vector.broadcast %512 : vector<4x1xf32> to vector<4x4xf32>
    %514 = arith.divf %510, %513 : vector<4x4xf32>
    %cst_406 = arith.constant dense<0.000000e+00> : vector<4x16xf32>
    %515 = tpu.matmul %514, %502, %cst_406 {dimension_numbers = #tpu.dot_dimension_numbers<[1], [0], [0], [1], [0, 0, 1, 1], [], []>} : vector<4x4xf32>, vector<4x16xf32>, vector<4x16xf32> -> vector<4x16xf32>
    %c0_407 = arith.constant 0 : index
    %c0_408 = arith.constant 0 : index
    %516 = vector.load %arg30[%c0_407, %c0_408] : memref<4x32xf32, #tpu.memory_space<vmem>>, vector<4x16xf32>
    tpu.vector_store %arg30[%c0_407, %c0_408], %515 {strides = array<i32>} : memref<4x32xf32, #tpu.memory_space<vmem>>, vector<4x16xf32>,
    %517 = vector.extract_strided_slice %499 {offsets = [0, 16], sizes = [4, 16], strides = [1, 1]} : vector<4x96xf32> to vector<4x16xf32>
    %518 = vector.extract_strided_slice %499 {offsets = [0, 48], sizes = [4, 16], strides = [1, 1]} : vector<4x96xf32> to vector<4x16xf32>
    %519 = vector.extract_strided_slice %499 {offsets = [0, 80], sizes = [4, 16], strides = [1, 1]} : vector<4x96xf32> to vector<4x16xf32>
    %cst_409 = arith.constant dense<0.000000e+00> : vector<4x4xf32>
    %520 = tpu.matmul %517, %518, %cst_409 {dimension_numbers = #tpu.dot_dimension_numbers<[1], [1], [0], [0], [0, 0, 1, 0], [], []>} : vector<4x16xf32>, vector<4x16xf32>, vector<4x4xf32> -> vector<4x4xf32>
    %cst_410 = arith.constant 2.500000e-01 : f32
    %521 = vector.broadcast %cst_410 : f32 to vector<4x4xf32>
    %522 = arith.mulf %520, %521 : vector<4x4xf32>
    %cst_411 = arith.constant dense<0xFF800000> : vector<4xf32>
    %523 = vector.multi_reduction <maximumf>, %522, %cst_411 [1] : vector<4x4xf32> to vector<4xf32>
    %524 = vector.shape_cast %523 : vector<4xf32> to vector<4x1xf32>
    %525 = vector.broadcast %524 : vector<4x1xf32> to vector<4x4xf32>
    %526 = arith.subf %522, %525 : vector<4x4xf32>
    %527 = math.exp %526 : vector<4x4xf32>
    %cst_412 = arith.constant dense<0.000000e+00> : vector<4xf32>
    %528 = vector.multi_reduction <add>, %527, %cst_412 [1] : vector<4x4xf32> to vector<4xf32>
    %529 = vector.shape_cast %528 : vector<4xf32> to vector<4x1xf32>
    %530 = vector.broadcast %529 : vector<4x1xf32> to vector<4x4xf32>
    %531 = arith.divf %527, %530 : vector<4x4xf32>
    %cst_413 = arith.constant dense<0.000000e+00> : vector<4x16xf32>
    %532 = tpu.matmul %531, %519, %cst_413 {dimension_numbers = #tpu.dot_dimension_numbers<[1], [0], [0], [1], [0, 0, 1, 1], [], []>} : vector<4x4xf32>, vector<4x16xf32>, vector<4x16xf32> -> vector<4x16xf32>
    %c0_414 = arith.constant 0 : index
    %c16_415 = arith.constant 16 : index
    %533 = vector.load %arg30[%c0_414, %c16_415] : memref<4x32xf32, #tpu.memory_space<vmem>>, vector<4x16xf32>
    tpu.vector_store %arg30[%c0_414, %c16_415], %532 {strides = array<i32>} : memref<4x32xf32, #tpu.memory_space<vmem>>, vector<4x16xf32>,
    %c0_416 = arith.constant 0 : index
    %c0_417 = arith.constant 0 : index
    %534 = vector.load %arg30[%c0_416, %c0_417] : memref<4x32xf32, #tpu.memory_space<vmem>>, vector<4x32xf32>
    %cst_418 = arith.constant dense<0.000000e+00> : vector<4x32xf32>
    %535 = tpu.matmul %534, %379, %cst_418 {dimension_numbers = #tpu.dot_dimension_numbers<[1], [0], [0], [1], [0, 0, 1, 1], [], []>} : vector<4x32xf32>, vector<32x32xf32>, vector<4x32xf32> -> vector<4x32xf32>
    %536 = arith.addf %478, %535 : vector<4x32xf32>
    %cst_419 = arith.constant dense<0.000000e+00> : vector<4xf32>
    %537 = vector.multi_reduction <add>, %536, %cst_419 [1] : vector<4x32xf32> to vector<4xf32>
    %538 = vector.shape_cast %537 : vector<4xf32> to vector<4x1xf32>
    %cst_420 = arith.constant 3.200000e+01 : f32
    %539 = vector.broadcast %cst_420 : f32 to vector<4x1xf32>
    %540 = arith.divf %538, %539 : vector<4x1xf32>
    %541 = vector.broadcast %540 : vector<4x1xf32> to vector<4x32xf32>
    %542 = arith.subf %536, %541 : vector<4x32xf32>
    %543 = arith.mulf %542, %542 : vector<4x32xf32>
    %cst_421 = arith.constant dense<0.000000e+00> : vector<4xf32>
    %544 = vector.multi_reduction <add>, %543, %cst_421 [1] : vector<4x32xf32> to vector<4xf32>
    %545 = vector.shape_cast %544 : vector<4xf32> to vector<4x1xf32>
    %cst_422 = arith.constant 3.200000e+01 : f32
    %546 = vector.broadcast %cst_422 : f32 to vector<4x1xf32>
    %547 = arith.divf %545, %546 : vector<4x1xf32>
    %548 = vector.broadcast %540 : vector<4x1xf32> to vector<4x32xf32>
    %549 = arith.subf %536, %548 : vector<4x32xf32>
    %cst_423 = arith.constant 9.99999974E-6 : f32
    %550 = vector.broadcast %cst_423 : f32 to vector<4x1xf32>
    %551 = arith.addf %547, %550 : vector<4x1xf32>
    %552 = math.rsqrt %551 : vector<4x1xf32>
    %553 = vector.broadcast %552 : vector<4x1xf32> to vector<4x32xf32>
    %554 = arith.mulf %549, %553 : vector<4x32xf32>
    %555 = vector.broadcast %380 : vector<1x32xf32> to vector<4x32xf32>
    %556 = arith.mulf %554, %555 : vector<4x32xf32>
    %cst_424 = arith.constant dense<0.000000e+00> : vector<4x64xf32>
    %557 = tpu.matmul %556, %381, %cst_424 {dimension_numbers = #tpu.dot_dimension_numbers<[1], [0], [0], [1], [0, 0, 1, 1], [], []>} : vector<4x32xf32>, vector<32x64xf32>, vector<4x64xf32> -> vector<4x64xf32>
    %cst_425 = arith.constant 0.000000e+00 : f32
    %558 = vector.broadcast %cst_425 : f32 to vector<4x64xf32>
    %559 = arith.maximumf %557, %558 : vector<4x64xf32>
    %cst_426 = arith.constant dense<0.000000e+00> : vector<4x32xf32>
    %560 = tpu.matmul %559, %382, %cst_426 {dimension_numbers = #tpu.dot_dimension_numbers<[1], [0], [0], [1], [0, 0, 1, 1], [], []>} : vector<4x64xf32>, vector<64x32xf32>, vector<4x32xf32> -> vector<4x32xf32>
    %561 = arith.addf %536, %560 : vector<4x32xf32>
    %c0_427 = arith.constant 0 : index
    %c0_428 = arith.constant 0 : index
    %562 = vector.load %arg29[%c0_427, %c0_428] : memref<4x32xf32, #tpu.memory_space<vmem>>, vector<4x32xf32>
    tpu.vector_store %arg29[%c0_427, %c0_428], %561 {strides = array<i32>} : memref<4x32xf32, #tpu.memory_space<vmem>>, vector<4x32xf32>,
    %c0_429 = arith.constant 0 : index
    %c0_430 = arith.constant 0 : index
    %563 = vector.load %arg29[%c0_429, %c0_430] : memref<4x32xf32, #tpu.memory_space<vmem>>, vector<1x32xf32>
    %cst_431 = arith.constant dense<0.000000e+00> : vector<1xf32>
    %564 = vector.multi_reduction <add>, %563, %cst_431 [1] : vector<1x32xf32> to vector<1xf32>
    %565 = vector.shape_cast %564 : vector<1xf32> to vector<1x1xf32>
    %cst_432 = arith.constant 3.200000e+01 : f32
    %566 = vector.broadcast %cst_432 : f32 to vector<1x1xf32>
    %567 = arith.divf %565, %566 : vector<1x1xf32>
    %568 = vector.broadcast %567 : vector<1x1xf32> to vector<1x32xf32>
    %569 = arith.subf %563, %568 : vector<1x32xf32>
    %570 = arith.mulf %569, %569 : vector<1x32xf32>
    %cst_433 = arith.constant dense<0.000000e+00> : vector<1xf32>
    %571 = vector.multi_reduction <add>, %570, %cst_433 [1] : vector<1x32xf32> to vector<1xf32>
    %572 = vector.shape_cast %571 : vector<1xf32> to vector<1x1xf32>
    %cst_434 = arith.constant 3.200000e+01 : f32
    %573 = vector.broadcast %cst_434 : f32 to vector<1x1xf32>
    %574 = arith.divf %572, %573 : vector<1x1xf32>
    %575 = vector.broadcast %567 : vector<1x1xf32> to vector<1x32xf32>
    %576 = arith.subf %563, %575 : vector<1x32xf32>
    %cst_435 = arith.constant 9.99999974E-6 : f32
    %577 = vector.broadcast %cst_435 : f32 to vector<1x1xf32>
    %578 = arith.addf %574, %577 : vector<1x1xf32>
    %579 = math.rsqrt %578 : vector<1x1xf32>
    %580 = vector.broadcast %579 : vector<1x1xf32> to vector<1x32xf32>
    %581 = arith.mulf %576, %580 : vector<1x32xf32>
    %582 = arith.mulf %581, %383 : vector<1x32xf32>
    %583 = arith.addf %582, %384 : vector<1x32xf32>
    %cst_436 = arith.constant dense<0.000000e+00> : vector<1x8xf32>
    %584 = tpu.matmul %583, %385, %cst_436 {dimension_numbers = #tpu.dot_dimension_numbers<[1], [0], [0], [1], [0, 0, 1, 1], [], []>} : vector<1x32xf32>, vector<32x8xf32>, vector<1x8xf32> -> vector<1x8xf32>
    %585 = arith.addf %584, %386 : vector<1x8xf32>
    %c0_437 = arith.constant 0 : index
    %c0_438 = arith.constant 0 : index
    %586 = vector.load %arg26[%c0_437, %c0_438] : memref<2x8xf32, #tpu.memory_space<vmem>>, vector<1x8xf32>
    tpu.vector_store %arg26[%c0_437, %c0_438], %585 {strides = array<i32>} : memref<2x8xf32, #tpu.memory_space<vmem>>, vector<1x8xf32>,
    %c0_439 = arith.constant 0 : index
    %c0_440 = arith.constant 0 : index
    %587 = vector.load %arg29[%c0_439, %c0_440] : memref<4x32xf32, #tpu.memory_space<vmem>>, vector<1x32xf32>
    tpu.vector_store %arg29[%c0_439, %c0_440], %389 {strides = array<i32>} : memref<4x32xf32, #tpu.memory_space<vmem>>, vector<1x32xf32>,
    %c3_441 = arith.constant 3 : index
    %c0_442 = arith.constant 0 : index
    %588 = vector.load %arg28[%c3_441, %c0_442] : memref<6x32xf32, #tpu.memory_space<vmem>>, vector<3x32xf32>
    %c1_443 = arith.constant 1 : index
    %c0_444 = arith.constant 0 : index
    %589 = vector.load %arg9[%c1_443, %c0_444] : memref<4x32xf32, #tpu.memory_space<vmem>>, vector<3x32xf32>
    %590 = arith.addf %588, %589 : vector<3x32xf32>
    %c1_445 = arith.constant 1 : index
    %c0_446 = arith.constant 0 : index
    %591 = vector.load %arg29[%c1_445, %c0_446] : memref<4x32xf32, #tpu.memory_space<vmem>>, vector<3x32xf32>
    tpu.vector_store %arg29[%c1_445, %c0_446], %590 {strides = array<i32>} : memref<4x32xf32, #tpu.memory_space<vmem>>, vector<3x32xf32>,
    %c0_447 = arith.constant 0 : index
    %c0_448 = arith.constant 0 : index
    %592 = vector.load %arg29[%c0_447, %c0_448] : memref<4x32xf32, #tpu.memory_space<vmem>>, vector<4x32xf32>
    %cst_449 = arith.constant dense<0.000000e+00> : vector<4xf32>
    %593 = vector.multi_reduction <add>, %592, %cst_449 [1] : vector<4x32xf32> to vector<4xf32>
    %594 = vector.shape_cast %593 : vector<4xf32> to vector<4x1xf32>
    %cst_450 = arith.constant 3.200000e+01 : f32
    %595 = vector.broadcast %cst_450 : f32 to vector<4x1xf32>
    %596 = arith.divf %594, %595 : vector<4x1xf32>
    %597 = vector.broadcast %596 : vector<4x1xf32> to vector<4x32xf32>
    %598 = arith.subf %592, %597 : vector<4x32xf32>
    %599 = arith.mulf %598, %598 : vector<4x32xf32>
    %cst_451 = arith.constant dense<0.000000e+00> : vector<4xf32>
    %600 = vector.multi_reduction <add>, %599, %cst_451 [1] : vector<4x32xf32> to vector<4xf32>
    %601 = vector.shape_cast %600 : vector<4xf32> to vector<4x1xf32>
    %cst_452 = arith.constant 3.200000e+01 : f32
    %602 = vector.broadcast %cst_452 : f32 to vector<4x1xf32>
    %603 = arith.divf %601, %602 : vector<4x1xf32>
    %604 = vector.broadcast %596 : vector<4x1xf32> to vector<4x32xf32>
    %605 = arith.subf %592, %604 : vector<4x32xf32>
    %cst_453 = arith.constant 9.99999974E-6 : f32
    %606 = vector.broadcast %cst_453 : f32 to vector<4x1xf32>
    %607 = arith.addf %603, %606 : vector<4x1xf32>
    %608 = math.rsqrt %607 : vector<4x1xf32>
    %609 = vector.broadcast %608 : vector<4x1xf32> to vector<4x32xf32>
    %610 = arith.mulf %605, %609 : vector<4x32xf32>
    %611 = vector.broadcast %371 : vector<1x32xf32> to vector<4x32xf32>
    %612 = arith.mulf %610, %611 : vector<4x32xf32>
    %cst_454 = arith.constant dense<0.000000e+00> : vector<4x96xf32>
    %613 = tpu.matmul %612, %372, %cst_454 {dimension_numbers = #tpu.dot_dimension_numbers<[1], [0], [0], [1], [0, 0, 1, 1], [], []>} : vector<4x32xf32>, vector<32x96xf32>, vector<4x96xf32> -> vector<4x96xf32>
    %614 = vector.extract_strided_slice %613 {offsets = [0, 0], sizes = [4, 16], strides = [1, 1]} : vector<4x96xf32> to vector<4x16xf32>
    %615 = vector.extract_strided_slice %613 {offsets = [0, 32], sizes = [4, 16], strides = [1, 1]} : vector<4x96xf32> to vector<4x16xf32>
    %616 = vector.extract_strided_slice %613 {offsets = [0, 64], sizes = [4, 16], strides = [1, 1]} : vector<4x96xf32> to vector<4x16xf32>
    %cst_455 = arith.constant dense<0.000000e+00> : vector<4x4xf32>
    %617 = tpu.matmul %614, %615, %cst_455 {dimension_numbers = #tpu.dot_dimension_numbers<[1], [1], [0], [0], [0, 0, 1, 0], [], []>} : vector<4x16xf32>, vector<4x16xf32>, vector<4x4xf32> -> vector<4x4xf32>
    %cst_456 = arith.constant 2.500000e-01 : f32
    %618 = vector.broadcast %cst_456 : f32 to vector<4x4xf32>
    %619 = arith.mulf %617, %618 : vector<4x4xf32>
    %cst_457 = arith.constant dense<0xFF800000> : vector<4xf32>
    %620 = vector.multi_reduction <maximumf>, %619, %cst_457 [1] : vector<4x4xf32> to vector<4xf32>
    %621 = vector.shape_cast %620 : vector<4xf32> to vector<4x1xf32>
    %622 = vector.broadcast %621 : vector<4x1xf32> to vector<4x4xf32>
    %623 = arith.subf %619, %622 : vector<4x4xf32>
    %624 = math.exp %623 : vector<4x4xf32>
    %cst_458 = arith.constant dense<0.000000e+00> : vector<4xf32>
    %625 = vector.multi_reduction <add>, %624, %cst_458 [1] : vector<4x4xf32> to vector<4xf32>
    %626 = vector.shape_cast %625 : vector<4xf32> to vector<4x1xf32>
    %627 = vector.broadcast %626 : vector<4x1xf32> to vector<4x4xf32>
    %628 = arith.divf %624, %627 : vector<4x4xf32>
    %cst_459 = arith.constant dense<0.000000e+00> : vector<4x16xf32>
    %629 = tpu.matmul %628, %616, %cst_459 {dimension_numbers = #tpu.dot_dimension_numbers<[1], [0], [0], [1], [0, 0, 1, 1], [], []>} : vector<4x4xf32>, vector<4x16xf32>, vector<4x16xf32> -> vector<4x16xf32>
    %c0_460 = arith.constant 0 : index
    %c0_461 = arith.constant 0 : index
    %630 = vector.load %arg30[%c0_460, %c0_461] : memref<4x32xf32, #tpu.memory_space<vmem>>, vector<4x16xf32>
    tpu.vector_store %arg30[%c0_460, %c0_461], %629 {strides = array<i32>} : memref<4x32xf32, #tpu.memory_space<vmem>>, vector<4x16xf32>,
    %631 = vector.extract_strided_slice %613 {offsets = [0, 16], sizes = [4, 16], strides = [1, 1]} : vector<4x96xf32> to vector<4x16xf32>
    %632 = vector.extract_strided_slice %613 {offsets = [0, 48], sizes = [4, 16], strides = [1, 1]} : vector<4x96xf32> to vector<4x16xf32>
    %633 = vector.extract_strided_slice %613 {offsets = [0, 80], sizes = [4, 16], strides = [1, 1]} : vector<4x96xf32> to vector<4x16xf32>
    %cst_462 = arith.constant dense<0.000000e+00> : vector<4x4xf32>
    %634 = tpu.matmul %631, %632, %cst_462 {dimension_numbers = #tpu.dot_dimension_numbers<[1], [1], [0], [0], [0, 0, 1, 0], [], []>} : vector<4x16xf32>, vector<4x16xf32>, vector<4x4xf32> -> vector<4x4xf32>
    %cst_463 = arith.constant 2.500000e-01 : f32
    %635 = vector.broadcast %cst_463 : f32 to vector<4x4xf32>
    %636 = arith.mulf %634, %635 : vector<4x4xf32>
    %cst_464 = arith.constant dense<0xFF800000> : vector<4xf32>
    %637 = vector.multi_reduction <maximumf>, %636, %cst_464 [1] : vector<4x4xf32> to vector<4xf32>
    %638 = vector.shape_cast %637 : vector<4xf32> to vector<4x1xf32>
    %639 = vector.broadcast %638 : vector<4x1xf32> to vector<4x4xf32>
    %640 = arith.subf %636, %639 : vector<4x4xf32>
    %641 = math.exp %640 : vector<4x4xf32>
    %cst_465 = arith.constant dense<0.000000e+00> : vector<4xf32>
    %642 = vector.multi_reduction <add>, %641, %cst_465 [1] : vector<4x4xf32> to vector<4xf32>
    %643 = vector.shape_cast %642 : vector<4xf32> to vector<4x1xf32>
    %644 = vector.broadcast %643 : vector<4x1xf32> to vector<4x4xf32>
    %645 = arith.divf %641, %644 : vector<4x4xf32>
    %cst_466 = arith.constant dense<0.000000e+00> : vector<4x16xf32>
    %646 = tpu.matmul %645, %633, %cst_466 {dimension_numbers = #tpu.dot_dimension_numbers<[1], [0], [0], [1], [0, 0, 1, 1], [], []>} : vector<4x4xf32>, vector<4x16xf32>, vector<4x16xf32> -> vector<4x16xf32>
    %c0_467 = arith.constant 0 : index
    %c16_468 = arith.constant 16 : index
    %647 = vector.load %arg30[%c0_467, %c16_468] : memref<4x32xf32, #tpu.memory_space<vmem>>, vector<4x16xf32>
    tpu.vector_store %arg30[%c0_467, %c16_468], %646 {strides = array<i32>} : memref<4x32xf32, #tpu.memory_space<vmem>>, vector<4x16xf32>,
    %c0_469 = arith.constant 0 : index
    %c0_470 = arith.constant 0 : index
    %648 = vector.load %arg30[%c0_469, %c0_470] : memref<4x32xf32, #tpu.memory_space<vmem>>, vector<4x32xf32>
    %cst_471 = arith.constant dense<0.000000e+00> : vector<4x32xf32>
    %649 = tpu.matmul %648, %373, %cst_471 {dimension_numbers = #tpu.dot_dimension_numbers<[1], [0], [0], [1], [0, 0, 1, 1], [], []>} : vector<4x32xf32>, vector<32x32xf32>, vector<4x32xf32> -> vector<4x32xf32>
    %650 = arith.addf %592, %649 : vector<4x32xf32>
    %cst_472 = arith.constant dense<0.000000e+00> : vector<4xf32>
    %651 = vector.multi_reduction <add>, %650, %cst_472 [1] : vector<4x32xf32> to vector<4xf32>
    %652 = vector.shape_cast %651 : vector<4xf32> to vector<4x1xf32>
    %cst_473 = arith.constant 3.200000e+01 : f32
    %653 = vector.broadcast %cst_473 : f32 to vector<4x1xf32>
    %654 = arith.divf %652, %653 : vector<4x1xf32>
    %655 = vector.broadcast %654 : vector<4x1xf32> to vector<4x32xf32>
    %656 = arith.subf %650, %655 : vector<4x32xf32>
    %657 = arith.mulf %656, %656 : vector<4x32xf32>
    %cst_474 = arith.constant dense<0.000000e+00> : vector<4xf32>
    %658 = vector.multi_reduction <add>, %657, %cst_474 [1] : vector<4x32xf32> to vector<4xf32>
    %659 = vector.shape_cast %658 : vector<4xf32> to vector<4x1xf32>
    %cst_475 = arith.constant 3.200000e+01 : f32
    %660 = vector.broadcast %cst_475 : f32 to vector<4x1xf32>
    %661 = arith.divf %659, %660 : vector<4x1xf32>
    %662 = vector.broadcast %654 : vector<4x1xf32> to vector<4x32xf32>
    %663 = arith.subf %650, %662 : vector<4x32xf32>
    %cst_476 = arith.constant 9.99999974E-6 : f32
    %664 = vector.broadcast %cst_476 : f32 to vector<4x1xf32>
    %665 = arith.addf %661, %664 : vector<4x1xf32>
    %666 = math.rsqrt %665 : vector<4x1xf32>
    %667 = vector.broadcast %666 : vector<4x1xf32> to vector<4x32xf32>
    %668 = arith.mulf %663, %667 : vector<4x32xf32>
    %669 = vector.broadcast %374 : vector<1x32xf32> to vector<4x32xf32>
    %670 = arith.mulf %668, %669 : vector<4x32xf32>
    %cst_477 = arith.constant dense<0.000000e+00> : vector<4x64xf32>
    %671 = tpu.matmul %670, %375, %cst_477 {dimension_numbers = #tpu.dot_dimension_numbers<[1], [0], [0], [1], [0, 0, 1, 1], [], []>} : vector<4x32xf32>, vector<32x64xf32>, vector<4x64xf32> -> vector<4x64xf32>
    %cst_478 = arith.constant 0.000000e+00 : f32
    %672 = vector.broadcast %cst_478 : f32 to vector<4x64xf32>
    %673 = arith.maximumf %671, %672 : vector<4x64xf32>
    %cst_479 = arith.constant dense<0.000000e+00> : vector<4x32xf32>
    %674 = tpu.matmul %673, %376, %cst_479 {dimension_numbers = #tpu.dot_dimension_numbers<[1], [0], [0], [1], [0, 0, 1, 1], [], []>} : vector<4x64xf32>, vector<64x32xf32>, vector<4x32xf32> -> vector<4x32xf32>
    %675 = arith.addf %650, %674 : vector<4x32xf32>
    %cst_480 = arith.constant dense<0.000000e+00> : vector<4xf32>
    %676 = vector.multi_reduction <add>, %675, %cst_480 [1] : vector<4x32xf32> to vector<4xf32>
    %677 = vector.shape_cast %676 : vector<4xf32> to vector<4x1xf32>
    %cst_481 = arith.constant 3.200000e+01 : f32
    %678 = vector.broadcast %cst_481 : f32 to vector<4x1xf32>
    %679 = arith.divf %677, %678 : vector<4x1xf32>
    %680 = vector.broadcast %679 : vector<4x1xf32> to vector<4x32xf32>
    %681 = arith.subf %675, %680 : vector<4x32xf32>
    %682 = arith.mulf %681, %681 : vector<4x32xf32>
    %cst_482 = arith.constant dense<0.000000e+00> : vector<4xf32>
    %683 = vector.multi_reduction <add>, %682, %cst_482 [1] : vector<4x32xf32> to vector<4xf32>
    %684 = vector.shape_cast %683 : vector<4xf32> to vector<4x1xf32>
    %cst_483 = arith.constant 3.200000e+01 : f32
    %685 = vector.broadcast %cst_483 : f32 to vector<4x1xf32>
    %686 = arith.divf %684, %685 : vector<4x1xf32>
    %687 = vector.broadcast %679 : vector<4x1xf32> to vector<4x32xf32>
    %688 = arith.subf %675, %687 : vector<4x32xf32>
    %cst_484 = arith.constant 9.99999974E-6 : f32
    %689 = vector.broadcast %cst_484 : f32 to vector<4x1xf32>
    %690 = arith.addf %686, %689 : vector<4x1xf32>
    %691 = math.rsqrt %690 : vector<4x1xf32>
    %692 = vector.broadcast %691 : vector<4x1xf32> to vector<4x32xf32>
    %693 = arith.mulf %688, %692 : vector<4x32xf32>
    %694 = vector.broadcast %377 : vector<1x32xf32> to vector<4x32xf32>
    %695 = arith.mulf %693, %694 : vector<4x32xf32>
    %cst_485 = arith.constant dense<0.000000e+00> : vector<4x96xf32>
    %696 = tpu.matmul %695, %378, %cst_485 {dimension_numbers = #tpu.dot_dimension_numbers<[1], [0], [0], [1], [0, 0, 1, 1], [], []>} : vector<4x32xf32>, vector<32x96xf32>, vector<4x96xf32> -> vector<4x96xf32>
    %697 = vector.extract_strided_slice %696 {offsets = [0, 0], sizes = [4, 16], strides = [1, 1]} : vector<4x96xf32> to vector<4x16xf32>
    %698 = vector.extract_strided_slice %696 {offsets = [0, 32], sizes = [4, 16], strides = [1, 1]} : vector<4x96xf32> to vector<4x16xf32>
    %699 = vector.extract_strided_slice %696 {offsets = [0, 64], sizes = [4, 16], strides = [1, 1]} : vector<4x96xf32> to vector<4x16xf32>
    %cst_486 = arith.constant dense<0.000000e+00> : vector<4x4xf32>
    %700 = tpu.matmul %697, %698, %cst_486 {dimension_numbers = #tpu.dot_dimension_numbers<[1], [1], [0], [0], [0, 0, 1, 0], [], []>} : vector<4x16xf32>, vector<4x16xf32>, vector<4x4xf32> -> vector<4x4xf32>
    %cst_487 = arith.constant 2.500000e-01 : f32
    %701 = vector.broadcast %cst_487 : f32 to vector<4x4xf32>
    %702 = arith.mulf %700, %701 : vector<4x4xf32>
    %cst_488 = arith.constant dense<0xFF800000> : vector<4xf32>
    %703 = vector.multi_reduction <maximumf>, %702, %cst_488 [1] : vector<4x4xf32> to vector<4xf32>
    %704 = vector.shape_cast %703 : vector<4xf32> to vector<4x1xf32>
    %705 = vector.broadcast %704 : vector<4x1xf32> to vector<4x4xf32>
    %706 = arith.subf %702, %705 : vector<4x4xf32>
    %707 = math.exp %706 : vector<4x4xf32>
    %cst_489 = arith.constant dense<0.000000e+00> : vector<4xf32>
    %708 = vector.multi_reduction <add>, %707, %cst_489 [1] : vector<4x4xf32> to vector<4xf32>
    %709 = vector.shape_cast %708 : vector<4xf32> to vector<4x1xf32>
    %710 = vector.broadcast %709 : vector<4x1xf32> to vector<4x4xf32>
    %711 = arith.divf %707, %710 : vector<4x4xf32>
    %cst_490 = arith.constant dense<0.000000e+00> : vector<4x16xf32>
    %712 = tpu.matmul %711, %699, %cst_490 {dimension_numbers = #tpu.dot_dimension_numbers<[1], [0], [0], [1], [0, 0, 1, 1], [], []>} : vector<4x4xf32>, vector<4x16xf32>, vector<4x16xf32> -> vector<4x16xf32>
    %c0_491 = arith.constant 0 : index
    %c0_492 = arith.constant 0 : index
    %713 = vector.load %arg30[%c0_491, %c0_492] : memref<4x32xf32, #tpu.memory_space<vmem>>, vector<4x16xf32>
    tpu.vector_store %arg30[%c0_491, %c0_492], %712 {strides = array<i32>} : memref<4x32xf32, #tpu.memory_space<vmem>>, vector<4x16xf32>,
    %714 = vector.extract_strided_slice %696 {offsets = [0, 16], sizes = [4, 16], strides = [1, 1]} : vector<4x96xf32> to vector<4x16xf32>
    %715 = vector.extract_strided_slice %696 {offsets = [0, 48], sizes = [4, 16], strides = [1, 1]} : vector<4x96xf32> to vector<4x16xf32>
    %716 = vector.extract_strided_slice %696 {offsets = [0, 80], sizes = [4, 16], strides = [1, 1]} : vector<4x96xf32> to vector<4x16xf32>
    %cst_493 = arith.constant dense<0.000000e+00> : vector<4x4xf32>
    %717 = tpu.matmul %714, %715, %cst_493 {dimension_numbers = #tpu.dot_dimension_numbers<[1], [1], [0], [0], [0, 0, 1, 0], [], []>} : vector<4x16xf32>, vector<4x16xf32>, vector<4x4xf32> -> vector<4x4xf32>
    %cst_494 = arith.constant 2.500000e-01 : f32
    %718 = vector.broadcast %cst_494 : f32 to vector<4x4xf32>
    %719 = arith.mulf %717, %718 : vector<4x4xf32>
    %cst_495 = arith.constant dense<0xFF800000> : vector<4xf32>
    %720 = vector.multi_reduction <maximumf>, %719, %cst_495 [1] : vector<4x4xf32> to vector<4xf32>
    %721 = vector.shape_cast %720 : vector<4xf32> to vector<4x1xf32>
    %722 = vector.broadcast %721 : vector<4x1xf32> to vector<4x4xf32>
    %723 = arith.subf %719, %722 : vector<4x4xf32>
    %724 = math.exp %723 : vector<4x4xf32>
    %cst_496 = arith.constant dense<0.000000e+00> : vector<4xf32>
    %725 = vector.multi_reduction <add>, %724, %cst_496 [1] : vector<4x4xf32> to vector<4xf32>
    %726 = vector.shape_cast %725 : vector<4xf32> to vector<4x1xf32>
    %727 = vector.broadcast %726 : vector<4x1xf32> to vector<4x4xf32>
    %728 = arith.divf %724, %727 : vector<4x4xf32>
    %cst_497 = arith.constant dense<0.000000e+00> : vector<4x16xf32>
    %729 = tpu.matmul %728, %716, %cst_497 {dimension_numbers = #tpu.dot_dimension_numbers<[1], [0], [0], [1], [0, 0, 1, 1], [], []>} : vector<4x4xf32>, vector<4x16xf32>, vector<4x16xf32> -> vector<4x16xf32>
    %c0_498 = arith.constant 0 : index
    %c16_499 = arith.constant 16 : index
    %730 = vector.load %arg30[%c0_498, %c16_499] : memref<4x32xf32, #tpu.memory_space<vmem>>, vector<4x16xf32>
    tpu.vector_store %arg30[%c0_498, %c16_499], %729 {strides = array<i32>} : memref<4x32xf32, #tpu.memory_space<vmem>>, vector<4x16xf32>,
    %c0_500 = arith.constant 0 : index
    %c0_501 = arith.constant 0 : index
    %731 = vector.load %arg30[%c0_500, %c0_501] : memref<4x32xf32, #tpu.memory_space<vmem>>, vector<4x32xf32>
    %cst_502 = arith.constant dense<0.000000e+00> : vector<4x32xf32>
    %732 = tpu.matmul %731, %379, %cst_502 {dimension_numbers = #tpu.dot_dimension_numbers<[1], [0], [0], [1], [0, 0, 1, 1], [], []>} : vector<4x32xf32>, vector<32x32xf32>, vector<4x32xf32> -> vector<4x32xf32>
    %733 = arith.addf %675, %732 : vector<4x32xf32>
    %cst_503 = arith.constant dense<0.000000e+00> : vector<4xf32>
    %734 = vector.multi_reduction <add>, %733, %cst_503 [1] : vector<4x32xf32> to vector<4xf32>
    %735 = vector.shape_cast %734 : vector<4xf32> to vector<4x1xf32>
    %cst_504 = arith.constant 3.200000e+01 : f32
    %736 = vector.broadcast %cst_504 : f32 to vector<4x1xf32>
    %737 = arith.divf %735, %736 : vector<4x1xf32>
    %738 = vector.broadcast %737 : vector<4x1xf32> to vector<4x32xf32>
    %739 = arith.subf %733, %738 : vector<4x32xf32>
    %740 = arith.mulf %739, %739 : vector<4x32xf32>
    %cst_505 = arith.constant dense<0.000000e+00> : vector<4xf32>
    %741 = vector.multi_reduction <add>, %740, %cst_505 [1] : vector<4x32xf32> to vector<4xf32>
    %742 = vector.shape_cast %741 : vector<4xf32> to vector<4x1xf32>
    %cst_506 = arith.constant 3.200000e+01 : f32
    %743 = vector.broadcast %cst_506 : f32 to vector<4x1xf32>
    %744 = arith.divf %742, %743 : vector<4x1xf32>
    %745 = vector.broadcast %737 : vector<4x1xf32> to vector<4x32xf32>
    %746 = arith.subf %733, %745 : vector<4x32xf32>
    %cst_507 = arith.constant 9.99999974E-6 : f32
    %747 = vector.broadcast %cst_507 : f32 to vector<4x1xf32>
    %748 = arith.addf %744, %747 : vector<4x1xf32>
    %749 = math.rsqrt %748 : vector<4x1xf32>
    %750 = vector.broadcast %749 : vector<4x1xf32> to vector<4x32xf32>
    %751 = arith.mulf %746, %750 : vector<4x32xf32>
    %752 = vector.broadcast %380 : vector<1x32xf32> to vector<4x32xf32>
    %753 = arith.mulf %751, %752 : vector<4x32xf32>
    %cst_508 = arith.constant dense<0.000000e+00> : vector<4x64xf32>
    %754 = tpu.matmul %753, %381, %cst_508 {dimension_numbers = #tpu.dot_dimension_numbers<[1], [0], [0], [1], [0, 0, 1, 1], [], []>} : vector<4x32xf32>, vector<32x64xf32>, vector<4x64xf32> -> vector<4x64xf32>
    %cst_509 = arith.constant 0.000000e+00 : f32
    %755 = vector.broadcast %cst_509 : f32 to vector<4x64xf32>
    %756 = arith.maximumf %754, %755 : vector<4x64xf32>
    %cst_510 = arith.constant dense<0.000000e+00> : vector<4x32xf32>
    %757 = tpu.matmul %756, %382, %cst_510 {dimension_numbers = #tpu.dot_dimension_numbers<[1], [0], [0], [1], [0, 0, 1, 1], [], []>} : vector<4x64xf32>, vector<64x32xf32>, vector<4x32xf32> -> vector<4x32xf32>
    %758 = arith.addf %733, %757 : vector<4x32xf32>
    %c0_511 = arith.constant 0 : index
    %c0_512 = arith.constant 0 : index
    %759 = vector.load %arg29[%c0_511, %c0_512] : memref<4x32xf32, #tpu.memory_space<vmem>>, vector<4x32xf32>
    tpu.vector_store %arg29[%c0_511, %c0_512], %758 {strides = array<i32>} : memref<4x32xf32, #tpu.memory_space<vmem>>, vector<4x32xf32>,
    %c0_513 = arith.constant 0 : index
    %c0_514 = arith.constant 0 : index
    %760 = vector.load %arg29[%c0_513, %c0_514] : memref<4x32xf32, #tpu.memory_space<vmem>>, vector<1x32xf32>
    %cst_515 = arith.constant dense<0.000000e+00> : vector<1xf32>
    %761 = vector.multi_reduction <add>, %760, %cst_515 [1] : vector<1x32xf32> to vector<1xf32>
    %762 = vector.shape_cast %761 : vector<1xf32> to vector<1x1xf32>
    %cst_516 = arith.constant 3.200000e+01 : f32
    %763 = vector.broadcast %cst_516 : f32 to vector<1x1xf32>
    %764 = arith.divf %762, %763 : vector<1x1xf32>
    %765 = vector.broadcast %764 : vector<1x1xf32> to vector<1x32xf32>
    %766 = arith.subf %760, %765 : vector<1x32xf32>
    %767 = arith.mulf %766, %766 : vector<1x32xf32>
    %cst_517 = arith.constant dense<0.000000e+00> : vector<1xf32>
    %768 = vector.multi_reduction <add>, %767, %cst_517 [1] : vector<1x32xf32> to vector<1xf32>
    %769 = vector.shape_cast %768 : vector<1xf32> to vector<1x1xf32>
    %cst_518 = arith.constant 3.200000e+01 : f32
    %770 = vector.broadcast %cst_518 : f32 to vector<1x1xf32>
    %771 = arith.divf %769, %770 : vector<1x1xf32>
    %772 = vector.broadcast %764 : vector<1x1xf32> to vector<1x32xf32>
    %773 = arith.subf %760, %772 : vector<1x32xf32>
    %cst_519 = arith.constant 9.99999974E-6 : f32
    %774 = vector.broadcast %cst_519 : f32 to vector<1x1xf32>
    %775 = arith.addf %771, %774 : vector<1x1xf32>
    %776 = math.rsqrt %775 : vector<1x1xf32>
    %777 = vector.broadcast %776 : vector<1x1xf32> to vector<1x32xf32>
    %778 = arith.mulf %773, %777 : vector<1x32xf32>
    %779 = arith.mulf %778, %383 : vector<1x32xf32>
    %780 = arith.addf %779, %384 : vector<1x32xf32>
    %cst_520 = arith.constant dense<0.000000e+00> : vector<1x8xf32>
    %781 = tpu.matmul %780, %385, %cst_520 {dimension_numbers = #tpu.dot_dimension_numbers<[1], [0], [0], [1], [0, 0, 1, 1], [], []>} : vector<1x32xf32>, vector<32x8xf32>, vector<1x8xf32> -> vector<1x8xf32>
    %782 = arith.addf %781, %386 : vector<1x8xf32>
    %c1_521 = arith.constant 1 : index
    %c0_522 = arith.constant 0 : index
    %783 = vector.load %arg26[%c1_521, %c0_522] : memref<2x8xf32, #tpu.memory_space<vmem>>, vector<1x8xf32>
    tpu.vector_store %arg26[%c1_521, %c0_522], %782 {strides = array<i32>} : memref<2x8xf32, #tpu.memory_space<vmem>>, vector<1x8xf32>,
    return
  }
}

</mosaic_0001>

<llo_original>
// kernel: tpu_custom_call.1
$region0: #{tpu_custom_call.1}
  #allocation0 [shape = 'u32[]', space=smem, size = 0x4, offset = 0x4, fixed_abs, tag = 'smem constant byte address 0x4 - core index']
  #allocation1 [shape = 'u32[72,128]{1,0:T(1,128)}', space=vmem, size = 0x9000, scoped, tag = 'internal scratch']
  #allocation2 [shape = 'f32[192,32]{1,0:T(8,128)}', space=vmem, size = 0x18000, scoped, tag = 'scratch operand']
  #allocation3 [shape = 'f32[6,32]{1,0:T(8,128)}', space=vmem, size = 0x1000, scoped, tag = 'scratch operand']
  #allocation4 [shape = 'f32[4,32]{1,0:T(4,128)}', space=vmem, size = 0x800, scoped, tag = 'scratch operand']
  #allocation5 [shape = 'f32[4,32]{1,0:T(4,128)}', space=vmem, size = 0x800, scoped, tag = 'scratch operand']
  %s0 = inlined_call_operand.vmem [shape: f32[3,32,8], index: 0, kind: input, shape index: {}]
  %s1 = inlined_call_operand.vmem [shape: f32[3,32,8], index: 1, kind: input, shape index: {}]
  %s2 = inlined_call_operand.vmem [shape: f32[2,3,8,4], index: 2, kind: input, shape index: {}]
  %s3 = inlined_call_operand.vmem [shape: f32[2,3,8,4], index: 3, kind: input, shape index: {}]
  %s4 = inlined_call_operand.vmem [shape: f32[32,32], index: 4, kind: input, shape index: {}]
  %s5 = inlined_call_operand.vmem [shape: f32[32,32], index: 5, kind: input, shape index: {}]
  %s6 = inlined_call_operand.hbm [shape: f32[32,32,32], index: 6, kind: input, shape index: {}]
  %s7 = inlined_call_operand.vmem [shape: f32[1,32], index: 7, kind: input, shape index: {}]
  %s8 = inlined_call_operand.vmem [shape: f32[1,32], index: 8, kind: input, shape index: {}]
  %s9 = inlined_call_operand.vmem [shape: f32[4,32], index: 9, kind: input, shape index: {}]
  %s10 = inlined_call_operand.vmem [shape: f32[1,32], index: 10, kind: input, shape index: {}]
  %s11 = inlined_call_operand.vmem [shape: f32[32,96], index: 11, kind: input, shape index: {}]
  %s12 = inlined_call_operand.vmem [shape: f32[32,32], index: 12, kind: input, shape index: {}]
  %s13 = inlined_call_operand.vmem [shape: f32[1,32], index: 13, kind: input, shape index: {}]
  %s14 = inlined_call_operand.vmem [shape: f32[32,64], index: 14, kind: input, shape index: {}]
  %s15 = inlined_call_operand.vmem [shape: f32[64,32], index: 15, kind: input, shape index: {}]
  %s16 = inlined_call_operand.vmem [shape: f32[1,32], index: 16, kind: input, shape index: {}]
  %s17 = inlined_call_operand.vmem [shape: f32[32,96], index: 17, kind: input, shape index: {}]
  %s18 = inlined_call_operand.vmem [shape: f32[32,32], index: 18, kind: input, shape index: {}]
  %s19 = inlined_call_operand.vmem [shape: f32[1,32], index: 19, kind: input, shape index: {}]
  %s20 = inlined_call_operand.vmem [shape: f32[32,64], index: 20, kind: input, shape index: {}]
  %s21 = inlined_call_operand.vmem [shape: f32[64,32], index: 21, kind: input, shape index: {}]
  %s22 = inlined_call_operand.vmem [shape: f32[1,32], index: 22, kind: input, shape index: {}]
  %s23 = inlined_call_operand.vmem [shape: f32[1,32], index: 23, kind: input, shape index: {}]
  %s24 = inlined_call_operand.vmem [shape: f32[32,8], index: 24, kind: input, shape index: {}]
  %s25 = inlined_call_operand.vmem [shape: f32[1,8], index: 25, kind: input, shape index: {}]
  %s26 = inlined_call_operand.hbm [shape: f32[2,8], index: 26, kind: output, shape index: {}]
  %s27 = sld [smem:[#allocation0]]
  $region118: #{tpu_custom_call.1} parent=0
    _
  %s29 = ssub.s32 1, %s27
  %s30 = scalar_select 0, %s29, %s27
  $region1: #{tpu_custom_call.1} parent=0
    #allocation6 [shape = 'u8[524288]{0}', space=vmem, size = 0x80000, scoped, tag = 'input window, operand 6, single buffered']
    #allocation7 [shape = 's32[1]{0}', space=sflag, size = 0x4, scoped, tag = 'scoped memory for tpu_custom_call.1']
    #allocation8 [shape = 's32[1]{0}', space=sflag, size = 0x4, scoped, tag = 'scoped memory for tpu_custom_call.1']
    #allocation9 [shape = 'u8[1024]{0}', space=vmem, size = 0x400, scoped, tag = 'output window, operand 0, single buffered']
    %31 = vsyncpa [#allocation7], 0
    %32 = vsyncpa [#allocation8], 0
    // Predicated region
    $region2: #{tpu_custom_call.1} parent=1 // pred_check
      _
    $region3: #{tpu_custom_call.1} parent=1 // pred_check_branch
      %34 = sbr.rel (0) target = $region5
    $region4: #{tpu_custom_call.1} parent=1 // pred_region
      _
    $region5: #{tpu_custom_call.1} parent=1 // pred_fallthru
      _
    // Predicated region
    $region6: #{tpu_custom_call.1} parent=1 // pred_check
      _
    $region7: #{tpu_custom_call.1} parent=1 // pred_check_branch
      %36 = sbr.rel (0) target = $region9
    $region8: #{tpu_custom_call.1} parent=1 // pred_region
      _
    $region9: #{tpu_custom_call.1} parent=1 // pred_fallthru
      _
    // Predicated region
    $region10: #{tpu_custom_call.1} parent=1 // pred_check
      _
    $region11: #{tpu_custom_call.1} parent=1 // pred_check_branch
      %38 = sbr.rel (0) target = $region13
    $region12: #{tpu_custom_call.1} parent=1 // pred_region
      _
    $region13: #{tpu_custom_call.1} parent=1 // pred_fallthru
      _
    // Predicated region
    $region14: #{tpu_custom_call.1} parent=1 // pred_check
      _
    $region15: #{tpu_custom_call.1} parent=1 // pred_check_branch
      %40 = sbr.rel (0) target = $region17
    $region16: #{tpu_custom_call.1} parent=1 // pred_region
      _
    $region17: #{tpu_custom_call.1} parent=1 // pred_fallthru
      _
    // Predicated region
    $region18: #{tpu_custom_call.1} parent=1 // pred_check
      _
    $region19: #{tpu_custom_call.1} parent=1 // pred_check_branch
      %42 = sbr.rel (0) target = $region21
    $region20: #{tpu_custom_call.1} parent=1 // pred_region
      _
    $region21: #{tpu_custom_call.1} parent=1 // pred_fallthru
      _
    // Predicated region
    $region22: #{tpu_custom_call.1} parent=1 // pred_check
      _
    $region23: #{tpu_custom_call.1} parent=1 // pred_check_branch
      %44 = sbr.rel (0) target = $region25
    $region24: #{tpu_custom_call.1} parent=1 // pred_region
      _
    $region25: #{tpu_custom_call.1} parent=1 // pred_fallthru
      _
    // Predicated region
    $region26: #{tpu_custom_call.1} parent=1 // pred_check
      _
    $region27: #{tpu_custom_call.1} parent=1 // pred_check_branch
      %46 = sbr.rel (0) target = $region29
    $region28: #{tpu_custom_call.1} parent=1 // pred_region
      %48 = vsyncadd [#allocation7], 0
      %s49 = sshll.u32 %s6, 4
      %s50 = int_to_ptr.hbm [resolvable:$true] %s49
      %s51 = sshll.u32 [#allocation6], 4
      %s52 = int_to_ptr.vmem [resolvable:$true] %s51
      %57 = dma.hbm_to_vmem [thread:$0]  %s50, 16384, %s52, [#allocation7], 128, 128, 8
    $region29: #{tpu_custom_call.1} parent=1 // pred_fallthru
      _
    // Predicated region
    $region30: #{tpu_custom_call.1} parent=1 // pred_check
      _
    $region31: #{tpu_custom_call.1} parent=1 // pred_check_branch
      %59 = sbr.rel (0) target = $region33
    $region32: #{tpu_custom_call.1} parent=1 // pred_region
      _
    $region33: #{tpu_custom_call.1} parent=1 // pred_fallthru
      _
    // Predicated region
    $region34: #{tpu_custom_call.1} parent=1 // pred_check
      _
    $region35: #{tpu_custom_call.1} parent=1 // pred_check_branch
      %61 = sbr.rel (0) target = $region37
    $region36: #{tpu_custom_call.1} parent=1 // pred_region
      _
    $region37: #{tpu_custom_call.1} parent=1 // pred_fallthru
      _
    // Predicated region
    $region38: #{tpu_custom_call.1} parent=1 // pred_check
      _
    $region39: #{tpu_custom_call.1} parent=1 // pred_check_branch
      %63 = sbr.rel (0) target = $region41
    $region40: #{tpu_custom_call.1} parent=1 // pred_region
      _
    $region41: #{tpu_custom_call.1} parent=1 // pred_fallthru
      _
    // Predicated region
    $region42: #{tpu_custom_call.1} parent=1 // pred_check
      _
    $region43: #{tpu_custom_call.1} parent=1 // pred_check_branch
      %65 = sbr.rel (0) target = $region45
    $region44: #{tpu_custom_call.1} parent=1 // pred_region
      _
    $region45: #{tpu_custom_call.1} parent=1 // pred_fallthru
      _
    // Predicated region
    $region46: #{tpu_custom_call.1} parent=1 // pred_check
      _
    $region47: #{tpu_custom_call.1} parent=1 // pred_check_branch
      %67 = sbr.rel (0) target = $region49
    $region48: #{tpu_custom_call.1} parent=1 // pred_region
      _
    $region49: #{tpu_custom_call.1} parent=1 // pred_fallthru
      _
    // Predicated region
    $region50: #{tpu_custom_call.1} parent=1 // pred_check
      _
    $region51: #{tpu_custom_call.1} parent=1 // pred_check_branch
      %69 = sbr.rel (0) target = $region53
    $region52: #{tpu_custom_call.1} parent=1 // pred_region
      _
    $region53: #{tpu_custom_call.1} parent=1 // pred_fallthru
      _
    // Predicated region
    $region54: #{tpu_custom_call.1} parent=1 // pred_check
      _
    $region55: #{tpu_custom_call.1} parent=1 // pred_check_branch
      %71 = sbr.rel (0) target = $region57
    $region56: #{tpu_custom_call.1} parent=1 // pred_region
      _
    $region57: #{tpu_custom_call.1} parent=1 // pred_fallthru
      _
    // Predicated region
    $region58: #{tpu_custom_call.1} parent=1 // pred_check
      _
    $region59: #{tpu_custom_call.1} parent=1 // pred_check_branch
      %73 = sbr.rel (0) target = $region61
    $region60: #{tpu_custom_call.1} parent=1 // pred_region
      _
    $region61: #{tpu_custom_call.1} parent=1 // pred_fallthru
      _
    // Predicated region
    $region62: #{tpu_custom_call.1} parent=1 // pred_check
      _
    $region63: #{tpu_custom_call.1} parent=1 // pred_check_branch
      %75 = sbr.rel (0) target = $region65
    $region64: #{tpu_custom_call.1} parent=1 // pred_region
      _
    $region65: #{tpu_custom_call.1} parent=1 // pred_fallthru
      _
    // Predicated region
    $region66: #{tpu_custom_call.1} parent=1 // pred_check
      _
    $region67: #{tpu_custom_call.1} parent=1 // pred_check_branch
      %77 = sbr.rel (0) target = $region69
    $region68: #{tpu_custom_call.1} parent=1 // pred_region
      _
    $region69: #{tpu_custom_call.1} parent=1 // pred_fallthru
      _
    // Predicated region
    $region70: #{tpu_custom_call.1} parent=1 // pred_check
      _
    $region71: #{tpu_custom_call.1} parent=1 // pred_check_branch
      %79 = sbr.rel (0) target = $region73
    $region72: #{tpu_custom_call.1} parent=1 // pred_region
      _
    $region73: #{tpu_custom_call.1} parent=1 // pred_fallthru
      _
    // Predicated region
    $region74: #{tpu_custom_call.1} parent=1 // pred_check
      _
    $region75: #{tpu_custom_call.1} parent=1 // pred_check_branch
      %81 = sbr.rel (0) target = $region77
    $region76: #{tpu_custom_call.1} parent=1 // pred_region
      _
    $region77: #{tpu_custom_call.1} parent=1 // pred_fallthru
      _
    // Predicated region
    $region78: #{tpu_custom_call.1} parent=1 // pred_check
      _
    $region79: #{tpu_custom_call.1} parent=1 // pred_check_branch
      %83 = sbr.rel (0) target = $region81
    $region80: #{tpu_custom_call.1} parent=1 // pred_region
      _
    $region81: #{tpu_custom_call.1} parent=1 // pred_fallthru
      _
    // Predicated region
    $region82: #{tpu_custom_call.1} parent=1 // pred_check
      _
    $region83: #{tpu_custom_call.1} parent=1 // pred_check_branch
      %85 = sbr.rel (0) target = $region85
    $region84: #{tpu_custom_call.1} parent=1 // pred_region
      _
    $region85: #{tpu_custom_call.1} parent=1 // pred_fallthru
      _
    // Predicated region
    $region86: #{tpu_custom_call.1} parent=1 // pred_check
      _
    $region87: #{tpu_custom_call.1} parent=1 // pred_check_branch
      %87 = sbr.rel (0) target = $region89
    $region88: #{tpu_custom_call.1} parent=1 // pred_region
      _
    $region89: #{tpu_custom_call.1} parent=1 // pred_fallthru
      _
    // Predicated region
    $region90: #{tpu_custom_call.1} parent=1 // pred_check
      _
    $region91: #{tpu_custom_call.1} parent=1 // pred_check_branch
      %89 = sbr.rel (0) target = $region93
    $region92: #{tpu_custom_call.1} parent=1 // pred_region
      _
    $region93: #{tpu_custom_call.1} parent=1 // pred_fallthru
      _
    // Predicated region
    $region94: #{tpu_custom_call.1} parent=1 // pred_check
      _
    $region95: #{tpu_custom_call.1} parent=1 // pred_check_branch
      %91 = sbr.rel (0) target = $region97
    $region96: #{tpu_custom_call.1} parent=1 // pred_region
      _
    $region97: #{tpu_custom_call.1} parent=1 // pred_fallthru
      _
    // Predicated region
    $region98: #{tpu_custom_call.1} parent=1 // pred_check
      _
    $region99: #{tpu_custom_call.1} parent=1 // pred_check_branch
      %93 = sbr.rel (0) target = $region101
    $region100: #{tpu_custom_call.1} parent=1 // pred_region
      _
    $region101: #{tpu_custom_call.1} parent=1 // pred_fallthru
      _
    // Predicated region
    $region102: #{tpu_custom_call.1} parent=1 // pred_check
      _
    $region103: #{tpu_custom_call.1} parent=1 // pred_check_branch
      %95 = sbr.rel (0) target = $region105
    $region104: #{tpu_custom_call.1} parent=1 // pred_region
      _
    $region105: #{tpu_custom_call.1} parent=1 // pred_fallthru
      _
    // Predicated region
    $region106: #{tpu_custom_call.1} parent=1 // pred_check
      _
    $region107: #{tpu_custom_call.1} parent=1 // pred_check_branch
      %97 = sbr.rel (0) target = $region109
    $region108: #{tpu_custom_call.1} parent=1 // pred_region
      %99 = dma.done [#allocation7], 16384
    $region109: #{tpu_custom_call.1} parent=1 // pred_fallthru
      _
    %v100 = vld [vmem:[%s4] sm:$0xff]
    %v101 = vld [vmem:[%s4 + $0x8] sm:$0xff]
    %v102 = vld [vmem:[%s4 + $0x10] sm:$0xff]
    %v103 = vld [vmem:[%s4 + $0x18] sm:$0xff]
    %v104 = vld [vmem:[%s5] sm:$0xff]
    %v105 = vld [vmem:[%s5 + $0x8] sm:$0xff]
    %v106 = vld [vmem:[%s5 + $0x10] sm:$0xff]
    %v107 = vld [vmem:[%s5 + $0x18] sm:$0xff]
    %v108 = vld [vmem:[%s0] sm:$0xff]
    %v109 = vld [vmem:[%s0 + $0x8] sm:$0xff]
    %v110 = vld [vmem:[%s0 + $0x10] sm:$0xff]
    %v111 = vld [vmem:[%s0 + $0x18] sm:$0xff]
    %v112 = vld [vmem:[%s2] sm:$0xff]
    %vm113 = vcmask 64512
    %v115 = vsel %vm113, %v108, 0
    %v118 = vsel %vm113, %v109, 0
    %v121 = vsel %vm113, %v110, 0
    %v124 = vsel %vm113, %v111, 0
    %126 = vmatpush.msra.mxu0 0.0
    %127 = vmatpush.msra.mxu0 0.0
    %128 = vmatpush.msra.mxu0 0.0
    %129 = vmatpush.msra.mxu0 0.0
    %130 = vmatpush.msra.mxu0 0.0
    %131 = vmatpush.msra.mxu0 0.0
    %132 = vmatpush.msra.mxu0 0.0
    %133 = vmatpush.msra.mxu0 0.0
    %134 = vmatpush.msra.mxu0 0.0
    %135 = vmatpush.msra.mxu0 0.0
    %136 = vmatpush.msra.mxu0 0.0
    %137 = vmatpush.msra.mxu0 0.0
    %138 = vmatpush.msra.mxu0 0.0
    %139 = vmatpush.msra.mxu0 0.0
    %140 = vmatpush.msra.mxu0 0.0
    %141 = vmatpush.msra.mxu0 %v112
    %142 = vmatmul.f32.gmra.mxu0 %v115
    %v143 = vpop.f32.mrf.mxu0
    %v144 = vadd.f32 0.0, %v143
    %145 = vmatmul.f32.gmra.mxu0 %v118
    %v146 = vpop.f32.mrf.mxu0
    %v147 = vadd.f32 0.0, %v146
    %148 = vmatmul.f32.gmra.mxu0 %v121
    %v149 = vpop.f32.mrf.mxu0
    %v150 = vadd.f32 0.0, %v149
    %151 = vmatmul.f32.gmra.mxu0 %v124
    %v152 = vpop.f32.mrf.mxu0
    %v153 = vadd.f32 0.0, %v152
    %154 = vdwg.mxu0
    %v155 = vld [vmem:[%s1] sm:$0xff]
    %v156 = vld [vmem:[%s1 + $0x8] sm:$0xff]
    %v157 = vld [vmem:[%s1 + $0x10] sm:$0xff]
    %v158 = vld [vmem:[%s1 + $0x18] sm:$0xff]
    %v159 = vld [vmem:[%s3] sm:$0xff]
    %v161 = vsel %vm113, %v155, 0
    %v164 = vsel %vm113, %v156, 0
    %v167 = vsel %vm113, %v157, 0
    %v170 = vsel %vm113, %v158, 0
    %172 = vmatpush.msra.mxu0 0.0
    %173 = vmatpush.msra.mxu0 0.0
    %174 = vmatpush.msra.mxu0 0.0
    %175 = vmatpush.msra.mxu0 0.0
    %176 = vmatpush.msra.mxu0 0.0
    %177 = vmatpush.msra.mxu0 0.0
    %178 = vmatpush.msra.mxu0 0.0
    %179 = vmatpush.msra.mxu0 0.0
    %180 = vmatpush.msra.mxu0 0.0
    %181 = vmatpush.msra.mxu0 0.0
    %182 = vmatpush.msra.mxu0 0.0
    %183 = vmatpush.msra.mxu0 0.0
    %184 = vmatpush.msra.mxu0 0.0
    %185 = vmatpush.msra.mxu0 0.0
    %186 = vmatpush.msra.mxu0 0.0
    %187 = vmatpush.msra.mxu0 %v159
    %188 = vmatmul.f32.gmra.mxu0 %v161
    %v189 = vpop.f32.mrf.mxu0
    %v190 = vadd.f32 0.0, %v189
    %191 = vmatmul.f32.gmra.mxu0 %v164
    %v192 = vpop.f32.mrf.mxu0
    %v193 = vadd.f32 0.0, %v192
    %194 = vmatmul.f32.gmra.mxu0 %v167
    %v195 = vpop.f32.mrf.mxu0
    %v196 = vadd.f32 0.0, %v195
    %197 = vmatmul.f32.gmra.mxu0 %v170
    %v198 = vpop.f32.mrf.mxu0
    %v199 = vadd.f32 0.0, %v198
    %200 = vdwg.mxu0
    %vm201 = vcmask 31744
    %v203 = vsel %vm201, %v144, 0
    %v206 = vsel %vm201, %v147, 0
    %v209 = vsel %vm201, %v150, 0
    %v212 = vsel %vm201, %v153, 0
    %v215 = vsel %vm201, %v190, 0
    %v218 = vsel %vm201, %v193, 0
    %v221 = vsel %vm201, %v196, 0
    %v224 = vsel %vm201, %v199, 0
    %226 = vmatpush.xpose.msra.mxu0 0.0
    %227 = vmatpush.xpose.msra.mxu0 0.0
    %228 = vmatpush.xpose.msra.mxu0 0.0
    %229 = vmatpush.xpose.msra.mxu0 0.0
    %230 = vmatpush.xpose.msra.mxu0 0.0
    %231 = vmatpush.xpose.msra.mxu0 0.0
    %232 = vmatpush.xpose.msra.mxu0 0.0
    %233 = vmatpush.xpose.msra.mxu0 0.0
    %234 = vmatpush.xpose.msra.mxu0 0.0
    %235 = vmatpush.xpose.msra.mxu0 0.0
    %236 = vmatpush.xpose.msra.mxu0 0.0
    %237 = vmatpush.xpose.msra.mxu0 0.0
    %238 = vmatpush.xpose.msra.mxu0 %v224
    %239 = vmatpush.xpose.msra.mxu0 %v221
    %240 = vmatpush.xpose.msra.mxu0 %v218
    %241 = vmatpush.xpose.msra.mxu0 %v215
    %242 = vmatmul.f32.gmra.mxu0 %v203
    %v243 = vpop.f32.mrf.mxu0
    %v244 = vadd.f32 0.0, %v243
    %245 = vmatmul.f32.gmra.mxu0 %v206
    %v246 = vpop.f32.mrf.mxu0
    %v247 = vadd.f32 0.0, %v246
    %248 = vmatmul.f32.gmra.mxu0 %v209
    %v249 = vpop.f32.mrf.mxu0
    %v250 = vadd.f32 0.0, %v249
    %251 = vmatmul.f32.gmra.mxu0 %v212
    %v252 = vpop.f32.mrf.mxu0
    %v253 = vadd.f32 0.0, %v252
    %254 = vdwg.mxu0
    %vm255 = vcmask 261120
    %v256 = vsel %vm255, %v244, 0.0
    %257 = vadd.xlane.f32.xlu0 %v256
    %v258 = vpop.xlane.xlu0 %257
    %v259 = vsel %vm255, %v247, 0.0
    %260 = vadd.xlane.f32.xlu0 %v259
    %v261 = vpop.xlane.xlu0 %260
    %v262 = vsel %vm255, %v250, 0.0
    %263 = vadd.xlane.f32.xlu0 %v262
    %v264 = vpop.xlane.xlu0 %263
    %v265 = vsel %vm255, %v253, 0.0
    %266 = vadd.xlane.f32.xlu0 %v265
    %v267 = vpop.xlane.xlu0 %266
    %v268 = vadd.f32 %v258, %v261
    %v269 = vadd.f32 %v268, %v264
    %v270 = vadd.f32 %v269, %v267
    %v271 = vrot.slane %v270, 4
    %v272 = vadd.f32 %v270, %v271
    %v273 = vrot.slane %v272, 2
    %v274 = vadd.f32 %v272, %v273
    %v275 = vrot.slane %v274, 1
    %v276 = vadd.f32 %v274, %v275
    %v277 = vrcp.pop 1024.0
    %v278 = vmul.f32 1024.0, %v277
    %v279 = vsub.f32 1.0, %v278
    %v280 = vmul.f32 %v277, %v279
    %v281 = vadd.f32 %v277, %v280
    %vm282 = vweird.f32 %v277
    %v283 = vsel %vm282, %v277, %v281
    %v284 = vmul.f32 %v276, %v283
    %v285 = vsub.f32 %v244, %v284
    %v286 = vsub.f32 %v247, %v284
    %v287 = vsub.f32 %v250, %v284
    %v288 = vsub.f32 %v253, %v284
    %v289 = vmul.f32 %v285, %v285
    %v290 = vmul.f32 %v286, %v286
    %v291 = vmul.f32 %v287, %v287
    %v292 = vmul.f32 %v288, %v288
    %v293 = vsel %vm255, %v289, 0.0
    %294 = vadd.xlane.f32.xlu0 %v293
    %v295 = vpop.xlane.xlu0 %294
    %v296 = vsel %vm255, %v290, 0.0
    %297 = vadd.xlane.f32.xlu0 %v296
    %v298 = vpop.xlane.xlu0 %297
    %v299 = vsel %vm255, %v291, 0.0
    %300 = vadd.xlane.f32.xlu0 %v299
    %v301 = vpop.xlane.xlu0 %300
    %v302 = vsel %vm255, %v292, 0.0
    %303 = vadd.xlane.f32.xlu0 %v302
    %v304 = vpop.xlane.xlu0 %303
    %v305 = vadd.f32 %v295, %v298
    %v306 = vadd.f32 %v305, %v301
    %v307 = vadd.f32 %v306, %v304
    %v308 = vrot.slane %v307, 4
    %v309 = vadd.f32 %v307, %v308
    %v310 = vrot.slane %v309, 2
    %v311 = vadd.f32 %v309, %v310
    %v312 = vrot.slane %v311, 1
    %v313 = vadd.f32 %v311, %v312
    %v314 = vmul.f32 %v313, %v283
    %v315 = vadd.f32 %v314, 1e-05
    %v316 = vrsqrt.pop %v315
    %v317 = vmul.f32 %v316, %v315
    %v318 = vmul.f32 %v317, %v316
    %v319 = vmul.f32 0.5, %v318
    %v320 = vsub.f32 1.5, %v319
    %v321 = vmul.f32 %v316, %v320
    %vm322 = vweird.f32 %v315
    %vm323 = vweird.f32 %v316
    %vm324 = vmor %vm322, %vm323
    %v325 = vsel %vm324, %v316, %v321
    %v326 = vmul.f32 %v285, %v325
    %v327 = vmul.f32 %v286, %v325
    %v328 = vmul.f32 %v287, %v325
    %v329 = vmul.f32 %v288, %v325
    %v330 = vmul.f32 %v326, %v100
    %v331 = vmul.f32 %v327, %v101
    %v332 = vmul.f32 %v328, %v102
    %v333 = vmul.f32 %v329, %v103
    %v334 = vadd.f32 %v330, %v104
    %v335 = vadd.f32 %v331, %v105
    %v336 = vadd.f32 %v332, %v106
    %v337 = vadd.f32 %v333, %v107
    %338 = vst.msk [vmem:[#allocation2] sm:$0xff] %vm255, %v334
    %339 = vst.msk [vmem:[#allocation2 + $0x8] sm:$0xff] %vm255, %v335
    %340 = vst.msk [vmem:[#allocation2 + $0x10] sm:$0xff] %vm255, %v336
    %341 = vst.msk [vmem:[#allocation2 + $0x18] sm:$0xff] %vm255, %v337
    %s342 = scalar_lea.vmem %s0, 32
    %v343 = vld [vmem:[%s342] sm:$0xff]
    %v344 = vld [vmem:[%s342 + $0x8] sm:$0xff]
    %v345 = vld [vmem:[%s342 + $0x10] sm:$0xff]
    %v346 = vld [vmem:[%s342 + $0x18] sm:$0xff]
    %s347 = scalar_lea.vmem %s2, 8
    %v348 = vld [vmem:[%s347] sm:$0xff]
    %v350 = vsel %vm113, %v343, 0
    %v353 = vsel %vm113, %v344, 0
    %v356 = vsel %vm113, %v345, 0
    %v359 = vsel %vm113, %v346, 0
    %361 = vmatpush.msra.mxu0 0.0
    %362 = vmatpush.msra.mxu0 0.0
    %363 = vmatpush.msra.mxu0 0.0
    %364 = vmatpush.msra.mxu0 0.0
    %365 = vmatpush.msra.mxu0 0.0
    %366 = vmatpush.msra.mxu0 0.0
    %367 = vmatpush.msra.mxu0 0.0
    %368 = vmatpush.msra.mxu0 0.0
    %369 = vmatpush.msra.mxu0 0.0
    %370 = vmatpush.msra.mxu0 0.0
    %371 = vmatpush.msra.mxu0 0.0
    %372 = vmatpush.msra.mxu0 0.0
    %373 = vmatpush.msra.mxu0 0.0
    %374 = vmatpush.msra.mxu0 0.0
    %375 = vmatpush.msra.mxu0 0.0
    %376 = vmatpush.msra.mxu0 %v348
    %377 = vmatmul.f32.gmra.mxu0 %v350
    %v378 = vpop.f32.mrf.mxu0
    %v379 = vadd.f32 0.0, %v378
    %380 = vmatmul.f32.gmra.mxu0 %v353
    %v381 = vpop.f32.mrf.mxu0
    %v382 = vadd.f32 0.0, %v381
    %383 = vmatmul.f32.gmra.mxu0 %v356
    %v384 = vpop.f32.mrf.mxu0
    %v385 = vadd.f32 0.0, %v384
    %386 = vmatmul.f32.gmra.mxu0 %v359
    %v387 = vpop.f32.mrf.mxu0
    %v388 = vadd.f32 0.0, %v387
    %389 = vdwg.mxu0
    %s390 = scalar_lea.vmem %s1, 32
    %v391 = vld [vmem:[%s390] sm:$0xff]
    %v392 = vld [vmem:[%s390 + $0x8] sm:$0xff]
    %v393 = vld [vmem:[%s390 + $0x10] sm:$0xff]
    %v394 = vld [vmem:[%s390 + $0x18] sm:$0xff]
    %s395 = scalar_lea.vmem %s3, 8
    %v396 = vld [vmem:[%s395] sm:$0xff]
    %v398 = vsel %vm113, %v391, 0
    %v401 = vsel %vm113, %v392, 0
    %v404 = vsel %vm113, %v393, 0
    %v407 = vsel %vm113, %v394, 0
    %409 = vmatpush.msra.mxu0 0.0
    %410 = vmatpush.msra.mxu0 0.0
    %411 = vmatpush.msra.mxu0 0.0
    %412 = vmatpush.msra.mxu0 0.0
    %413 = vmatpush.msra.mxu0 0.0
    %414 = vmatpush.msra.mxu0 0.0
    %415 = vmatpush.msra.mxu0 0.0
    %416 = vmatpush.msra.mxu0 0.0
    %417 = vmatpush.msra.mxu0 0.0
    %418 = vmatpush.msra.mxu0 0.0
    %419 = vmatpush.msra.mxu0 0.0
    %420 = vmatpush.msra.mxu0 0.0
    %421 = vmatpush.msra.mxu0 0.0
    %422 = vmatpush.msra.mxu0 0.0
    %423 = vmatpush.msra.mxu0 0.0
    %424 = vmatpush.msra.mxu0 %v396
    %425 = vmatmul.f32.gmra.mxu0 %v398
    %v426 = vpop.f32.mrf.mxu0
    %v427 = vadd.f32 0.0, %v426
    %428 = vmatmul.f32.gmra.mxu0 %v401
    %v429 = vpop.f32.mrf.mxu0
    %v430 = vadd.f32 0.0, %v429
    %431 = vmatmul.f32.gmra.mxu0 %v404
    %v432 = vpop.f32.mrf.mxu0
    %v433 = vadd.f32 0.0, %v432
    %434 = vmatmul.f32.gmra.mxu0 %v407
    %v435 = vpop.f32.mrf.mxu0
    %v436 = vadd.f32 0.0, %v435
    %437 = vdwg.mxu0
    %v439 = vsel %vm201, %v379, 0
    %v442 = vsel %vm201, %v382, 0
    %v445 = vsel %vm201, %v385, 0
    %v448 = vsel %vm201, %v388, 0
    %v451 = vsel %vm201, %v427, 0
    %v454 = vsel %vm201, %v430, 0
    %v457 = vsel %vm201, %v433, 0
    %v460 = vsel %vm201, %v436, 0
    %462 = vmatpush.xpose.msra.mxu0 0.0
    %463 = vmatpush.xpose.msra.mxu0 0.0
    %464 = vmatpush.xpose.msra.mxu0 0.0
    %465 = vmatpush.xpose.msra.mxu0 0.0
    %466 = vmatpush.xpose.msra.mxu0 0.0
    %467 = vmatpush.xpose.msra.mxu0 0.0
    %468 = vmatpush.xpose.msra.mxu0 0.0
    %469 = vmatpush.xpose.msra.mxu0 0.0
    %470 = vmatpush.xpose.msra.mxu0 0.0
    %471 = vmatpush.xpose.msra.mxu0 0.0
    %472 = vmatpush.xpose.msra.mxu0 0.0
    %473 = vmatpush.xpose.msra.mxu0 0.0
    %474 = vmatpush.xpose.msra.mxu0 %v460
    %475 = vmatpush.xpose.msra.mxu0 %v457
    %476 = vmatpush.xpose.msra.mxu0 %v454
    %477 = vmatpush.xpose.msra.mxu0 %v451
    %478 = vmatmul.f32.gmra.mxu0 %v439
    %v479 = vpop.f32.mrf.mxu0
    %v480 = vadd.f32 0.0, %v479
    %481 = vmatmul.f32.gmra.mxu0 %v442
    %v482 = vpop.f32.mrf.mxu0
    %v483 = vadd.f32 0.0, %v482
    %484 = vmatmul.f32.gmra.mxu0 %v445
    %v485 = vpop.f32.mrf.mxu0
    %v486 = vadd.f32 0.0, %v485
    %487 = vmatmul.f32.gmra.mxu0 %v448
    %v488 = vpop.f32.mrf.mxu0
    %v489 = vadd.f32 0.0, %v488
    %490 = vdwg.mxu0
    %v491 = vsel %vm255, %v480, 0.0
    %492 = vadd.xlane.f32.xlu0 %v491
    %v493 = vpop.xlane.xlu0 %492
    %v494 = vsel %vm255, %v483, 0.0
    %495 = vadd.xlane.f32.xlu0 %v494
    %v496 = vpop.xlane.xlu0 %495
    %v497 = vsel %vm255, %v486, 0.0
    %498 = vadd.xlane.f32.xlu0 %v497
    %v499 = vpop.xlane.xlu0 %498
    %v500 = vsel %vm255, %v489, 0.0
    %501 = vadd.xlane.f32.xlu0 %v500
    %v502 = vpop.xlane.xlu0 %501
    %v503 = vadd.f32 %v493, %v496
    %v504 = vadd.f32 %v503, %v499
    %v505 = vadd.f32 %v504, %v502
    %v506 = vrot.slane %v505, 4
    %v507 = vadd.f32 %v505, %v506
    %v508 = vrot.slane %v507, 2
    %v509 = vadd.f32 %v507, %v508
    %v510 = vrot.slane %v509, 1
    %v511 = vadd.f32 %v509, %v510
    %v512 = vmul.f32 %v511, %v283
    %v513 = vsub.f32 %v480, %v512
    %v514 = vsub.f32 %v483, %v512
    %v515 = vsub.f32 %v486, %v512
    %v516 = vsub.f32 %v489, %v512
    %v517 = vmul.f32 %v513, %v513
    %v518 = vmul.f32 %v514, %v514
    %v519 = vmul.f32 %v515, %v515
    %v520 = vmul.f32 %v516, %v516
    %v521 = vsel %vm255, %v517, 0.0
    %522 = vadd.xlane.f32.xlu0 %v521
    %v523 = vpop.xlane.xlu0 %522
    %v524 = vsel %vm255, %v518, 0.0
    %525 = vadd.xlane.f32.xlu0 %v524
    %v526 = vpop.xlane.xlu0 %525
    %v527 = vsel %vm255, %v519, 0.0
    %528 = vadd.xlane.f32.xlu0 %v527
    %v529 = vpop.xlane.xlu0 %528
    %v530 = vsel %vm255, %v520, 0.0
    %531 = vadd.xlane.f32.xlu0 %v530
    %v532 = vpop.xlane.xlu0 %531
    %v533 = vadd.f32 %v523, %v526
    %v534 = vadd.f32 %v533, %v529
    %v535 = vadd.f32 %v534, %v532
    %v536 = vrot.slane %v535, 4
    %v537 = vadd.f32 %v535, %v536
    %v538 = vrot.slane %v537, 2
    %v539 = vadd.f32 %v537, %v538
    %v540 = vrot.slane %v539, 1
    %v541 = vadd.f32 %v539, %v540
    %v542 = vmul.f32 %v541, %v283
    %v543 = vadd.f32 %v542, 1e-05
    %v544 = vrsqrt.pop %v543
    %v545 = vmul.f32 %v544, %v543
    %v546 = vmul.f32 %v545, %v544
    %v547 = vmul.f32 0.5, %v546
    %v548 = vsub.f32 1.5, %v547
    %v549 = vmul.f32 %v544, %v548
    %vm550 = vweird.f32 %v543
    %vm551 = vweird.f32 %v544
    %vm552 = vmor %vm550, %vm551
    %v553 = vsel %vm552, %v544, %v549
    %v554 = vmul.f32 %v513, %v553
    %v555 = vmul.f32 %v514, %v553
    %v556 = vmul.f32 %v515, %v553
    %v557 = vmul.f32 %v516, %v553
    %v558 = vmul.f32 %v554, %v100
    %v559 = vmul.f32 %v555, %v101
    %v560 = vmul.f32 %v556, %v102
    %v561 = vmul.f32 %v557, %v103
    %v562 = vadd.f32 %v558, %v104
    %v563 = vadd.f32 %v559, %v105
    %v564 = vadd.f32 %v560, %v106
    %v565 = vadd.f32 %v561, %v107
    %566 = vst.msk [vmem:[#allocation2 + $0x20] sm:$0xff] %vm255, %v562
    %567 = vst.msk [vmem:[#allocation2 + $0x28] sm:$0xff] %vm255, %v563
    %568 = vst.msk [vmem:[#allocation2 + $0x30] sm:$0xff] %vm255, %v564
    %569 = vst.msk [vmem:[#allocation2 + $0x38] sm:$0xff] %vm255, %v565
    %s570 = scalar_lea.vmem %s0, 64
    %v571 = vld [vmem:[%s570] sm:$0xff]
    %v572 = vld [vmem:[%s570 + $0x8] sm:$0xff]
    %v573 = vld [vmem:[%s570 + $0x10] sm:$0xff]
    %v574 = vld [vmem:[%s570 + $0x18] sm:$0xff]
    %s575 = scalar_lea.vmem %s2, 16
    %v576 = vld [vmem:[%s575] sm:$0xff]
    %v578 = vsel %vm113, %v571, 0
    %v581 = vsel %vm113, %v572, 0
    %v584 = vsel %vm113, %v573, 0
    %v587 = vsel %vm113, %v574, 0
    %589 = vmatpush.msra.mxu0 0.0
    %590 = vmatpush.msra.mxu0 0.0
    %591 = vmatpush.msra.mxu0 0.0
    %592 = vmatpush.msra.mxu0 0.0
    %593 = vmatpush.msra.mxu0 0.0
    %594 = vmatpush.msra.mxu0 0.0
    %595 = vmatpush.msra.mxu0 0.0
    %596 = vmatpush.msra.mxu0 0.0
    %597 = vmatpush.msra.mxu0 0.0
    %598 = vmatpush.msra.mxu0 0.0
    %599 = vmatpush.msra.mxu0 0.0
    %600 = vmatpush.msra.mxu0 0.0
    %601 = vmatpush.msra.mxu0 0.0
    %602 = vmatpush.msra.mxu0 0.0
    %603 = vmatpush.msra.mxu0 0.0
    %604 = vmatpush.msra.mxu0 %v576
    %605 = vmatmul.f32.gmra.mxu0 %v578
    %v606 = vpop.f32.mrf.mxu0
    %v607 = vadd.f32 0.0, %v606
    %608 = vmatmul.f32.gmra.mxu0 %v581
    %v609 = vpop.f32.mrf.mxu0
    %v610 = vadd.f32 0.0, %v609
    %611 = vmatmul.f32.gmra.mxu0 %v584
    %v612 = vpop.f32.mrf.mxu0
    %v613 = vadd.f32 0.0, %v612
    %614 = vmatmul.f32.gmra.mxu0 %v587
    %v615 = vpop.f32.mrf.mxu0
    %v616 = vadd.f32 0.0, %v615
    %617 = vdwg.mxu0
    %s618 = scalar_lea.vmem %s1, 64
    %v619 = vld [vmem:[%s618] sm:$0xff]
    %v620 = vld [vmem:[%s618 + $0x8] sm:$0xff]
    %v621 = vld [vmem:[%s618 + $0x10] sm:$0xff]
    %v622 = vld [vmem:[%s618 + $0x18] sm:$0xff]
    %s623 = scalar_lea.vmem %s3, 16
    %v624 = vld [vmem:[%s623] sm:$0xff]
    %v626 = vsel %vm113, %v619, 0
    %v629 = vsel %vm113, %v620, 0
    %v632 = vsel %vm113, %v621, 0
    %v635 = vsel %vm113, %v622, 0
    %637 = vmatpush.msra.mxu0 0.0
    %638 = vmatpush.msra.mxu0 0.0
    %639 = vmatpush.msra.mxu0 0.0
    %640 = vmatpush.msra.mxu0 0.0
    %641 = vmatpush.msra.mxu0 0.0
    %642 = vmatpush.msra.mxu0 0.0
    %643 = vmatpush.msra.mxu0 0.0
    %644 = vmatpush.msra.mxu0 0.0
    %645 = vmatpush.msra.mxu0 0.0
    %646 = vmatpush.msra.mxu0 0.0
    %647 = vmatpush.msra.mxu0 0.0
    %648 = vmatpush.msra.mxu0 0.0
    %649 = vmatpush.msra.mxu0 0.0
    %650 = vmatpush.msra.mxu0 0.0
    %651 = vmatpush.msra.mxu0 0.0
    %652 = vmatpush.msra.mxu0 %v624
    %653 = vmatmul.f32.gmra.mxu0 %v626
    %v654 = vpop.f32.mrf.mxu0
    %v655 = vadd.f32 0.0, %v654
    %656 = vmatmul.f32.gmra.mxu0 %v629
    %v657 = vpop.f32.mrf.mxu0
    %v658 = vadd.f32 0.0, %v657
    %659 = vmatmul.f32.gmra.mxu0 %v632
    %v660 = vpop.f32.mrf.mxu0
    %v661 = vadd.f32 0.0, %v660
    %662 = vmatmul.f32.gmra.mxu0 %v635
    %v663 = vpop.f32.mrf.mxu0
    %v664 = vadd.f32 0.0, %v663
    %665 = vdwg.mxu0
    %v667 = vsel %vm201, %v607, 0
    %v670 = vsel %vm201, %v610, 0
    %v673 = vsel %vm201, %v613, 0
    %v676 = vsel %vm201, %v616, 0
    %v679 = vsel %vm201, %v655, 0
    %v682 = vsel %vm201, %v658, 0
    %v685 = vsel %vm201, %v661, 0
    %v688 = vsel %vm201, %v664, 0
    %690 = vmatpush.xpose.msra.mxu0 0.0
    %691 = vmatpush.xpose.msra.mxu0 0.0
    %692 = vmatpush.xpose.msra.mxu0 0.0
    %693 = vmatpush.xpose.msra.mxu0 0.0
    %694 = vmatpush.xpose.msra.mxu0 0.0
    %695 = vmatpush.xpose.msra.mxu0 0.0
    %696 = vmatpush.xpose.msra.mxu0 0.0
    %697 = vmatpush.xpose.msra.mxu0 0.0
    %698 = vmatpush.xpose.msra.mxu0 0.0
    %699 = vmatpush.xpose.msra.mxu0 0.0
    %700 = vmatpush.xpose.msra.mxu0 0.0
    %701 = vmatpush.xpose.msra.mxu0 0.0
    %702 = vmatpush.xpose.msra.mxu0 %v688
    %703 = vmatpush.xpose.msra.mxu0 %v685
    %704 = vmatpush.xpose.msra.mxu0 %v682
    %705 = vmatpush.xpose.msra.mxu0 %v679
    %706 = vmatmul.f32.gmra.mxu0 %v667
    %v707 = vpop.f32.mrf.mxu0
    %v708 = vadd.f32 0.0, %v707
    %709 = vmatmul.f32.gmra.mxu0 %v670
    %v710 = vpop.f32.mrf.mxu0
    %v711 = vadd.f32 0.0, %v710
    %712 = vmatmul.f32.gmra.mxu0 %v673
    %v713 = vpop.f32.mrf.mxu0
    %v714 = vadd.f32 0.0, %v713
    %715 = vmatmul.f32.gmra.mxu0 %v676
    %v716 = vpop.f32.mrf.mxu0
    %v717 = vadd.f32 0.0, %v716
    %718 = vdwg.mxu0
    %v719 = vsel %vm255, %v708, 0.0
    %720 = vadd.xlane.f32.xlu0 %v719
    %v721 = vpop.xlane.xlu0 %720
    %v722 = vsel %vm255, %v711, 0.0
    %723 = vadd.xlane.f32.xlu0 %v722
    %v724 = vpop.xlane.xlu0 %723
    %v725 = vsel %vm255, %v714, 0.0
    %726 = vadd.xlane.f32.xlu0 %v725
    %v727 = vpop.xlane.xlu0 %726
    %v728 = vsel %vm255, %v717, 0.0
    %729 = vadd.xlane.f32.xlu0 %v728
    %v730 = vpop.xlane.xlu0 %729
    %v731 = vadd.f32 %v721, %v724
    %v732 = vadd.f32 %v731, %v727
    %v733 = vadd.f32 %v732, %v730
    %v734 = vrot.slane %v733, 4
    %v735 = vadd.f32 %v733, %v734
    %v736 = vrot.slane %v735, 2
    %v737 = vadd.f32 %v735, %v736
    %v738 = vrot.slane %v737, 1
    %v739 = vadd.f32 %v737, %v738
    %v740 = vmul.f32 %v739, %v283
    %v741 = vsub.f32 %v708, %v740
    %v742 = vsub.f32 %v711, %v740
    %v743 = vsub.f32 %v714, %v740
    %v744 = vsub.f32 %v717, %v740
    %v745 = vmul.f32 %v741, %v741
    %v746 = vmul.f32 %v742, %v742
    %v747 = vmul.f32 %v743, %v743
    %v748 = vmul.f32 %v744, %v744
    %v749 = vsel %vm255, %v745, 0.0
    %750 = vadd.xlane.f32.xlu0 %v749
    %v751 = vpop.xlane.xlu0 %750
    %v752 = vsel %vm255, %v746, 0.0
    %753 = vadd.xlane.f32.xlu0 %v752
    %v754 = vpop.xlane.xlu0 %753
    %v755 = vsel %vm255, %v747, 0.0
    %756 = vadd.xlane.f32.xlu0 %v755
    %v757 = vpop.xlane.xlu0 %756
    %v758 = vsel %vm255, %v748, 0.0
    %759 = vadd.xlane.f32.xlu0 %v758
    %v760 = vpop.xlane.xlu0 %759
    %v761 = vadd.f32 %v751, %v754
    %v762 = vadd.f32 %v761, %v757
    %v763 = vadd.f32 %v762, %v760
    %v764 = vrot.slane %v763, 4
    %v765 = vadd.f32 %v763, %v764
    %v766 = vrot.slane %v765, 2
    %v767 = vadd.f32 %v765, %v766
    %v768 = vrot.slane %v767, 1
    %v769 = vadd.f32 %v767, %v768
    %v770 = vmul.f32 %v769, %v283
    %v771 = vadd.f32 %v770, 1e-05
    %v772 = vrsqrt.pop %v771
    %v773 = vmul.f32 %v772, %v771
    %v774 = vmul.f32 %v773, %v772
    %v775 = vmul.f32 0.5, %v774
    %v776 = vsub.f32 1.5, %v775
    %v777 = vmul.f32 %v772, %v776
    %vm778 = vweird.f32 %v771
    %vm779 = vweird.f32 %v772
    %vm780 = vmor %vm778, %vm779
    %v781 = vsel %vm780, %v772, %v777
    %v782 = vmul.f32 %v741, %v781
    %v783 = vmul.f32 %v742, %v781
    %v784 = vmul.f32 %v743, %v781
    %v785 = vmul.f32 %v744, %v781
    %v786 = vmul.f32 %v782, %v100
    %v787 = vmul.f32 %v783, %v101
    %v788 = vmul.f32 %v784, %v102
    %v789 = vmul.f32 %v785, %v103
    %v790 = vadd.f32 %v786, %v104
    %v791 = vadd.f32 %v787, %v105
    %v792 = vadd.f32 %v788, %v106
    %v793 = vadd.f32 %v789, %v107
    %794 = vst.msk [vmem:[#allocation2 + $0x40] sm:$0xff] %vm255, %v790
    %795 = vst.msk [vmem:[#allocation2 + $0x48] sm:$0xff] %vm255, %v791
    %796 = vst.msk [vmem:[#allocation2 + $0x50] sm:$0xff] %vm255, %v792
    %797 = vst.msk [vmem:[#allocation2 + $0x58] sm:$0xff] %vm255, %v793
    %v798 = vld [vmem:[%s0] sm:$0xff]
    %v799 = vld [vmem:[%s0 + $0x8] sm:$0xff]
    %v800 = vld [vmem:[%s0 + $0x10] sm:$0xff]
    %v801 = vld [vmem:[%s0 + $0x18] sm:$0xff]
    %s802 = scalar_lea.vmem %s2, 24
    %v803 = vld [vmem:[%s802] sm:$0xff]
    %v805 = vsel %vm113, %v798, 0
    %v808 = vsel %vm113, %v799, 0
    %v811 = vsel %vm113, %v800, 0
    %v814 = vsel %vm113, %v801, 0
    %816 = vmatpush.msra.mxu0 0.0
    %817 = vmatpush.msra.mxu0 0.0
    %818 = vmatpush.msra.mxu0 0.0
    %819 = vmatpush.msra.mxu0 0.0
    %820 = vmatpush.msra.mxu0 0.0
    %821 = vmatpush.msra.mxu0 0.0
    %822 = vmatpush.msra.mxu0 0.0
    %823 = vmatpush.msra.mxu0 0.0
    %824 = vmatpush.msra.mxu0 0.0
    %825 = vmatpush.msra.mxu0 0.0
    %826 = vmatpush.msra.mxu0 0.0
    %827 = vmatpush.msra.mxu0 0.0
    %828 = vmatpush.msra.mxu0 0.0
    %829 = vmatpush.msra.mxu0 0.0
    %830 = vmatpush.msra.mxu0 0.0
    %831 = vmatpush.msra.mxu0 %v803
    %832 = vmatmul.f32.gmra.mxu0 %v805
    %v833 = vpop.f32.mrf.mxu0
    %v834 = vadd.f32 0.0, %v833
    %835 = vmatmul.f32.gmra.mxu0 %v808
    %v836 = vpop.f32.mrf.mxu0
    %v837 = vadd.f32 0.0, %v836
    %838 = vmatmul.f32.gmra.mxu0 %v811
    %v839 = vpop.f32.mrf.mxu0
    %v840 = vadd.f32 0.0, %v839
    %841 = vmatmul.f32.gmra.mxu0 %v814
    %v842 = vpop.f32.mrf.mxu0
    %v843 = vadd.f32 0.0, %v842
    %844 = vdwg.mxu0
    %v845 = vld [vmem:[%s1] sm:$0xff]
    %v846 = vld [vmem:[%s1 + $0x8] sm:$0xff]
    %v847 = vld [vmem:[%s1 + $0x10] sm:$0xff]
    %v848 = vld [vmem:[%s1 + $0x18] sm:$0xff]
    %s849 = scalar_lea.vmem %s3, 24
    %v850 = vld [vmem:[%s849] sm:$0xff]
    %v852 = vsel %vm113, %v845, 0
    %v855 = vsel %vm113, %v846, 0
    %v858 = vsel %vm113, %v847, 0
    %v861 = vsel %vm113, %v848, 0
    %863 = vmatpush.msra.mxu0 0.0
    %864 = vmatpush.msra.mxu0 0.0
    %865 = vmatpush.msra.mxu0 0.0
    %866 = vmatpush.msra.mxu0 0.0
    %867 = vmatpush.msra.mxu0 0.0
    %868 = vmatpush.msra.mxu0 0.0
    %869 = vmatpush.msra.mxu0 0.0
    %870 = vmatpush.msra.mxu0 0.0
    %871 = vmatpush.msra.mxu0 0.0
    %872 = vmatpush.msra.mxu0 0.0
    %873 = vmatpush.msra.mxu0 0.0
    %874 = vmatpush.msra.mxu0 0.0
    %875 = vmatpush.msra.mxu0 0.0
    %876 = vmatpush.msra.mxu0 0.0
    %877 = vmatpush.msra.mxu0 0.0
    %878 = vmatpush.msra.mxu0 %v850
    %879 = vmatmul.f32.gmra.mxu0 %v852
    %v880 = vpop.f32.mrf.mxu0
    %v881 = vadd.f32 0.0, %v880
    %882 = vmatmul.f32.gmra.mxu0 %v855
    %v883 = vpop.f32.mrf.mxu0
    %v884 = vadd.f32 0.0, %v883
    %885 = vmatmul.f32.gmra.mxu0 %v858
    %v886 = vpop.f32.mrf.mxu0
    %v887 = vadd.f32 0.0, %v886
    %888 = vmatmul.f32.gmra.mxu0 %v861
    %v889 = vpop.f32.mrf.mxu0
    %v890 = vadd.f32 0.0, %v889
    %891 = vdwg.mxu0
    %v893 = vsel %vm201, %v834, 0
    %v896 = vsel %vm201, %v837, 0
    %v899 = vsel %vm201, %v840, 0
    %v902 = vsel %vm201, %v843, 0
    %v905 = vsel %vm201, %v881, 0
    %v908 = vsel %vm201, %v884, 0
    %v911 = vsel %vm201, %v887, 0
    %v914 = vsel %vm201, %v890, 0
    %916 = vmatpush.xpose.msra.mxu0 0.0
    %917 = vmatpush.xpose.msra.mxu0 0.0
    %918 = vmatpush.xpose.msra.mxu0 0.0
    %919 = vmatpush.xpose.msra.mxu0 0.0
    %920 = vmatpush.xpose.msra.mxu0 0.0
    %921 = vmatpush.xpose.msra.mxu0 0.0
    %922 = vmatpush.xpose.msra.mxu0 0.0
    %923 = vmatpush.xpose.msra.mxu0 0.0
    %924 = vmatpush.xpose.msra.mxu0 0.0
    %925 = vmatpush.xpose.msra.mxu0 0.0
    %926 = vmatpush.xpose.msra.mxu0 0.0
    %927 = vmatpush.xpose.msra.mxu0 0.0
    %928 = vmatpush.xpose.msra.mxu0 %v914
    %929 = vmatpush.xpose.msra.mxu0 %v911
    %930 = vmatpush.xpose.msra.mxu0 %v908
    %931 = vmatpush.xpose.msra.mxu0 %v905
    %932 = vmatmul.f32.gmra.mxu0 %v893
    %v933 = vpop.f32.mrf.mxu0
    %v934 = vadd.f32 0.0, %v933
    %935 = vmatmul.f32.gmra.mxu0 %v896
    %v936 = vpop.f32.mrf.mxu0
    %v937 = vadd.f32 0.0, %v936
    %938 = vmatmul.f32.gmra.mxu0 %v899
    %v939 = vpop.f32.mrf.mxu0
    %v940 = vadd.f32 0.0, %v939
    %941 = vmatmul.f32.gmra.mxu0 %v902
    %v942 = vpop.f32.mrf.mxu0
    %v943 = vadd.f32 0.0, %v942
    %944 = vdwg.mxu0
    %v945 = vsel %vm255, %v934, 0.0
    %946 = vadd.xlane.f32.xlu0 %v945
    %v947 = vpop.xlane.xlu0 %946
    %v948 = vsel %vm255, %v937, 0.0
    %949 = vadd.xlane.f32.xlu0 %v948
    %v950 = vpop.xlane.xlu0 %949
    %v951 = vsel %vm255, %v940, 0.0
    %952 = vadd.xlane.f32.xlu0 %v951
    %v953 = vpop.xlane.xlu0 %952
    %v954 = vsel %vm255, %v943, 0.0
    %955 = vadd.xlane.f32.xlu0 %v954
    %v956 = vpop.xlane.xlu0 %955
    %v957 = vadd.f32 %v947, %v950
    %v958 = vadd.f32 %v957, %v953
    %v959 = vadd.f32 %v958, %v956
    %v960 = vrot.slane %v959, 4
    %v961 = vadd.f32 %v959, %v960
    %v962 = vrot.slane %v961, 2
    %v963 = vadd.f32 %v961, %v962
    %v964 = vrot.slane %v963, 1
    %v965 = vadd.f32 %v963, %v964
    %v966 = vmul.f32 %v965, %v283
    %v967 = vsub.f32 %v934, %v966
    %v968 = vsub.f32 %v937, %v966
    %v969 = vsub.f32 %v940, %v966
    %v970 = vsub.f32 %v943, %v966
    %v971 = vmul.f32 %v967, %v967
    %v972 = vmul.f32 %v968, %v968
    %v973 = vmul.f32 %v969, %v969
    %v974 = vmul.f32 %v970, %v970
    %v975 = vsel %vm255, %v971, 0.0
    %976 = vadd.xlane.f32.xlu0 %v975
    %v977 = vpop.xlane.xlu0 %976
    %v978 = vsel %vm255, %v972, 0.0
    %979 = vadd.xlane.f32.xlu0 %v978
    %v980 = vpop.xlane.xlu0 %979
    %v981 = vsel %vm255, %v973, 0.0
    %982 = vadd.xlane.f32.xlu0 %v981
    %v983 = vpop.xlane.xlu0 %982
    %v984 = vsel %vm255, %v974, 0.0
    %985 = vadd.xlane.f32.xlu0 %v984
    %v986 = vpop.xlane.xlu0 %985
    %v987 = vadd.f32 %v977, %v980
    %v988 = vadd.f32 %v987, %v983
    %v989 = vadd.f32 %v988, %v986
    %v990 = vrot.slane %v989, 4
    %v991 = vadd.f32 %v989, %v990
    %v992 = vrot.slane %v991, 2
    %v993 = vadd.f32 %v991, %v992
    %v994 = vrot.slane %v993, 1
    %v995 = vadd.f32 %v993, %v994
    %v996 = vmul.f32 %v995, %v283
    %v997 = vadd.f32 %v996, 1e-05
    %v998 = vrsqrt.pop %v997
    %v999 = vmul.f32 %v998, %v997
    %v1000 = vmul.f32 %v999, %v998
    %v1001 = vmul.f32 0.5, %v1000
    %v1002 = vsub.f32 1.5, %v1001
    %v1003 = vmul.f32 %v998, %v1002
    %vm1004 = vweird.f32 %v997
    %vm1005 = vweird.f32 %v998
    %vm1006 = vmor %vm1004, %vm1005
    %v1007 = vsel %vm1006, %v998, %v1003
    %v1008 = vmul.f32 %v967, %v1007
    %v1009 = vmul.f32 %v968, %v1007
    %v1010 = vmul.f32 %v969, %v1007
    %v1011 = vmul.f32 %v970, %v1007
    %v1012 = vmul.f32 %v1008, %v100
    %v1013 = vmul.f32 %v1009, %v101
    %v1014 = vmul.f32 %v1010, %v102
    %v1015 = vmul.f32 %v1011, %v103
    %v1016 = vadd.f32 %v1012, %v104
    %v1017 = vadd.f32 %v1013, %v105
    %v1018 = vadd.f32 %v1014, %v106
    %v1019 = vadd.f32 %v1015, %v107
    %1020 = vst.msk [vmem:[#allocation2 + $0x60] sm:$0xff] %vm255, %v1016
    %1021 = vst.msk [vmem:[#allocation2 + $0x68] sm:$0xff] %vm255, %v1017
    %1022 = vst.msk [vmem:[#allocation2 + $0x70] sm:$0xff] %vm255, %v1018
    %1023 = vst.msk [vmem:[#allocation2 + $0x78] sm:$0xff] %vm255, %v1019
    %v1024 = vld [vmem:[%s342] sm:$0xff]
    %v1025 = vld [vmem:[%s342 + $0x8] sm:$0xff]
    %v1026 = vld [vmem:[%s342 + $0x10] sm:$0xff]
    %v1027 = vld [vmem:[%s342 + $0x18] sm:$0xff]
    %s1028 = scalar_lea.vmem %s2, 32
    %v1029 = vld [vmem:[%s1028] sm:$0xff]
    %v1031 = vsel %vm113, %v1024, 0
    %v1034 = vsel %vm113, %v1025, 0
    %v1037 = vsel %vm113, %v1026, 0
    %v1040 = vsel %vm113, %v1027, 0
    %1042 = vmatpush.msra.mxu0 0.0
    %1043 = vmatpush.msra.mxu0 0.0
    %1044 = vmatpush.msra.mxu0 0.0
    %1045 = vmatpush.msra.mxu0 0.0
    %1046 = vmatpush.msra.mxu0 0.0
    %1047 = vmatpush.msra.mxu0 0.0
    %1048 = vmatpush.msra.mxu0 0.0
    %1049 = vmatpush.msra.mxu0 0.0
    %1050 = vmatpush.msra.mxu0 0.0
    %1051 = vmatpush.msra.mxu0 0.0
    %1052 = vmatpush.msra.mxu0 0.0
    %1053 = vmatpush.msra.mxu0 0.0
    %1054 = vmatpush.msra.mxu0 0.0
    %1055 = vmatpush.msra.mxu0 0.0
    %1056 = vmatpush.msra.mxu0 0.0
    %1057 = vmatpush.msra.mxu0 %v1029
    %1058 = vmatmul.f32.gmra.mxu0 %v1031
    %v1059 = vpop.f32.mrf.mxu0
    %v1060 = vadd.f32 0.0, %v1059
    %1061 = vmatmul.f32.gmra.mxu0 %v1034
    %v1062 = vpop.f32.mrf.mxu0
    %v1063 = vadd.f32 0.0, %v1062
    %1064 = vmatmul.f32.gmra.mxu0 %v1037
    %v1065 = vpop.f32.mrf.mxu0
    %v1066 = vadd.f32 0.0, %v1065
    %1067 = vmatmul.f32.gmra.mxu0 %v1040
    %v1068 = vpop.f32.mrf.mxu0
    %v1069 = vadd.f32 0.0, %v1068
    %1070 = vdwg.mxu0
    %v1071 = vld [vmem:[%s390] sm:$0xff]
    %v1072 = vld [vmem:[%s390 + $0x8] sm:$0xff]
    %v1073 = vld [vmem:[%s390 + $0x10] sm:$0xff]
    %v1074 = vld [vmem:[%s390 + $0x18] sm:$0xff]
    %s1075 = scalar_lea.vmem %s3, 32
    %v1076 = vld [vmem:[%s1075] sm:$0xff]
    %v1078 = vsel %vm113, %v1071, 0
    %v1081 = vsel %vm113, %v1072, 0
    %v1084 = vsel %vm113, %v1073, 0
    %v1087 = vsel %vm113, %v1074, 0
    %1089 = vmatpush.msra.mxu0 0.0
    %1090 = vmatpush.msra.mxu0 0.0
    %1091 = vmatpush.msra.mxu0 0.0
    %1092 = vmatpush.msra.mxu0 0.0
    %1093 = vmatpush.msra.mxu0 0.0
    %1094 = vmatpush.msra.mxu0 0.0
    %1095 = vmatpush.msra.mxu0 0.0
    %1096 = vmatpush.msra.mxu0 0.0
    %1097 = vmatpush.msra.mxu0 0.0
    %1098 = vmatpush.msra.mxu0 0.0
    %1099 = vmatpush.msra.mxu0 0.0
    %1100 = vmatpush.msra.mxu0 0.0
    %1101 = vmatpush.msra.mxu0 0.0
    %1102 = vmatpush.msra.mxu0 0.0
    %1103 = vmatpush.msra.mxu0 0.0
    %1104 = vmatpush.msra.mxu0 %v1076
    %1105 = vmatmul.f32.gmra.mxu0 %v1078
    %v1106 = vpop.f32.mrf.mxu0
    %v1107 = vadd.f32 0.0, %v1106
    %1108 = vmatmul.f32.gmra.mxu0 %v1081
    %v1109 = vpop.f32.mrf.mxu0
    %v1110 = vadd.f32 0.0, %v1109
    %1111 = vmatmul.f32.gmra.mxu0 %v1084
    %v1112 = vpop.f32.mrf.mxu0
    %v1113 = vadd.f32 0.0, %v1112
    %1114 = vmatmul.f32.gmra.mxu0 %v1087
    %v1115 = vpop.f32.mrf.mxu0
    %v1116 = vadd.f32 0.0, %v1115
    %1117 = vdwg.mxu0
    %v1119 = vsel %vm201, %v1060, 0
    %v1122 = vsel %vm201, %v1063, 0
    %v1125 = vsel %vm201, %v1066, 0
    %v1128 = vsel %vm201, %v1069, 0
    %v1131 = vsel %vm201, %v1107, 0
    %v1134 = vsel %vm201, %v1110, 0
    %v1137 = vsel %vm201, %v1113, 0
    %v1140 = vsel %vm201, %v1116, 0
    %1142 = vmatpush.xpose.msra.mxu0 0.0
    %1143 = vmatpush.xpose.msra.mxu0 0.0
    %1144 = vmatpush.xpose.msra.mxu0 0.0
    %1145 = vmatpush.xpose.msra.mxu0 0.0
    %1146 = vmatpush.xpose.msra.mxu0 0.0
    %1147 = vmatpush.xpose.msra.mxu0 0.0
    %1148 = vmatpush.xpose.msra.mxu0 0.0
    %1149 = vmatpush.xpose.msra.mxu0 0.0
    %1150 = vmatpush.xpose.msra.mxu0 0.0
    %1151 = vmatpush.xpose.msra.mxu0 0.0
    %1152 = vmatpush.xpose.msra.mxu0 0.0
    %1153 = vmatpush.xpose.msra.mxu0 0.0
    %1154 = vmatpush.xpose.msra.mxu0 %v1140
    %1155 = vmatpush.xpose.msra.mxu0 %v1137
    %1156 = vmatpush.xpose.msra.mxu0 %v1134
    %1157 = vmatpush.xpose.msra.mxu0 %v1131
    %1158 = vmatmul.f32.gmra.mxu0 %v1119
    %v1159 = vpop.f32.mrf.mxu0
    %v1160 = vadd.f32 0.0, %v1159
    %1161 = vmatmul.f32.gmra.mxu0 %v1122
    %v1162 = vpop.f32.mrf.mxu0
    %v1163 = vadd.f32 0.0, %v1162
    %1164 = vmatmul.f32.gmra.mxu0 %v1125
    %v1165 = vpop.f32.mrf.mxu0
    %v1166 = vadd.f32 0.0, %v1165
    %1167 = vmatmul.f32.gmra.mxu0 %v1128
    %v1168 = vpop.f32.mrf.mxu0
    %v1169 = vadd.f32 0.0, %v1168
    %1170 = vdwg.mxu0
    %v1171 = vsel %vm255, %v1160, 0.0
    %1172 = vadd.xlane.f32.xlu0 %v1171
    %v1173 = vpop.xlane.xlu0 %1172
    %v1174 = vsel %vm255, %v1163, 0.0
    %1175 = vadd.xlane.f32.xlu0 %v1174
    %v1176 = vpop.xlane.xlu0 %1175
    %v1177 = vsel %vm255, %v1166, 0.0
    %1178 = vadd.xlane.f32.xlu0 %v1177
    %v1179 = vpop.xlane.xlu0 %1178
    %v1180 = vsel %vm255, %v1169, 0.0
    %1181 = vadd.xlane.f32.xlu0 %v1180
    %v1182 = vpop.xlane.xlu0 %1181
    %v1183 = vadd.f32 %v1173, %v1176
    %v1184 = vadd.f32 %v1183, %v1179
    %v1185 = vadd.f32 %v1184, %v1182
    %v1186 = vrot.slane %v1185, 4
    %v1187 = vadd.f32 %v1185, %v1186
    %v1188 = vrot.slane %v1187, 2
    %v1189 = vadd.f32 %v1187, %v1188
    %v1190 = vrot.slane %v1189, 1
    %v1191 = vadd.f32 %v1189, %v1190
    %v1192 = vmul.f32 %v1191, %v283
    %v1193 = vsub.f32 %v1160, %v1192
    %v1194 = vsub.f32 %v1163, %v1192
    %v1195 = vsub.f32 %v1166, %v1192
    %v1196 = vsub.f32 %v1169, %v1192
    %v1197 = vmul.f32 %v1193, %v1193
    %v1198 = vmul.f32 %v1194, %v1194
    %v1199 = vmul.f32 %v1195, %v1195
    %v1200 = vmul.f32 %v1196, %v1196
    %v1201 = vsel %vm255, %v1197, 0.0
    %1202 = vadd.xlane.f32.xlu0 %v1201
    %v1203 = vpop.xlane.xlu0 %1202
    %v1204 = vsel %vm255, %v1198, 0.0
    %1205 = vadd.xlane.f32.xlu0 %v1204
    %v1206 = vpop.xlane.xlu0 %1205
    %v1207 = vsel %vm255, %v1199, 0.0
    %1208 = vadd.xlane.f32.xlu0 %v1207
    %v1209 = vpop.xlane.xlu0 %1208
    %v1210 = vsel %vm255, %v1200, 0.0
    %1211 = vadd.xlane.f32.xlu0 %v1210
    %v1212 = vpop.xlane.xlu0 %1211
    %v1213 = vadd.f32 %v1203, %v1206
    %v1214 = vadd.f32 %v1213, %v1209
    %v1215 = vadd.f32 %v1214, %v1212
    %v1216 = vrot.slane %v1215, 4
    %v1217 = vadd.f32 %v1215, %v1216
    %v1218 = vrot.slane %v1217, 2
    %v1219 = vadd.f32 %v1217, %v1218
    %v1220 = vrot.slane %v1219, 1
    %v1221 = vadd.f32 %v1219, %v1220
    %v1222 = vmul.f32 %v1221, %v283
    %v1223 = vadd.f32 %v1222, 1e-05
    %v1224 = vrsqrt.pop %v1223
    %v1225 = vmul.f32 %v1224, %v1223
    %v1226 = vmul.f32 %v1225, %v1224
    %v1227 = vmul.f32 0.5, %v1226
    %v1228 = vsub.f32 1.5, %v1227
    %v1229 = vmul.f32 %v1224, %v1228
    %vm1230 = vweird.f32 %v1223
    %vm1231 = vweird.f32 %v1224
    %vm1232 = vmor %vm1230, %vm1231
    %v1233 = vsel %vm1232, %v1224, %v1229
    %v1234 = vmul.f32 %v1193, %v1233
    %v1235 = vmul.f32 %v1194, %v1233
    %v1236 = vmul.f32 %v1195, %v1233
    %v1237 = vmul.f32 %v1196, %v1233
    %v1238 = vmul.f32 %v1234, %v100
    %v1239 = vmul.f32 %v1235, %v101
    %v1240 = vmul.f32 %v1236, %v102
    %v1241 = vmul.f32 %v1237, %v103
    %v1242 = vadd.f32 %v1238, %v104
    %v1243 = vadd.f32 %v1239, %v105
    %v1244 = vadd.f32 %v1240, %v106
    %v1245 = vadd.f32 %v1241, %v107
    %1246 = vst.msk [vmem:[#allocation2 + $0x80] sm:$0xff] %vm255, %v1242
    %1247 = vst.msk [vmem:[#allocation2 + $0x88] sm:$0xff] %vm255, %v1243
    %1248 = vst.msk [vmem:[#allocation2 + $0x90] sm:$0xff] %vm255, %v1244
    %1249 = vst.msk [vmem:[#allocation2 + $0x98] sm:$0xff] %vm255, %v1245
    %v1250 = vld [vmem:[%s570] sm:$0xff]
    %v1251 = vld [vmem:[%s570 + $0x8] sm:$0xff]
    %v1252 = vld [vmem:[%s570 + $0x10] sm:$0xff]
    %v1253 = vld [vmem:[%s570 + $0x18] sm:$0xff]
    %s1254 = scalar_lea.vmem %s2, 40
    %v1255 = vld [vmem:[%s1254] sm:$0xff]
    %v1257 = vsel %vm113, %v1250, 0
    %v1260 = vsel %vm113, %v1251, 0
    %v1263 = vsel %vm113, %v1252, 0
    %v1266 = vsel %vm113, %v1253, 0
    %1268 = vmatpush.msra.mxu0 0.0
    %1269 = vmatpush.msra.mxu0 0.0
    %1270 = vmatpush.msra.mxu0 0.0
    %1271 = vmatpush.msra.mxu0 0.0
    %1272 = vmatpush.msra.mxu0 0.0
    %1273 = vmatpush.msra.mxu0 0.0
    %1274 = vmatpush.msra.mxu0 0.0
    %1275 = vmatpush.msra.mxu0 0.0
    %1276 = vmatpush.msra.mxu0 0.0
    %1277 = vmatpush.msra.mxu0 0.0
    %1278 = vmatpush.msra.mxu0 0.0
    %1279 = vmatpush.msra.mxu0 0.0
    %1280 = vmatpush.msra.mxu0 0.0
    %1281 = vmatpush.msra.mxu0 0.0
    %1282 = vmatpush.msra.mxu0 0.0
    %1283 = vmatpush.msra.mxu0 %v1255
    %1284 = vmatmul.f32.gmra.mxu0 %v1257
    %v1285 = vpop.f32.mrf.mxu0
    %v1286 = vadd.f32 0.0, %v1285
    %1287 = vmatmul.f32.gmra.mxu0 %v1260
    %v1288 = vpop.f32.mrf.mxu0
    %v1289 = vadd.f32 0.0, %v1288
    %1290 = vmatmul.f32.gmra.mxu0 %v1263
    %v1291 = vpop.f32.mrf.mxu0
    %v1292 = vadd.f32 0.0, %v1291
    %1293 = vmatmul.f32.gmra.mxu0 %v1266
    %v1294 = vpop.f32.mrf.mxu0
    %v1295 = vadd.f32 0.0, %v1294
    %1296 = vdwg.mxu0
    %v1297 = vld [vmem:[%s618] sm:$0xff]
    %v1298 = vld [vmem:[%s618 + $0x8] sm:$0xff]
    %v1299 = vld [vmem:[%s618 + $0x10] sm:$0xff]
    %v1300 = vld [vmem:[%s618 + $0x18] sm:$0xff]
    %s1301 = scalar_lea.vmem %s3, 40
    %v1302 = vld [vmem:[%s1301] sm:$0xff]
    %v1304 = vsel %vm113, %v1297, 0
    %v1307 = vsel %vm113, %v1298, 0
    %v1310 = vsel %vm113, %v1299, 0
    %v1313 = vsel %vm113, %v1300, 0
    %1315 = vmatpush.msra.mxu0 0.0
    %1316 = vmatpush.msra.mxu0 0.0
    %1317 = vmatpush.msra.mxu0 0.0
    %1318 = vmatpush.msra.mxu0 0.0
    %1319 = vmatpush.msra.mxu0 0.0
    %1320 = vmatpush.msra.mxu0 0.0
    %1321 = vmatpush.msra.mxu0 0.0
    %1322 = vmatpush.msra.mxu0 0.0
    %1323 = vmatpush.msra.mxu0 0.0
    %1324 = vmatpush.msra.mxu0 0.0
    %1325 = vmatpush.msra.mxu0 0.0
    %1326 = vmatpush.msra.mxu0 0.0
    %1327 = vmatpush.msra.mxu0 0.0
    %1328 = vmatpush.msra.mxu0 0.0
    %1329 = vmatpush.msra.mxu0 0.0
    %1330 = vmatpush.msra.mxu0 %v1302
    %1331 = vmatmul.f32.gmra.mxu0 %v1304
    %v1332 = vpop.f32.mrf.mxu0
    %v1333 = vadd.f32 0.0, %v1332
    %1334 = vmatmul.f32.gmra.mxu0 %v1307
    %v1335 = vpop.f32.mrf.mxu0
    %v1336 = vadd.f32 0.0, %v1335
    %1337 = vmatmul.f32.gmra.mxu0 %v1310
    %v1338 = vpop.f32.mrf.mxu0
    %v1339 = vadd.f32 0.0, %v1338
    %1340 = vmatmul.f32.gmra.mxu0 %v1313
    %v1341 = vpop.f32.mrf.mxu0
    %v1342 = vadd.f32 0.0, %v1341
    %1343 = vdwg.mxu0
    %v1345 = vsel %vm201, %v1286, 0
    %v1348 = vsel %vm201, %v1289, 0
    %v1351 = vsel %vm201, %v1292, 0
    %v1354 = vsel %vm201, %v1295, 0
    %v1357 = vsel %vm201, %v1333, 0
    %v1360 = vsel %vm201, %v1336, 0
    %v1363 = vsel %vm201, %v1339, 0
    %v1366 = vsel %vm201, %v1342, 0
    %1368 = vmatpush.xpose.msra.mxu0 0.0
    %1369 = vmatpush.xpose.msra.mxu0 0.0
    %1370 = vmatpush.xpose.msra.mxu0 0.0
    %1371 = vmatpush.xpose.msra.mxu0 0.0
    %1372 = vmatpush.xpose.msra.mxu0 0.0
    %1373 = vmatpush.xpose.msra.mxu0 0.0
    %1374 = vmatpush.xpose.msra.mxu0 0.0
    %1375 = vmatpush.xpose.msra.mxu0 0.0
    %1376 = vmatpush.xpose.msra.mxu0 0.0
    %1377 = vmatpush.xpose.msra.mxu0 0.0
    %1378 = vmatpush.xpose.msra.mxu0 0.0
    %1379 = vmatpush.xpose.msra.mxu0 0.0
    %1380 = vmatpush.xpose.msra.mxu0 %v1366
    %1381 = vmatpush.xpose.msra.mxu0 %v1363
    %1382 = vmatpush.xpose.msra.mxu0 %v1360
    %1383 = vmatpush.xpose.msra.mxu0 %v1357
    %1384 = vmatmul.f32.gmra.mxu0 %v1345
    %v1385 = vpop.f32.mrf.mxu0
    %v1386 = vadd.f32 0.0, %v1385
    %1387 = vmatmul.f32.gmra.mxu0 %v1348
    %v1388 = vpop.f32.mrf.mxu0
    %v1389 = vadd.f32 0.0, %v1388
    %1390 = vmatmul.f32.gmra.mxu0 %v1351
    %v1391 = vpop.f32.mrf.mxu0
    %v1392 = vadd.f32 0.0, %v1391
    %1393 = vmatmul.f32.gmra.mxu0 %v1354
    %v1394 = vpop.f32.mrf.mxu0
    %v1395 = vadd.f32 0.0, %v1394
    %1396 = vdwg.mxu0
    %v1397 = vsel %vm255, %v1386, 0.0
    %1398 = vadd.xlane.f32.xlu0 %v1397
    %v1399 = vpop.xlane.xlu0 %1398
    %v1400 = vsel %vm255, %v1389, 0.0
    %1401 = vadd.xlane.f32.xlu0 %v1400
    %v1402 = vpop.xlane.xlu0 %1401
    %v1403 = vsel %vm255, %v1392, 0.0
    %1404 = vadd.xlane.f32.xlu0 %v1403
    %v1405 = vpop.xlane.xlu0 %1404
    %v1406 = vsel %vm255, %v1395, 0.0
    %1407 = vadd.xlane.f32.xlu0 %v1406
    %v1408 = vpop.xlane.xlu0 %1407
    %v1409 = vadd.f32 %v1399, %v1402
    %v1410 = vadd.f32 %v1409, %v1405
    %v1411 = vadd.f32 %v1410, %v1408
    %v1412 = vrot.slane %v1411, 4
    %v1413 = vadd.f32 %v1411, %v1412
    %v1414 = vrot.slane %v1413, 2
    %v1415 = vadd.f32 %v1413, %v1414
    %v1416 = vrot.slane %v1415, 1
    %v1417 = vadd.f32 %v1415, %v1416
    %v1418 = vmul.f32 %v1417, %v283
    %v1419 = vsub.f32 %v1386, %v1418
    %v1420 = vsub.f32 %v1389, %v1418
    %v1421 = vsub.f32 %v1392, %v1418
    %v1422 = vsub.f32 %v1395, %v1418
    %v1423 = vmul.f32 %v1419, %v1419
    %v1424 = vmul.f32 %v1420, %v1420
    %v1425 = vmul.f32 %v1421, %v1421
    %v1426 = vmul.f32 %v1422, %v1422
    %v1427 = vsel %vm255, %v1423, 0.0
    %1428 = vadd.xlane.f32.xlu0 %v1427
    %v1429 = vpop.xlane.xlu0 %1428
    %v1430 = vsel %vm255, %v1424, 0.0
    %1431 = vadd.xlane.f32.xlu0 %v1430
    %v1432 = vpop.xlane.xlu0 %1431
    %v1433 = vsel %vm255, %v1425, 0.0
    %1434 = vadd.xlane.f32.xlu0 %v1433
    %v1435 = vpop.xlane.xlu0 %1434
    %v1436 = vsel %vm255, %v1426, 0.0
    %1437 = vadd.xlane.f32.xlu0 %v1436
    %v1438 = vpop.xlane.xlu0 %1437
    %v1439 = vadd.f32 %v1429, %v1432
    %v1440 = vadd.f32 %v1439, %v1435
    %v1441 = vadd.f32 %v1440, %v1438
    %v1442 = vrot.slane %v1441, 4
    %v1443 = vadd.f32 %v1441, %v1442
    %v1444 = vrot.slane %v1443, 2
    %v1445 = vadd.f32 %v1443, %v1444
    %v1446 = vrot.slane %v1445, 1
    %v1447 = vadd.f32 %v1445, %v1446
    %v1448 = vmul.f32 %v1447, %v283
    %v1449 = vadd.f32 %v1448, 1e-05
    %v1450 = vrsqrt.pop %v1449
    %v1451 = vmul.f32 %v1450, %v1449
    %v1452 = vmul.f32 %v1451, %v1450
    %v1453 = vmul.f32 0.5, %v1452
    %v1454 = vsub.f32 1.5, %v1453
    %v1455 = vmul.f32 %v1450, %v1454
    %vm1456 = vweird.f32 %v1449
    %vm1457 = vweird.f32 %v1450
    %vm1458 = vmor %vm1456, %vm1457
    %v1459 = vsel %vm1458, %v1450, %v1455
    %v1460 = vmul.f32 %v1419, %v1459
    %v1461 = vmul.f32 %v1420, %v1459
    %v1462 = vmul.f32 %v1421, %v1459
    %v1463 = vmul.f32 %v1422, %v1459
    %v1464 = vmul.f32 %v1460, %v100
    %v1465 = vmul.f32 %v1461, %v101
    %v1466 = vmul.f32 %v1462, %v102
    %v1467 = vmul.f32 %v1463, %v103
    %v1468 = vadd.f32 %v1464, %v104
    %v1469 = vadd.f32 %v1465, %v105
    %v1470 = vadd.f32 %v1466, %v106
    %v1471 = vadd.f32 %v1467, %v107
    %1472 = vst.msk [vmem:[#allocation2 + $0xa0] sm:$0xff] %vm255, %v1468
    %1473 = vst.msk [vmem:[#allocation2 + $0xa8] sm:$0xff] %vm255, %v1469
    %1474 = vst.msk [vmem:[#allocation2 + $0xb0] sm:$0xff] %vm255, %v1470
    %1475 = vst.msk [vmem:[#allocation2 + $0xb8] sm:$0xff] %vm255, %v1471
    %v1476 = vld [vmem:[%s7] sm:$0x1]
    %v1478 = vperm.slane %v1476, 0
    %v1480 = vadd.f32 %v1478, 0.0
    %v1481 = vld [vmem:[#allocation2] ss:$32 sm:$0x1]
    %v1482 = vld [vmem:[#allocation2] ss:$32 sm:$0x2]
    %v1483 = vor.u32 %v1481, %v1482
    %v1484 = vld [vmem:[#allocation2] ss:$32 sm:$0x4]
    %v1485 = vor.u32 %v1483, %v1484
    %v1486 = vld [vmem:[#allocation2] ss:$32 sm:$0x8]
    %v1487 = vor.u32 %v1485, %v1486
    %v1488 = vld [vmem:[#allocation2] ss:$32 sm:$0x10]
    %v1489 = vor.u32 %v1487, %v1488
    %v1490 = vld [vmem:[#allocation2] ss:$32 sm:$0x20]
    %v1491 = vor.u32 %v1489, %v1490
    %v1492 = vld [vmem:[#allocation6] sm:$0xff]
    %v1493 = vld [vmem:[#allocation6 + $0x8] sm:$0xff]
    %v1494 = vld [vmem:[#allocation6 + $0x10] sm:$0xff]
    %v1495 = vld [vmem:[#allocation6 + $0x18] sm:$0xff]
    %v1497 = vsel %vm255, %v1491, 0
    %1499 = vmatpush.msra.mxu0 0.0
    %1500 = vmatpush.msra.mxu0 0.0
    %1501 = vmatpush.msra.mxu0 0.0
    %1502 = vmatpush.msra.mxu0 0.0
    %1503 = vmatpush.msra.mxu0 0.0
    %1504 = vmatpush.msra.mxu0 0.0
    %1505 = vmatpush.msra.mxu0 0.0
    %1506 = vmatpush.msra.mxu0 0.0
    %1507 = vmatpush.msra.mxu0 0.0
    %1508 = vmatpush.msra.mxu0 0.0
    %1509 = vmatpush.msra.mxu0 0.0
    %1510 = vmatpush.msra.mxu0 0.0
    %1511 = vmatpush.msra.mxu0 %v1495
    %1512 = vmatpush.msra.mxu0 %v1494
    %1513 = vmatpush.msra.mxu0 %v1493
    %1514 = vmatpush.msra.mxu0 %v1492
    %1515 = vmatmul.f32.gmra.mxu0 %v1497
    %v1516 = vpop.f32.mrf.mxu0
    %v1517 = vadd.f32 0.0, %v1516
    %1518 = vdwg.mxu0
    %v1519 = vadd.f32 %v1480, %v1517
    %s1520 = scalar_lea.vmem [#allocation2], 1
    %v1521 = vld [vmem:[%s1520] ss:$32 sm:$0x1]
    %v1522 = vld [vmem:[%s1520] ss:$32 sm:$0x2]
    %v1523 = vor.u32 %v1521, %v1522
    %v1524 = vld [vmem:[%s1520] ss:$32 sm:$0x4]
    %v1525 = vor.u32 %v1523, %v1524
    %v1526 = vld [vmem:[%s1520] ss:$32 sm:$0x8]
    %v1527 = vor.u32 %v1525, %v1526
    %v1528 = vld [vmem:[%s1520] ss:$32 sm:$0x10]
    %v1529 = vor.u32 %v1527, %v1528
    %v1530 = vld [vmem:[%s1520] ss:$32 sm:$0x20]
    %v1531 = vor.u32 %v1529, %v1530
    %s1532 = scalar_lea.vmem [#allocation6], 32
    %v1533 = vld [vmem:[%s1532] sm:$0xff]
    %v1534 = vld [vmem:[%s1532 + $0x8] sm:$0xff]
    %v1535 = vld [vmem:[%s1532 + $0x10] sm:$0xff]
    %v1536 = vld [vmem:[%s1532 + $0x18] sm:$0xff]
    %v1538 = vsel %vm255, %v1531, 0
    %1540 = vmatpush.msra.mxu0 0.0
    %1541 = vmatpush.msra.mxu0 0.0
    %1542 = vmatpush.msra.mxu0 0.0
    %1543 = vmatpush.msra.mxu0 0.0
    %1544 = vmatpush.msra.mxu0 0.0
    %1545 = vmatpush.msra.mxu0 0.0
    %1546 = vmatpush.msra.mxu0 0.0
    %1547 = vmatpush.msra.mxu0 0.0
    %1548 = vmatpush.msra.mxu0 0.0
    %1549 = vmatpush.msra.mxu0 0.0
    %1550 = vmatpush.msra.mxu0 0.0
    %1551 = vmatpush.msra.mxu0 0.0
    %1552 = vmatpush.msra.mxu0 %v1536
    %1553 = vmatpush.msra.mxu0 %v1535
    %1554 = vmatpush.msra.mxu0 %v1534
    %1555 = vmatpush.msra.mxu0 %v1533
    %1556 = vmatmul.f32.gmra.mxu0 %v1538
    %v1557 = vpop.f32.mrf.mxu0
    %v1558 = vadd.f32 0.0, %v1557
    %1559 = vdwg.mxu0
    %v1560 = vadd.f32 %v1519, %v1558
    %s1561 = scalar_lea.vmem [#allocation2], 2
    %v1562 = vld [vmem:[%s1561] ss:$32 sm:$0x1]
    %v1563 = vld [vmem:[%s1561] ss:$32 sm:$0x2]
    %v1564 = vor.u32 %v1562, %v1563
    %v1565 = vld [vmem:[%s1561] ss:$32 sm:$0x4]
    %v1566 = vor.u32 %v1564, %v1565
    %v1567 = vld [vmem:[%s1561] ss:$32 sm:$0x8]
    %v1568 = vor.u32 %v1566, %v1567
    %v1569 = vld [vmem:[%s1561] ss:$32 sm:$0x10]
    %v1570 = vor.u32 %v1568, %v1569
    %v1571 = vld [vmem:[%s1561] ss:$32 sm:$0x20]
    %v1572 = vor.u32 %v1570, %v1571
    %s1573 = scalar_lea.vmem [#allocation6], 64
    %v1574 = vld [vmem:[%s1573] sm:$0xff]
    %v1575 = vld [vmem:[%s1573 + $0x8] sm:$0xff]
    %v1576 = vld [vmem:[%s1573 + $0x10] sm:$0xff]
    %v1577 = vld [vmem:[%s1573 + $0x18] sm:$0xff]
    %v1579 = vsel %vm255, %v1572, 0
    %1581 = vmatpush.msra.mxu0 0.0
    %1582 = vmatpush.msra.mxu0 0.0
    %1583 = vmatpush.msra.mxu0 0.0
    %1584 = vmatpush.msra.mxu0 0.0
    %1585 = vmatpush.msra.mxu0 0.0
    %1586 = vmatpush.msra.mxu0 0.0
    %1587 = vmatpush.msra.mxu0 0.0
    %1588 = vmatpush.msra.mxu0 0.0
    %1589 = vmatpush.msra.mxu0 0.0
    %1590 = vmatpush.msra.mxu0 0.0
    %1591 = vmatpush.msra.mxu0 0.0
    %1592 = vmatpush.msra.mxu0 0.0
    %1593 = vmatpush.msra.mxu0 %v1577
    %1594 = vmatpush.msra.mxu0 %v1576
    %1595 = vmatpush.msra.mxu0 %v1575
    %1596 = vmatpush.msra.mxu0 %v1574
    %1597 = vmatmul.f32.gmra.mxu0 %v1579
    %v1598 = vpop.f32.mrf.mxu0
    %v1599 = vadd.f32 0.0, %v1598
    %1600 = vdwg.mxu0
    %v1601 = vadd.f32 %v1560, %v1599
    %s1602 = scalar_lea.vmem [#allocation2], 3
    %v1603 = vld [vmem:[%s1602] ss:$32 sm:$0x1]
    %v1604 = vld [vmem:[%s1602] ss:$32 sm:$0x2]
    %v1605 = vor.u32 %v1603, %v1604
    %v1606 = vld [vmem:[%s1602] ss:$32 sm:$0x4]
    %v1607 = vor.u32 %v1605, %v1606
    %v1608 = vld [vmem:[%s1602] ss:$32 sm:$0x8]
    %v1609 = vor.u32 %v1607, %v1608
    %v1610 = vld [vmem:[%s1602] ss:$32 sm:$0x10]
    %v1611 = vor.u32 %v1609, %v1610
    %v1612 = vld [vmem:[%s1602] ss:$32 sm:$0x20]
    %v1613 = vor.u32 %v1611, %v1612
    %s1614 = scalar_lea.vmem [#allocation6], 96
    %v1615 = vld [vmem:[%s1614] sm:$0xff]
    %v1616 = vld [vmem:[%s1614 + $0x8] sm:$0xff]
    %v1617 = vld [vmem:[%s1614 + $0x10] sm:$0xff]
    %v1618 = vld [vmem:[%s1614 + $0x18] sm:$0xff]
    %v1620 = vsel %vm255, %v1613, 0
    %1622 = vmatpush.msra.mxu0 0.0
    %1623 = vmatpush.msra.mxu0 0.0
    %1624 = vmatpush.msra.mxu0 0.0
    %1625 = vmatpush.msra.mxu0 0.0
    %1626 = vmatpush.msra.mxu0 0.0
    %1627 = vmatpush.msra.mxu0 0.0
    %1628 = vmatpush.msra.mxu0 0.0
    %1629 = vmatpush.msra.mxu0 0.0
    %1630 = vmatpush.msra.mxu0 0.0
    %1631 = vmatpush.msra.mxu0 0.0
    %1632 = vmatpush.msra.mxu0 0.0
    %1633 = vmatpush.msra.mxu0 0.0
    %1634 = vmatpush.msra.mxu0 %v1618
    %1635 = vmatpush.msra.mxu0 %v1617
    %1636 = vmatpush.msra.mxu0 %v1616
    %1637 = vmatpush.msra.mxu0 %v1615
    %1638 = vmatmul.f32.gmra.mxu0 %v1620
    %v1639 = vpop.f32.mrf.mxu0
    %v1640 = vadd.f32 0.0, %v1639
    %1641 = vdwg.mxu0
    %v1642 = vadd.f32 %v1601, %v1640
    %s1643 = scalar_lea.vmem [#allocation2], 4
    %v1644 = vld [vmem:[%s1643] ss:$32 sm:$0x1]
    %v1645 = vld [vmem:[%s1643] ss:$32 sm:$0x2]
    %v1646 = vor.u32 %v1644, %v1645
    %v1647 = vld [vmem:[%s1643] ss:$32 sm:$0x4]
    %v1648 = vor.u32 %v1646, %v1647
    %v1649 = vld [vmem:[%s1643] ss:$32 sm:$0x8]
    %v1650 = vor.u32 %v1648, %v1649
    %v1651 = vld [vmem:[%s1643] ss:$32 sm:$0x10]
    %v1652 = vor.u32 %v1650, %v1651
    %v1653 = vld [vmem:[%s1643] ss:$32 sm:$0x20]
    %v1654 = vor.u32 %v1652, %v1653
    %s1655 = scalar_lea.vmem [#allocation6], 128
    %v1656 = vld [vmem:[%s1655] sm:$0xff]
    %v1657 = vld [vmem:[%s1655 + $0x8] sm:$0xff]
    %v1658 = vld [vmem:[%s1655 + $0x10] sm:$0xff]
    %v1659 = vld [vmem:[%s1655 + $0x18] sm:$0xff]
    %v1661 = vsel %vm255, %v1654, 0
    %1663 = vmatpush.msra.mxu0 0.0
    %1664 = vmatpush.msra.mxu0 0.0
    %1665 = vmatpush.msra.mxu0 0.0
    %1666 = vmatpush.msra.mxu0 0.0
    %1667 = vmatpush.msra.mxu0 0.0
    %1668 = vmatpush.msra.mxu0 0.0
    %1669 = vmatpush.msra.mxu0 0.0
    %1670 = vmatpush.msra.mxu0 0.0
    %1671 = vmatpush.msra.mxu0 0.0
    %1672 = vmatpush.msra.mxu0 0.0
    %1673 = vmatpush.msra.mxu0 0.0
    %1674 = vmatpush.msra.mxu0 0.0
    %1675 = vmatpush.msra.mxu0 %v1659
    %1676 = vmatpush.msra.mxu0 %v1658
    %1677 = vmatpush.msra.mxu0 %v1657
    %1678 = vmatpush.msra.mxu0 %v1656
    %1679 = vmatmul.f32.gmra.mxu0 %v1661
    %v1680 = vpop.f32.mrf.mxu0
    %v1681 = vadd.f32 0.0, %v1680
    %1682 = vdwg.mxu0
    %v1683 = vadd.f32 %v1642, %v1681
    %s1684 = scalar_lea.vmem [#allocation2], 5
    %v1685 = vld [vmem:[%s1684] ss:$32 sm:$0x1]
    %v1686 = vld [vmem:[%s1684] ss:$32 sm:$0x2]
    %v1687 = vor.u32 %v1685, %v1686
    %v1688 = vld [vmem:[%s1684] ss:$32 sm:$0x4]
    %v1689 = vor.u32 %v1687, %v1688
    %v1690 = vld [vmem:[%s1684] ss:$32 sm:$0x8]
    %v1691 = vor.u32 %v1689, %v1690
    %v1692 = vld [vmem:[%s1684] ss:$32 sm:$0x10]
    %v1693 = vor.u32 %v1691, %v1692
    %v1694 = vld [vmem:[%s1684] ss:$32 sm:$0x20]
    %v1695 = vor.u32 %v1693, %v1694
    %s1696 = scalar_lea.vmem [#allocation6], 160
    %v1697 = vld [vmem:[%s1696] sm:$0xff]
    %v1698 = vld [vmem:[%s1696 + $0x8] sm:$0xff]
    %v1699 = vld [vmem:[%s1696 + $0x10] sm:$0xff]
    %v1700 = vld [vmem:[%s1696 + $0x18] sm:$0xff]
    %v1702 = vsel %vm255, %v1695, 0
    %1704 = vmatpush.msra.mxu0 0.0
    %1705 = vmatpush.msra.mxu0 0.0
    %1706 = vmatpush.msra.mxu0 0.0
    %1707 = vmatpush.msra.mxu0 0.0
    %1708 = vmatpush.msra.mxu0 0.0
    %1709 = vmatpush.msra.mxu0 0.0
    %1710 = vmatpush.msra.mxu0 0.0
    %1711 = vmatpush.msra.mxu0 0.0
    %1712 = vmatpush.msra.mxu0 0.0
    %1713 = vmatpush.msra.mxu0 0.0
    %1714 = vmatpush.msra.mxu0 0.0
    %1715 = vmatpush.msra.mxu0 0.0
    %1716 = vmatpush.msra.mxu0 %v1700
    %1717 = vmatpush.msra.mxu0 %v1699
    %1718 = vmatpush.msra.mxu0 %v1698
    %1719 = vmatpush.msra.mxu0 %v1697
    %1720 = vmatmul.f32.gmra.mxu0 %v1702
    %v1721 = vpop.f32.mrf.mxu0
    %v1722 = vadd.f32 0.0, %v1721
    %1723 = vdwg.mxu0
    %v1724 = vadd.f32 %v1683, %v1722
    %s1725 = scalar_lea.vmem [#allocation2], 6
    %v1726 = vld [vmem:[%s1725] ss:$32 sm:$0x1]
    %v1727 = vld [vmem:[%s1725] ss:$32 sm:$0x2]
    %v1728 = vor.u32 %v1726, %v1727
    %v1729 = vld [vmem:[%s1725] ss:$32 sm:$0x4]
    %v1730 = vor.u32 %v1728, %v1729
    %v1731 = vld [vmem:[%s1725] ss:$32 sm:$0x8]
    %v1732 = vor.u32 %v1730, %v1731
    %v1733 = vld [vmem:[%s1725] ss:$32 sm:$0x10]
    %v1734 = vor.u32 %v1732, %v1733
    %v1735 = vld [vmem:[%s1725] ss:$32 sm:$0x20]
    %v1736 = vor.u32 %v1734, %v1735
    %s1737 = scalar_lea.vmem [#allocation6], 192
    %v1738 = vld [vmem:[%s1737] sm:$0xff]
    %v1739 = vld [vmem:[%s1737 + $0x8] sm:$0xff]
    %v1740 = vld [vmem:[%s1737 + $0x10] sm:$0xff]
    %v1741 = vld [vmem:[%s1737 + $0x18] sm:$0xff]
    %v1743 = vsel %vm255, %v1736, 0
    %1745 = vmatpush.msra.mxu0 0.0
    %1746 = vmatpush.msra.mxu0 0.0
    %1747 = vmatpush.msra.mxu0 0.0
    %1748 = vmatpush.msra.mxu0 0.0
    %1749 = vmatpush.msra.mxu0 0.0
    %1750 = vmatpush.msra.mxu0 0.0
    %1751 = vmatpush.msra.mxu0 0.0
    %1752 = vmatpush.msra.mxu0 0.0
    %1753 = vmatpush.msra.mxu0 0.0
    %1754 = vmatpush.msra.mxu0 0.0
    %1755 = vmatpush.msra.mxu0 0.0
    %1756 = vmatpush.msra.mxu0 0.0
    %1757 = vmatpush.msra.mxu0 %v1741
    %1758 = vmatpush.msra.mxu0 %v1740
    %1759 = vmatpush.msra.mxu0 %v1739
    %1760 = vmatpush.msra.mxu0 %v1738
    %1761 = vmatmul.f32.gmra.mxu0 %v1743
    %v1762 = vpop.f32.mrf.mxu0
    %v1763 = vadd.f32 0.0, %v1762
    %1764 = vdwg.mxu0
    %v1765 = vadd.f32 %v1724, %v1763
    %s1766 = scalar_lea.vmem [#allocation2], 7
    %v1767 = vld [vmem:[%s1766] ss:$32 sm:$0x1]
    %v1768 = vld [vmem:[%s1766] ss:$32 sm:$0x2]
    %v1769 = vor.u32 %v1767, %v1768
    %v1770 = vld [vmem:[%s1766] ss:$32 sm:$0x4]
    %v1771 = vor.u32 %v1769, %v1770
    %v1772 = vld [vmem:[%s1766] ss:$32 sm:$0x8]
    %v1773 = vor.u32 %v1771, %v1772
    %v1774 = vld [vmem:[%s1766] ss:$32 sm:$0x10]
    %v1775 = vor.u32 %v1773, %v1774
    %v1776 = vld [vmem:[%s1766] ss:$32 sm:$0x20]
    %v1777 = vor.u32 %v1775, %v1776
    %s1778 = scalar_lea.vmem [#allocation6], 224
    %v1779 = vld [vmem:[%s1778] sm:$0xff]
    %v1780 = vld [vmem:[%s1778 + $0x8] sm:$0xff]
    %v1781 = vld [vmem:[%s1778 + $0x10] sm:$0xff]
    %v1782 = vld [vmem:[%s1778 + $0x18] sm:$0xff]
    %v1784 = vsel %vm255, %v1777, 0
    %1786 = vmatpush.msra.mxu0 0.0
    %1787 = vmatpush.msra.mxu0 0.0
    %1788 = vmatpush.msra.mxu0 0.0
    %1789 = vmatpush.msra.mxu0 0.0
    %1790 = vmatpush.msra.mxu0 0.0
    %1791 = vmatpush.msra.mxu0 0.0
    %1792 = vmatpush.msra.mxu0 0.0
    %1793 = vmatpush.msra.mxu0 0.0
    %1794 = vmatpush.msra.mxu0 0.0
    %1795 = vmatpush.msra.mxu0 0.0
    %1796 = vmatpush.msra.mxu0 0.0
    %1797 = vmatpush.msra.mxu0 0.0
    %1798 = vmatpush.msra.mxu0 %v1782
    %1799 = vmatpush.msra.mxu0 %v1781
    %1800 = vmatpush.msra.mxu0 %v1780
    %1801 = vmatpush.msra.mxu0 %v1779
    %1802 = vmatmul.f32.gmra.mxu0 %v1784
    %v1803 = vpop.f32.mrf.mxu0
    %v1804 = vadd.f32 0.0, %v1803
    %1805 = vdwg.mxu0
    %v1806 = vadd.f32 %v1765, %v1804
    %s1807 = scalar_lea.vmem [#allocation2], 8
    %v1808 = vld [vmem:[%s1807] ss:$32 sm:$0x1]
    %v1809 = vld [vmem:[%s1807] ss:$32 sm:$0x2]
    %v1810 = vor.u32 %v1808, %v1809
    %v1811 = vld [vmem:[%s1807] ss:$32 sm:$0x4]
    %v1812 = vor.u32 %v1810, %v1811
    %v1813 = vld [vmem:[%s1807] ss:$32 sm:$0x8]
    %v1814 = vor.u32 %v1812, %v1813
    %v1815 = vld [vmem:[%s1807] ss:$32 sm:$0x10]
    %v1816 = vor.u32 %v1814, %v1815
    %v1817 = vld [vmem:[%s1807] ss:$32 sm:$0x20]
    %v1818 = vor.u32 %v1816, %v1817
    %s1819 = scalar_lea.vmem [#allocation6], 256
    %v1820 = vld [vmem:[%s1819] sm:$0xff]
    %v1821 = vld [vmem:[%s1819 + $0x8] sm:$0xff]
    %v1822 = vld [vmem:[%s1819 + $0x10] sm:$0xff]
    %v1823 = vld [vmem:[%s1819 + $0x18] sm:$0xff]
    %v1825 = vsel %vm255, %v1818, 0
    %1827 = vmatpush.msra.mxu0 0.0
    %1828 = vmatpush.msra.mxu0 0.0
    %1829 = vmatpush.msra.mxu0 0.0
    %1830 = vmatpush.msra.mxu0 0.0
    %1831 = vmatpush.msra.mxu0 0.0
    %1832 = vmatpush.msra.mxu0 0.0
    %1833 = vmatpush.msra.mxu0 0.0
    %1834 = vmatpush.msra.mxu0 0.0
    %1835 = vmatpush.msra.mxu0 0.0
    %1836 = vmatpush.msra.mxu0 0.0
    %1837 = vmatpush.msra.mxu0 0.0
    %1838 = vmatpush.msra.mxu0 0.0
    %1839 = vmatpush.msra.mxu0 %v1823
    %1840 = vmatpush.msra.mxu0 %v1822
    %1841 = vmatpush.msra.mxu0 %v1821
    %1842 = vmatpush.msra.mxu0 %v1820
    %1843 = vmatmul.f32.gmra.mxu0 %v1825
    %v1844 = vpop.f32.mrf.mxu0
    %v1845 = vadd.f32 0.0, %v1844
    %1846 = vdwg.mxu0
    %v1847 = vadd.f32 %v1806, %v1845
    %s1848 = scalar_lea.vmem [#allocation2], 9
    %v1849 = vld [vmem:[%s1848] ss:$32 sm:$0x1]
    %v1850 = vld [vmem:[%s1848] ss:$32 sm:$0x2]
    %v1851 = vor.u32 %v1849, %v1850
    %v1852 = vld [vmem:[%s1848] ss:$32 sm:$0x4]
    %v1853 = vor.u32 %v1851, %v1852
    %v1854 = vld [vmem:[%s1848] ss:$32 sm:$0x8]
    %v1855 = vor.u32 %v1853, %v1854
    %v1856 = vld [vmem:[%s1848] ss:$32 sm:$0x10]
    %v1857 = vor.u32 %v1855, %v1856
    %v1858 = vld [vmem:[%s1848] ss:$32 sm:$0x20]
    %v1859 = vor.u32 %v1857, %v1858
    %s1860 = scalar_lea.vmem [#allocation6], 288
    %v1861 = vld [vmem:[%s1860] sm:$0xff]
    %v1862 = vld [vmem:[%s1860 + $0x8] sm:$0xff]
    %v1863 = vld [vmem:[%s1860 + $0x10] sm:$0xff]
    %v1864 = vld [vmem:[%s1860 + $0x18] sm:$0xff]
    %v1866 = vsel %vm255, %v1859, 0
    %1868 = vmatpush.msra.mxu0 0.0
    %1869 = vmatpush.msra.mxu0 0.0
    %1870 = vmatpush.msra.mxu0 0.0
    %1871 = vmatpush.msra.mxu0 0.0
    %1872 = vmatpush.msra.mxu0 0.0
    %1873 = vmatpush.msra.mxu0 0.0
    %1874 = vmatpush.msra.mxu0 0.0
    %1875 = vmatpush.msra.mxu0 0.0
    %1876 = vmatpush.msra.mxu0 0.0
    %1877 = vmatpush.msra.mxu0 0.0
    %1878 = vmatpush.msra.mxu0 0.0
    %1879 = vmatpush.msra.mxu0 0.0
    %1880 = vmatpush.msra.mxu0 %v1864
    %1881 = vmatpush.msra.mxu0 %v1863
    %1882 = vmatpush.msra.mxu0 %v1862
    %1883 = vmatpush.msra.mxu0 %v1861
    %1884 = vmatmul.f32.gmra.mxu0 %v1866
    %v1885 = vpop.f32.mrf.mxu0
    %v1886 = vadd.f32 0.0, %v1885
    %1887 = vdwg.mxu0
    %v1888 = vadd.f32 %v1847, %v1886
    %s1889 = scalar_lea.vmem [#allocation2], 10
    %v1890 = vld [vmem:[%s1889] ss:$32 sm:$0x1]
    %v1891 = vld [vmem:[%s1889] ss:$32 sm:$0x2]
    %v1892 = vor.u32 %v1890, %v1891
    %v1893 = vld [vmem:[%s1889] ss:$32 sm:$0x4]
    %v1894 = vor.u32 %v1892, %v1893
    %v1895 = vld [vmem:[%s1889] ss:$32 sm:$0x8]
    %v1896 = vor.u32 %v1894, %v1895
    %v1897 = vld [vmem:[%s1889] ss:$32 sm:$0x10]
    %v1898 = vor.u32 %v1896, %v1897
    %v1899 = vld [vmem:[%s1889] ss:$32 sm:$0x20]
    %v1900 = vor.u32 %v1898, %v1899
    %s1901 = scalar_lea.vmem [#allocation6], 320
    %v1902 = vld [vmem:[%s1901] sm:$0xff]
    %v1903 = vld [vmem:[%s1901 + $0x8] sm:$0xff]
    %v1904 = vld [vmem:[%s1901 + $0x10] sm:$0xff]
    %v1905 = vld [vmem:[%s1901 + $0x18] sm:$0xff]
    %v1907 = vsel %vm255, %v1900, 0
    %1909 = vmatpush.msra.mxu0 0.0
    %1910 = vmatpush.msra.mxu0 0.0
    %1911 = vmatpush.msra.mxu0 0.0
    %1912 = vmatpush.msra.mxu0 0.0
    %1913 = vmatpush.msra.mxu0 0.0
    %1914 = vmatpush.msra.mxu0 0.0
    %1915 = vmatpush.msra.mxu0 0.0
    %1916 = vmatpush.msra.mxu0 0.0
    %1917 = vmatpush.msra.mxu0 0.0
    %1918 = vmatpush.msra.mxu0 0.0
    %1919 = vmatpush.msra.mxu0 0.0
    %1920 = vmatpush.msra.mxu0 0.0
    %1921 = vmatpush.msra.mxu0 %v1905
    %1922 = vmatpush.msra.mxu0 %v1904
    %1923 = vmatpush.msra.mxu0 %v1903
    %1924 = vmatpush.msra.mxu0 %v1902
    %1925 = vmatmul.f32.gmra.mxu0 %v1907
    %v1926 = vpop.f32.mrf.mxu0
    %v1927 = vadd.f32 0.0, %v1926
    %1928 = vdwg.mxu0
    %v1929 = vadd.f32 %v1888, %v1927
    %s1930 = scalar_lea.vmem [#allocation2], 11
    %v1931 = vld [vmem:[%s1930] ss:$32 sm:$0x1]
    %v1932 = vld [vmem:[%s1930] ss:$32 sm:$0x2]
    %v1933 = vor.u32 %v1931, %v1932
    %v1934 = vld [vmem:[%s1930] ss:$32 sm:$0x4]
    %v1935 = vor.u32 %v1933, %v1934
    %v1936 = vld [vmem:[%s1930] ss:$32 sm:$0x8]
    %v1937 = vor.u32 %v1935, %v1936
    %v1938 = vld [vmem:[%s1930] ss:$32 sm:$0x10]
    %v1939 = vor.u32 %v1937, %v1938
    %v1940 = vld [vmem:[%s1930] ss:$32 sm:$0x20]
    %v1941 = vor.u32 %v1939, %v1940
    %s1942 = scalar_lea.vmem [#allocation6], 352
    %v1943 = vld [vmem:[%s1942] sm:$0xff]
    %v1944 = vld [vmem:[%s1942 + $0x8] sm:$0xff]
    %v1945 = vld [vmem:[%s1942 + $0x10] sm:$0xff]
    %v1946 = vld [vmem:[%s1942 + $0x18] sm:$0xff]
    %v1948 = vsel %vm255, %v1941, 0
    %1950 = vmatpush.msra.mxu0 0.0
    %1951 = vmatpush.msra.mxu0 0.0
    %1952 = vmatpush.msra.mxu0 0.0
    %1953 = vmatpush.msra.mxu0 0.0
    %1954 = vmatpush.msra.mxu0 0.0
    %1955 = vmatpush.msra.mxu0 0.0
    %1956 = vmatpush.msra.mxu0 0.0
    %1957 = vmatpush.msra.mxu0 0.0
    %1958 = vmatpush.msra.mxu0 0.0
    %1959 = vmatpush.msra.mxu0 0.0
    %1960 = vmatpush.msra.mxu0 0.0
    %1961 = vmatpush.msra.mxu0 0.0
    %1962 = vmatpush.msra.mxu0 %v1946
    %1963 = vmatpush.msra.mxu0 %v1945
    %1964 = vmatpush.msra.mxu0 %v1944
    %1965 = vmatpush.msra.mxu0 %v1943
    %1966 = vmatmul.f32.gmra.mxu0 %v1948
    %v1967 = vpop.f32.mrf.mxu0
    %v1968 = vadd.f32 0.0, %v1967
    %1969 = vdwg.mxu0
    %v1970 = vadd.f32 %v1929, %v1968
    %s1971 = scalar_lea.vmem [#allocation2], 12
    %v1972 = vld [vmem:[%s1971] ss:$32 sm:$0x1]
    %v1973 = vld [vmem:[%s1971] ss:$32 sm:$0x2]
    %v1974 = vor.u32 %v1972, %v1973
    %v1975 = vld [vmem:[%s1971] ss:$32 sm:$0x4]
    %v1976 = vor.u32 %v1974, %v1975
    %v1977 = vld [vmem:[%s1971] ss:$32 sm:$0x8]
    %v1978 = vor.u32 %v1976, %v1977
    %v1979 = vld [vmem:[%s1971] ss:$32 sm:$0x10]
    %v1980 = vor.u32 %v1978, %v1979
    %v1981 = vld [vmem:[%s1971] ss:$32 sm:$0x20]
    %v1982 = vor.u32 %v1980, %v1981
    %s1983 = scalar_lea.vmem [#allocation6], 384
    %v1984 = vld [vmem:[%s1983] sm:$0xff]
    %v1985 = vld [vmem:[%s1983 + $0x8] sm:$0xff]
    %v1986 = vld [vmem:[%s1983 + $0x10] sm:$0xff]
    %v1987 = vld [vmem:[%s1983 + $0x18] sm:$0xff]
    %v1989 = vsel %vm255, %v1982, 0
    %1991 = vmatpush.msra.mxu0 0.0
    %1992 = vmatpush.msra.mxu0 0.0
    %1993 = vmatpush.msra.mxu0 0.0
    %1994 = vmatpush.msra.mxu0 0.0
    %1995 = vmatpush.msra.mxu0 0.0
    %1996 = vmatpush.msra.mxu0 0.0
    %1997 = vmatpush.msra.mxu0 0.0
    %1998 = vmatpush.msra.mxu0 0.0
    %1999 = vmatpush.msra.mxu0 0.0
    %2000 = vmatpush.msra.mxu0 0.0
    %2001 = vmatpush.msra.mxu0 0.0
    %2002 = vmatpush.msra.mxu0 0.0
    %2003 = vmatpush.msra.mxu0 %v1987
    %2004 = vmatpush.msra.mxu0 %v1986
    %2005 = vmatpush.msra.mxu0 %v1985
    %2006 = vmatpush.msra.mxu0 %v1984
    %2007 = vmatmul.f32.gmra.mxu0 %v1989
    %v2008 = vpop.f32.mrf.mxu0
    %v2009 = vadd.f32 0.0, %v2008
    %2010 = vdwg.mxu0
    %v2011 = vadd.f32 %v1970, %v2009
    %s2012 = scalar_lea.vmem [#allocation2], 13
    %v2013 = vld [vmem:[%s2012] ss:$32 sm:$0x1]
    %v2014 = vld [vmem:[%s2012] ss:$32 sm:$0x2]
    %v2015 = vor.u32 %v2013, %v2014
    %v2016 = vld [vmem:[%s2012] ss:$32 sm:$0x4]
    %v2017 = vor.u32 %v2015, %v2016
    %v2018 = vld [vmem:[%s2012] ss:$32 sm:$0x8]
    %v2019 = vor.u32 %v2017, %v2018
    %v2020 = vld [vmem:[%s2012] ss:$32 sm:$0x10]
    %v2021 = vor.u32 %v2019, %v2020
    %v2022 = vld [vmem:[%s2012] ss:$32 sm:$0x20]
    %v2023 = vor.u32 %v2021, %v2022
    %s2024 = scalar_lea.vmem [#allocation6], 416
    %v2025 = vld [vmem:[%s2024] sm:$0xff]
    %v2026 = vld [vmem:[%s2024 + $0x8] sm:$0xff]
    %v2027 = vld [vmem:[%s2024 + $0x10] sm:$0xff]
    %v2028 = vld [vmem:[%s2024 + $0x18] sm:$0xff]
    %v2030 = vsel %vm255, %v2023, 0
    %2032 = vmatpush.msra.mxu0 0.0
    %2033 = vmatpush.msra.mxu0 0.0
    %2034 = vmatpush.msra.mxu0 0.0
    %2035 = vmatpush.msra.mxu0 0.0
    %2036 = vmatpush.msra.mxu0 0.0
    %2037 = vmatpush.msra.mxu0 0.0
    %2038 = vmatpush.msra.mxu0 0.0
    %2039 = vmatpush.msra.mxu0 0.0
    %2040 = vmatpush.msra.mxu0 0.0
    %2041 = vmatpush.msra.mxu0 0.0
    %2042 = vmatpush.msra.mxu0 0.0
    %2043 = vmatpush.msra.mxu0 0.0
    %2044 = vmatpush.msra.mxu0 %v2028
    %2045 = vmatpush.msra.mxu0 %v2027
    %2046 = vmatpush.msra.mxu0 %v2026
    %2047 = vmatpush.msra.mxu0 %v2025
    %2048 = vmatmul.f32.gmra.mxu0 %v2030
    %v2049 = vpop.f32.mrf.mxu0
    %v2050 = vadd.f32 0.0, %v2049
    %2051 = vdwg.mxu0
    %v2052 = vadd.f32 %v2011, %v2050
    %s2053 = scalar_lea.vmem [#allocation2], 14
    %v2054 = vld [vmem:[%s2053] ss:$32 sm:$0x1]
    %v2055 = vld [vmem:[%s2053] ss:$32 sm:$0x2]
    %v2056 = vor.u32 %v2054, %v2055
    %v2057 = vld [vmem:[%s2053] ss:$32 sm:$0x4]
    %v2058 = vor.u32 %v2056, %v2057
    %v2059 = vld [vmem:[%s2053] ss:$32 sm:$0x8]
    %v2060 = vor.u32 %v2058, %v2059
    %v2061 = vld [vmem:[%s2053] ss:$32 sm:$0x10]
    %v2062 = vor.u32 %v2060, %v2061
    %v2063 = vld [vmem:[%s2053] ss:$32 sm:$0x20]
    %v2064 = vor.u32 %v2062, %v2063
    %s2065 = scalar_lea.vmem [#allocation6], 448
    %v2066 = vld [vmem:[%s2065] sm:$0xff]
    %v2067 = vld [vmem:[%s2065 + $0x8] sm:$0xff]
    %v2068 = vld [vmem:[%s2065 + $0x10] sm:$0xff]
    %v2069 = vld [vmem:[%s2065 + $0x18] sm:$0xff]
    %v2071 = vsel %vm255, %v2064, 0
    %2073 = vmatpush.msra.mxu0 0.0
    %2074 = vmatpush.msra.mxu0 0.0
    %2075 = vmatpush.msra.mxu0 0.0
    %2076 = vmatpush.msra.mxu0 0.0
    %2077 = vmatpush.msra.mxu0 0.0
    %2078 = vmatpush.msra.mxu0 0.0
    %2079 = vmatpush.msra.mxu0 0.0
    %2080 = vmatpush.msra.mxu0 0.0
    %2081 = vmatpush.msra.mxu0 0.0
    %2082 = vmatpush.msra.mxu0 0.0
    %2083 = vmatpush.msra.mxu0 0.0
    %2084 = vmatpush.msra.mxu0 0.0
    %2085 = vmatpush.msra.mxu0 %v2069
    %2086 = vmatpush.msra.mxu0 %v2068
    %2087 = vmatpush.msra.mxu0 %v2067
    %2088 = vmatpush.msra.mxu0 %v2066
    %2089 = vmatmul.f32.gmra.mxu0 %v2071
    %v2090 = vpop.f32.mrf.mxu0
    %v2091 = vadd.f32 0.0, %v2090
    %2092 = vdwg.mxu0
    %v2093 = vadd.f32 %v2052, %v2091
    %s2094 = scalar_lea.vmem [#allocation2], 15
    %v2095 = vld [vmem:[%s2094] ss:$32 sm:$0x1]
    %v2096 = vld [vmem:[%s2094] ss:$32 sm:$0x2]
    %v2097 = vor.u32 %v2095, %v2096
    %v2098 = vld [vmem:[%s2094] ss:$32 sm:$0x4]
    %v2099 = vor.u32 %v2097, %v2098
    %v2100 = vld [vmem:[%s2094] ss:$32 sm:$0x8]
    %v2101 = vor.u32 %v2099, %v2100
    %v2102 = vld [vmem:[%s2094] ss:$32 sm:$0x10]
    %v2103 = vor.u32 %v2101, %v2102
    %v2104 = vld [vmem:[%s2094] ss:$32 sm:$0x20]
    %v2105 = vor.u32 %v2103, %v2104
    %s2106 = scalar_lea.vmem [#allocation6], 480
    %v2107 = vld [vmem:[%s2106] sm:$0xff]
    %v2108 = vld [vmem:[%s2106 + $0x8] sm:$0xff]
    %v2109 = vld [vmem:[%s2106 + $0x10] sm:$0xff]
    %v2110 = vld [vmem:[%s2106 + $0x18] sm:$0xff]
    %v2112 = vsel %vm255, %v2105, 0
    %2114 = vmatpush.msra.mxu0 0.0
    %2115 = vmatpush.msra.mxu0 0.0
    %2116 = vmatpush.msra.mxu0 0.0
    %2117 = vmatpush.msra.mxu0 0.0
    %2118 = vmatpush.msra.mxu0 0.0
    %2119 = vmatpush.msra.mxu0 0.0
    %2120 = vmatpush.msra.mxu0 0.0
    %2121 = vmatpush.msra.mxu0 0.0
    %2122 = vmatpush.msra.mxu0 0.0
    %2123 = vmatpush.msra.mxu0 0.0
    %2124 = vmatpush.msra.mxu0 0.0
    %2125 = vmatpush.msra.mxu0 0.0
    %2126 = vmatpush.msra.mxu0 %v2110
    %2127 = vmatpush.msra.mxu0 %v2109
    %2128 = vmatpush.msra.mxu0 %v2108
    %2129 = vmatpush.msra.mxu0 %v2107
    %2130 = vmatmul.f32.gmra.mxu0 %v2112
    %v2131 = vpop.f32.mrf.mxu0
    %v2132 = vadd.f32 0.0, %v2131
    %2133 = vdwg.mxu0
    %v2134 = vadd.f32 %v2093, %v2132
    %s2135 = scalar_lea.vmem [#allocation2], 16
    %v2136 = vld [vmem:[%s2135] ss:$32 sm:$0x1]
    %v2137 = vld [vmem:[%s2135] ss:$32 sm:$0x2]
    %v2138 = vor.u32 %v2136, %v2137
    %v2139 = vld [vmem:[%s2135] ss:$32 sm:$0x4]
    %v2140 = vor.u32 %v2138, %v2139
    %v2141 = vld [vmem:[%s2135] ss:$32 sm:$0x8]
    %v2142 = vor.u32 %v2140, %v2141
    %v2143 = vld [vmem:[%s2135] ss:$32 sm:$0x10]
    %v2144 = vor.u32 %v2142, %v2143
    %v2145 = vld [vmem:[%s2135] ss:$32 sm:$0x20]
    %v2146 = vor.u32 %v2144, %v2145
    %s2147 = scalar_lea.vmem [#allocation6], 512
    %v2148 = vld [vmem:[%s2147] sm:$0xff]
    %v2149 = vld [vmem:[%s2147 + $0x8] sm:$0xff]
    %v2150 = vld [vmem:[%s2147 + $0x10] sm:$0xff]
    %v2151 = vld [vmem:[%s2147 + $0x18] sm:$0xff]
    %v2153 = vsel %vm255, %v2146, 0
    %2155 = vmatpush.msra.mxu0 0.0
    %2156 = vmatpush.msra.mxu0 0.0
    %2157 = vmatpush.msra.mxu0 0.0
    %2158 = vmatpush.msra.mxu0 0.0
    %2159 = vmatpush.msra.mxu0 0.0
    %2160 = vmatpush.msra.mxu0 0.0
    %2161 = vmatpush.msra.mxu0 0.0
    %2162 = vmatpush.msra.mxu0 0.0
    %2163 = vmatpush.msra.mxu0 0.0
    %2164 = vmatpush.msra.mxu0 0.0
    %2165 = vmatpush.msra.mxu0 0.0
    %2166 = vmatpush.msra.mxu0 0.0
    %2167 = vmatpush.msra.mxu0 %v2151
    %2168 = vmatpush.msra.mxu0 %v2150
    %2169 = vmatpush.msra.mxu0 %v2149
    %2170 = vmatpush.msra.mxu0 %v2148
    %2171 = vmatmul.f32.gmra.mxu0 %v2153
    %v2172 = vpop.f32.mrf.mxu0
    %v2173 = vadd.f32 0.0, %v2172
    %2174 = vdwg.mxu0
    %v2175 = vadd.f32 %v2134, %v2173
    %s2176 = scalar_lea.vmem [#allocation2], 17
    %v2177 = vld [vmem:[%s2176] ss:$32 sm:$0x1]
    %v2178 = vld [vmem:[%s2176] ss:$32 sm:$0x2]
    %v2179 = vor.u32 %v2177, %v2178
    %v2180 = vld [vmem:[%s2176] ss:$32 sm:$0x4]
    %v2181 = vor.u32 %v2179, %v2180
    %v2182 = vld [vmem:[%s2176] ss:$32 sm:$0x8]
    %v2183 = vor.u32 %v2181, %v2182
    %v2184 = vld [vmem:[%s2176] ss:$32 sm:$0x10]
    %v2185 = vor.u32 %v2183, %v2184
    %v2186 = vld [vmem:[%s2176] ss:$32 sm:$0x20]
    %v2187 = vor.u32 %v2185, %v2186
    %s2188 = scalar_lea.vmem [#allocation6], 544
    %v2189 = vld [vmem:[%s2188] sm:$0xff]
    %v2190 = vld [vmem:[%s2188 + $0x8] sm:$0xff]
    %v2191 = vld [vmem:[%s2188 + $0x10] sm:$0xff]
    %v2192 = vld [vmem:[%s2188 + $0x18] sm:$0xff]
    %v2194 = vsel %vm255, %v2187, 0
    %2196 = vmatpush.msra.mxu0 0.0
    %2197 = vmatpush.msra.mxu0 0.0
    %2198 = vmatpush.msra.mxu0 0.0
    %2199 = vmatpush.msra.mxu0 0.0
    %2200 = vmatpush.msra.mxu0 0.0
    %2201 = vmatpush.msra.mxu0 0.0
    %2202 = vmatpush.msra.mxu0 0.0
    %2203 = vmatpush.msra.mxu0 0.0
    %2204 = vmatpush.msra.mxu0 0.0
    %2205 = vmatpush.msra.mxu0 0.0
    %2206 = vmatpush.msra.mxu0 0.0
    %2207 = vmatpush.msra.mxu0 0.0
    %2208 = vmatpush.msra.mxu0 %v2192
    %2209 = vmatpush.msra.mxu0 %v2191
    %2210 = vmatpush.msra.mxu0 %v2190
    %2211 = vmatpush.msra.mxu0 %v2189
    %2212 = vmatmul.f32.gmra.mxu0 %v2194
    %v2213 = vpop.f32.mrf.mxu0
    %v2214 = vadd.f32 0.0, %v2213
    %2215 = vdwg.mxu0
    %v2216 = vadd.f32 %v2175, %v2214
    %s2217 = scalar_lea.vmem [#allocation2], 18
    %v2218 = vld [vmem:[%s2217] ss:$32 sm:$0x1]
    %v2219 = vld [vmem:[%s2217] ss:$32 sm:$0x2]
    %v2220 = vor.u32 %v2218, %v2219
    %v2221 = vld [vmem:[%s2217] ss:$32 sm:$0x4]
    %v2222 = vor.u32 %v2220, %v2221
    %v2223 = vld [vmem:[%s2217] ss:$32 sm:$0x8]
    %v2224 = vor.u32 %v2222, %v2223
    %v2225 = vld [vmem:[%s2217] ss:$32 sm:$0x10]
    %v2226 = vor.u32 %v2224, %v2225
    %v2227 = vld [vmem:[%s2217] ss:$32 sm:$0x20]
    %v2228 = vor.u32 %v2226, %v2227
    %s2229 = scalar_lea.vmem [#allocation6], 576
    %v2230 = vld [vmem:[%s2229] sm:$0xff]
    %v2231 = vld [vmem:[%s2229 + $0x8] sm:$0xff]
    %v2232 = vld [vmem:[%s2229 + $0x10] sm:$0xff]
    %v2233 = vld [vmem:[%s2229 + $0x18] sm:$0xff]
    %v2235 = vsel %vm255, %v2228, 0
    %2237 = vmatpush.msra.mxu0 0.0
    %2238 = vmatpush.msra.mxu0 0.0
    %2239 = vmatpush.msra.mxu0 0.0
    %2240 = vmatpush.msra.mxu0 0.0
    %2241 = vmatpush.msra.mxu0 0.0
    %2242 = vmatpush.msra.mxu0 0.0
    %2243 = vmatpush.msra.mxu0 0.0
    %2244 = vmatpush.msra.mxu0 0.0
    %2245 = vmatpush.msra.mxu0 0.0
    %2246 = vmatpush.msra.mxu0 0.0
    %2247 = vmatpush.msra.mxu0 0.0
    %2248 = vmatpush.msra.mxu0 0.0
    %2249 = vmatpush.msra.mxu0 %v2233
    %2250 = vmatpush.msra.mxu0 %v2232
    %2251 = vmatpush.msra.mxu0 %v2231
    %2252 = vmatpush.msra.mxu0 %v2230
    %2253 = vmatmul.f32.gmra.mxu0 %v2235
    %v2254 = vpop.f32.mrf.mxu0
    %v2255 = vadd.f32 0.0, %v2254
    %2256 = vdwg.mxu0
    %v2257 = vadd.f32 %v2216, %v2255
    %s2258 = scalar_lea.vmem [#allocation2], 19
    %v2259 = vld [vmem:[%s2258] ss:$32 sm:$0x1]
    %v2260 = vld [vmem:[%s2258] ss:$32 sm:$0x2]
    %v2261 = vor.u32 %v2259, %v2260
    %v2262 = vld [vmem:[%s2258] ss:$32 sm:$0x4]
    %v2263 = vor.u32 %v2261, %v2262
    %v2264 = vld [vmem:[%s2258] ss:$32 sm:$0x8]
    %v2265 = vor.u32 %v2263, %v2264
    %v2266 = vld [vmem:[%s2258] ss:$32 sm:$0x10]
    %v2267 = vor.u32 %v2265, %v2266
    %v2268 = vld [vmem:[%s2258] ss:$32 sm:$0x20]
    %v2269 = vor.u32 %v2267, %v2268
    %s2270 = scalar_lea.vmem [#allocation6], 608
    %v2271 = vld [vmem:[%s2270] sm:$0xff]
    %v2272 = vld [vmem:[%s2270 + $0x8] sm:$0xff]
    %v2273 = vld [vmem:[%s2270 + $0x10] sm:$0xff]
    %v2274 = vld [vmem:[%s2270 + $0x18] sm:$0xff]
    %v2276 = vsel %vm255, %v2269, 0
    %2278 = vmatpush.msra.mxu0 0.0
    %2279 = vmatpush.msra.mxu0 0.0
    %2280 = vmatpush.msra.mxu0 0.0
    %2281 = vmatpush.msra.mxu0 0.0
    %2282 = vmatpush.msra.mxu0 0.0
    %2283 = vmatpush.msra.mxu0 0.0
    %2284 = vmatpush.msra.mxu0 0.0
    %2285 = vmatpush.msra.mxu0 0.0
    %2286 = vmatpush.msra.mxu0 0.0
    %2287 = vmatpush.msra.mxu0 0.0
    %2288 = vmatpush.msra.mxu0 0.0
    %2289 = vmatpush.msra.mxu0 0.0
    %2290 = vmatpush.msra.mxu0 %v2274
    %2291 = vmatpush.msra.mxu0 %v2273
    %2292 = vmatpush.msra.mxu0 %v2272
    %2293 = vmatpush.msra.mxu0 %v2271
    %2294 = vmatmul.f32.gmra.mxu0 %v2276
    %v2295 = vpop.f32.mrf.mxu0
    %v2296 = vadd.f32 0.0, %v2295
    %2297 = vdwg.mxu0
    %v2298 = vadd.f32 %v2257, %v2296
    %s2299 = scalar_lea.vmem [#allocation2], 20
    %v2300 = vld [vmem:[%s2299] ss:$32 sm:$0x1]
    %v2301 = vld [vmem:[%s2299] ss:$32 sm:$0x2]
    %v2302 = vor.u32 %v2300, %v2301
    %v2303 = vld [vmem:[%s2299] ss:$32 sm:$0x4]
    %v2304 = vor.u32 %v2302, %v2303
    %v2305 = vld [vmem:[%s2299] ss:$32 sm:$0x8]
    %v2306 = vor.u32 %v2304, %v2305
    %v2307 = vld [vmem:[%s2299] ss:$32 sm:$0x10]
    %v2308 = vor.u32 %v2306, %v2307
    %v2309 = vld [vmem:[%s2299] ss:$32 sm:$0x20]
    %v2310 = vor.u32 %v2308, %v2309
    %s2311 = scalar_lea.vmem [#allocation6], 640
    %v2312 = vld [vmem:[%s2311] sm:$0xff]
    %v2313 = vld [vmem:[%s2311 + $0x8] sm:$0xff]
    %v2314 = vld [vmem:[%s2311 + $0x10] sm:$0xff]
    %v2315 = vld [vmem:[%s2311 + $0x18] sm:$0xff]
    %v2317 = vsel %vm255, %v2310, 0
    %2319 = vmatpush.msra.mxu0 0.0
    %2320 = vmatpush.msra.mxu0 0.0
    %2321 = vmatpush.msra.mxu0 0.0
    %2322 = vmatpush.msra.mxu0 0.0
    %2323 = vmatpush.msra.mxu0 0.0
    %2324 = vmatpush.msra.mxu0 0.0
    %2325 = vmatpush.msra.mxu0 0.0
    %2326 = vmatpush.msra.mxu0 0.0
    %2327 = vmatpush.msra.mxu0 0.0
    %2328 = vmatpush.msra.mxu0 0.0
    %2329 = vmatpush.msra.mxu0 0.0
    %2330 = vmatpush.msra.mxu0 0.0
    %2331 = vmatpush.msra.mxu0 %v2315
    %2332 = vmatpush.msra.mxu0 %v2314
    %2333 = vmatpush.msra.mxu0 %v2313
    %2334 = vmatpush.msra.mxu0 %v2312
    %2335 = vmatmul.f32.gmra.mxu0 %v2317
    %v2336 = vpop.f32.mrf.mxu0
    %v2337 = vadd.f32 0.0, %v2336
    %2338 = vdwg.mxu0
    %v2339 = vadd.f32 %v2298, %v2337
    %s2340 = scalar_lea.vmem [#allocation2], 21
    %v2341 = vld [vmem:[%s2340] ss:$32 sm:$0x1]
    %v2342 = vld [vmem:[%s2340] ss:$32 sm:$0x2]
    %v2343 = vor.u32 %v2341, %v2342
    %v2344 = vld [vmem:[%s2340] ss:$32 sm:$0x4]
    %v2345 = vor.u32 %v2343, %v2344
    %v2346 = vld [vmem:[%s2340] ss:$32 sm:$0x8]
    %v2347 = vor.u32 %v2345, %v2346
    %v2348 = vld [vmem:[%s2340] ss:$32 sm:$0x10]
    %v2349 = vor.u32 %v2347, %v2348
    %v2350 = vld [vmem:[%s2340] ss:$32 sm:$0x20]
    %v2351 = vor.u32 %v2349, %v2350
    %s2352 = scalar_lea.vmem [#allocation6], 672
    %v2353 = vld [vmem:[%s2352] sm:$0xff]
    %v2354 = vld [vmem:[%s2352 + $0x8] sm:$0xff]
    %v2355 = vld [vmem:[%s2352 + $0x10] sm:$0xff]
    %v2356 = vld [vmem:[%s2352 + $0x18] sm:$0xff]
    %v2358 = vsel %vm255, %v2351, 0
    %2360 = vmatpush.msra.mxu0 0.0
    %2361 = vmatpush.msra.mxu0 0.0
    %2362 = vmatpush.msra.mxu0 0.0
    %2363 = vmatpush.msra.mxu0 0.0
    %2364 = vmatpush.msra.mxu0 0.0
    %2365 = vmatpush.msra.mxu0 0.0
    %2366 = vmatpush.msra.mxu0 0.0
    %2367 = vmatpush.msra.mxu0 0.0
    %2368 = vmatpush.msra.mxu0 0.0
    %2369 = vmatpush.msra.mxu0 0.0
    %2370 = vmatpush.msra.mxu0 0.0
    %2371 = vmatpush.msra.mxu0 0.0
    %2372 = vmatpush.msra.mxu0 %v2356
    %2373 = vmatpush.msra.mxu0 %v2355
    %2374 = vmatpush.msra.mxu0 %v2354
    %2375 = vmatpush.msra.mxu0 %v2353
    %2376 = vmatmul.f32.gmra.mxu0 %v2358
    %v2377 = vpop.f32.mrf.mxu0
    %v2378 = vadd.f32 0.0, %v2377
    %2379 = vdwg.mxu0
    %v2380 = vadd.f32 %v2339, %v2378
    %s2381 = scalar_lea.vmem [#allocation2], 22
    %v2382 = vld [vmem:[%s2381] ss:$32 sm:$0x1]
    %v2383 = vld [vmem:[%s2381] ss:$32 sm:$0x2]
    %v2384 = vor.u32 %v2382, %v2383
    %v2385 = vld [vmem:[%s2381] ss:$32 sm:$0x4]
    %v2386 = vor.u32 %v2384, %v2385
    %v2387 = vld [vmem:[%s2381] ss:$32 sm:$0x8]
    %v2388 = vor.u32 %v2386, %v2387
    %v2389 = vld [vmem:[%s2381] ss:$32 sm:$0x10]
    %v2390 = vor.u32 %v2388, %v2389
    %v2391 = vld [vmem:[%s2381] ss:$32 sm:$0x20]
    %v2392 = vor.u32 %v2390, %v2391
    %s2393 = scalar_lea.vmem [#allocation6], 704
    %v2394 = vld [vmem:[%s2393] sm:$0xff]
    %v2395 = vld [vmem:[%s2393 + $0x8] sm:$0xff]
    %v2396 = vld [vmem:[%s2393 + $0x10] sm:$0xff]
    %v2397 = vld [vmem:[%s2393 + $0x18] sm:$0xff]
    %v2399 = vsel %vm255, %v2392, 0
    %2401 = vmatpush.msra.mxu0 0.0
    %2402 = vmatpush.msra.mxu0 0.0
    %2403 = vmatpush.msra.mxu0 0.0
    %2404 = vmatpush.msra.mxu0 0.0
    %2405 = vmatpush.msra.mxu0 0.0
    %2406 = vmatpush.msra.mxu0 0.0
    %2407 = vmatpush.msra.mxu0 0.0
    %2408 = vmatpush.msra.mxu0 0.0
    %2409 = vmatpush.msra.mxu0 0.0
    %2410 = vmatpush.msra.mxu0 0.0
    %2411 = vmatpush.msra.mxu0 0.0
    %2412 = vmatpush.msra.mxu0 0.0
    %2413 = vmatpush.msra.mxu0 %v2397
    %2414 = vmatpush.msra.mxu0 %v2396
    %2415 = vmatpush.msra.mxu0 %v2395
    %2416 = vmatpush.msra.mxu0 %v2394
    %2417 = vmatmul.f32.gmra.mxu0 %v2399
    %v2418 = vpop.f32.mrf.mxu0
    %v2419 = vadd.f32 0.0, %v2418
    %2420 = vdwg.mxu0
    %v2421 = vadd.f32 %v2380, %v2419
    %s2422 = scalar_lea.vmem [#allocation2], 23
    %v2423 = vld [vmem:[%s2422] ss:$32 sm:$0x1]
    %v2424 = vld [vmem:[%s2422] ss:$32 sm:$0x2]
    %v2425 = vor.u32 %v2423, %v2424
    %v2426 = vld [vmem:[%s2422] ss:$32 sm:$0x4]
    %v2427 = vor.u32 %v2425, %v2426
    %v2428 = vld [vmem:[%s2422] ss:$32 sm:$0x8]
    %v2429 = vor.u32 %v2427, %v2428
    %v2430 = vld [vmem:[%s2422] ss:$32 sm:$0x10]
    %v2431 = vor.u32 %v2429, %v2430
    %v2432 = vld [vmem:[%s2422] ss:$32 sm:$0x20]
    %v2433 = vor.u32 %v2431, %v2432
    %s2434 = scalar_lea.vmem [#allocation6], 736
    %v2435 = vld [vmem:[%s2434] sm:$0xff]
    %v2436 = vld [vmem:[%s2434 + $0x8] sm:$0xff]
    %v2437 = vld [vmem:[%s2434 + $0x10] sm:$0xff]
    %v2438 = vld [vmem:[%s2434 + $0x18] sm:$0xff]
    %v2440 = vsel %vm255, %v2433, 0
    %2442 = vmatpush.msra.mxu0 0.0
    %2443 = vmatpush.msra.mxu0 0.0
    %2444 = vmatpush.msra.mxu0 0.0
    %2445 = vmatpush.msra.mxu0 0.0
    %2446 = vmatpush.msra.mxu0 0.0
    %2447 = vmatpush.msra.mxu0 0.0
    %2448 = vmatpush.msra.mxu0 0.0
    %2449 = vmatpush.msra.mxu0 0.0
    %2450 = vmatpush.msra.mxu0 0.0
    %2451 = vmatpush.msra.mxu0 0.0
    %2452 = vmatpush.msra.mxu0 0.0
    %2453 = vmatpush.msra.mxu0 0.0
    %2454 = vmatpush.msra.mxu0 %v2438
    %2455 = vmatpush.msra.mxu0 %v2437
    %2456 = vmatpush.msra.mxu0 %v2436
    %2457 = vmatpush.msra.mxu0 %v2435
    %2458 = vmatmul.f32.gmra.mxu0 %v2440
    %v2459 = vpop.f32.mrf.mxu0
    %v2460 = vadd.f32 0.0, %v2459
    %2461 = vdwg.mxu0
    %v2462 = vadd.f32 %v2421, %v2460
    %s2463 = scalar_lea.vmem [#allocation2], 24
    %v2464 = vld [vmem:[%s2463] ss:$32 sm:$0x1]
    %v2465 = vld [vmem:[%s2463] ss:$32 sm:$0x2]
    %v2466 = vor.u32 %v2464, %v2465
    %v2467 = vld [vmem:[%s2463] ss:$32 sm:$0x4]
    %v2468 = vor.u32 %v2466, %v2467
    %v2469 = vld [vmem:[%s2463] ss:$32 sm:$0x8]
    %v2470 = vor.u32 %v2468, %v2469
    %v2471 = vld [vmem:[%s2463] ss:$32 sm:$0x10]
    %v2472 = vor.u32 %v2470, %v2471
    %v2473 = vld [vmem:[%s2463] ss:$32 sm:$0x20]
    %v2474 = vor.u32 %v2472, %v2473
    %s2475 = scalar_lea.vmem [#allocation6], 768
    %v2476 = vld [vmem:[%s2475] sm:$0xff]
    %v2477 = vld [vmem:[%s2475 + $0x8] sm:$0xff]
    %v2478 = vld [vmem:[%s2475 + $0x10] sm:$0xff]
    %v2479 = vld [vmem:[%s2475 + $0x18] sm:$0xff]
    %v2481 = vsel %vm255, %v2474, 0
    %2483 = vmatpush.msra.mxu0 0.0
    %2484 = vmatpush.msra.mxu0 0.0
    %2485 = vmatpush.msra.mxu0 0.0
    %2486 = vmatpush.msra.mxu0 0.0
    %2487 = vmatpush.msra.mxu0 0.0
    %2488 = vmatpush.msra.mxu0 0.0
    %2489 = vmatpush.msra.mxu0 0.0
    %2490 = vmatpush.msra.mxu0 0.0
    %2491 = vmatpush.msra.mxu0 0.0
    %2492 = vmatpush.msra.mxu0 0.0
    %2493 = vmatpush.msra.mxu0 0.0
    %2494 = vmatpush.msra.mxu0 0.0
    %2495 = vmatpush.msra.mxu0 %v2479
    %2496 = vmatpush.msra.mxu0 %v2478
    %2497 = vmatpush.msra.mxu0 %v2477
    %2498 = vmatpush.msra.mxu0 %v2476
    %2499 = vmatmul.f32.gmra.mxu0 %v2481
    %v2500 = vpop.f32.mrf.mxu0
    %v2501 = vadd.f32 0.0, %v2500
    %2502 = vdwg.mxu0
    %v2503 = vadd.f32 %v2462, %v2501
    %s2504 = scalar_lea.vmem [#allocation2], 25
    %v2505 = vld [vmem:[%s2504] ss:$32 sm:$0x1]
    %v2506 = vld [vmem:[%s2504] ss:$32 sm:$0x2]
    %v2507 = vor.u32 %v2505, %v2506
    %v2508 = vld [vmem:[%s2504] ss:$32 sm:$0x4]
    %v2509 = vor.u32 %v2507, %v2508
    %v2510 = vld [vmem:[%s2504] ss:$32 sm:$0x8]
    %v2511 = vor.u32 %v2509, %v2510
    %v2512 = vld [vmem:[%s2504] ss:$32 sm:$0x10]
    %v2513 = vor.u32 %v2511, %v2512
    %v2514 = vld [vmem:[%s2504] ss:$32 sm:$0x20]
    %v2515 = vor.u32 %v2513, %v2514
    %s2516 = scalar_lea.vmem [#allocation6], 800
    %v2517 = vld [vmem:[%s2516] sm:$0xff]
    %v2518 = vld [vmem:[%s2516 + $0x8] sm:$0xff]
    %v2519 = vld [vmem:[%s2516 + $0x10] sm:$0xff]
    %v2520 = vld [vmem:[%s2516 + $0x18] sm:$0xff]
    %v2522 = vsel %vm255, %v2515, 0
    %2524 = vmatpush.msra.mxu0 0.0
    %2525 = vmatpush.msra.mxu0 0.0
    %2526 = vmatpush.msra.mxu0 0.0
    %2527 = vmatpush.msra.mxu0 0.0
    %2528 = vmatpush.msra.mxu0 0.0
    %2529 = vmatpush.msra.mxu0 0.0
    %2530 = vmatpush.msra.mxu0 0.0
    %2531 = vmatpush.msra.mxu0 0.0
    %2532 = vmatpush.msra.mxu0 0.0
    %2533 = vmatpush.msra.mxu0 0.0
    %2534 = vmatpush.msra.mxu0 0.0
    %2535 = vmatpush.msra.mxu0 0.0
    %2536 = vmatpush.msra.mxu0 %v2520
    %2537 = vmatpush.msra.mxu0 %v2519
    %2538 = vmatpush.msra.mxu0 %v2518
    %2539 = vmatpush.msra.mxu0 %v2517
    %2540 = vmatmul.f32.gmra.mxu0 %v2522
    %v2541 = vpop.f32.mrf.mxu0
    %v2542 = vadd.f32 0.0, %v2541
    %2543 = vdwg.mxu0
    %v2544 = vadd.f32 %v2503, %v2542
    %s2545 = scalar_lea.vmem [#allocation2], 26
    %v2546 = vld [vmem:[%s2545] ss:$32 sm:$0x1]
    %v2547 = vld [vmem:[%s2545] ss:$32 sm:$0x2]
    %v2548 = vor.u32 %v2546, %v2547
    %v2549 = vld [vmem:[%s2545] ss:$32 sm:$0x4]
    %v2550 = vor.u32 %v2548, %v2549
    %v2551 = vld [vmem:[%s2545] ss:$32 sm:$0x8]
    %v2552 = vor.u32 %v2550, %v2551
    %v2553 = vld [vmem:[%s2545] ss:$32 sm:$0x10]
    %v2554 = vor.u32 %v2552, %v2553
    %v2555 = vld [vmem:[%s2545] ss:$32 sm:$0x20]
    %v2556 = vor.u32 %v2554, %v2555
    %s2557 = scalar_lea.vmem [#allocation6], 832
    %v2558 = vld [vmem:[%s2557] sm:$0xff]
    %v2559 = vld [vmem:[%s2557 + $0x8] sm:$0xff]
    %v2560 = vld [vmem:[%s2557 + $0x10] sm:$0xff]
    %v2561 = vld [vmem:[%s2557 + $0x18] sm:$0xff]
    %v2563 = vsel %vm255, %v2556, 0
    %2565 = vmatpush.msra.mxu0 0.0
    %2566 = vmatpush.msra.mxu0 0.0
    %2567 = vmatpush.msra.mxu0 0.0
    %2568 = vmatpush.msra.mxu0 0.0
    %2569 = vmatpush.msra.mxu0 0.0
    %2570 = vmatpush.msra.mxu0 0.0
    %2571 = vmatpush.msra.mxu0 0.0
    %2572 = vmatpush.msra.mxu0 0.0
    %2573 = vmatpush.msra.mxu0 0.0
    %2574 = vmatpush.msra.mxu0 0.0
    %2575 = vmatpush.msra.mxu0 0.0
    %2576 = vmatpush.msra.mxu0 0.0
    %2577 = vmatpush.msra.mxu0 %v2561
    %2578 = vmatpush.msra.mxu0 %v2560
    %2579 = vmatpush.msra.mxu0 %v2559
    %2580 = vmatpush.msra.mxu0 %v2558
    %2581 = vmatmul.f32.gmra.mxu0 %v2563
    %v2582 = vpop.f32.mrf.mxu0
    %v2583 = vadd.f32 0.0, %v2582
    %2584 = vdwg.mxu0
    %v2585 = vadd.f32 %v2544, %v2583
    %s2586 = scalar_lea.vmem [#allocation2], 27
    %v2587 = vld [vmem:[%s2586] ss:$32 sm:$0x1]
    %v2588 = vld [vmem:[%s2586] ss:$32 sm:$0x2]
    %v2589 = vor.u32 %v2587, %v2588
    %v2590 = vld [vmem:[%s2586] ss:$32 sm:$0x4]
    %v2591 = vor.u32 %v2589, %v2590
    %v2592 = vld [vmem:[%s2586] ss:$32 sm:$0x8]
    %v2593 = vor.u32 %v2591, %v2592
    %v2594 = vld [vmem:[%s2586] ss:$32 sm:$0x10]
    %v2595 = vor.u32 %v2593, %v2594
    %v2596 = vld [vmem:[%s2586] ss:$32 sm:$0x20]
    %v2597 = vor.u32 %v2595, %v2596
    %s2598 = scalar_lea.vmem [#allocation6], 864
    %v2599 = vld [vmem:[%s2598] sm:$0xff]
    %v2600 = vld [vmem:[%s2598 + $0x8] sm:$0xff]
    %v2601 = vld [vmem:[%s2598 + $0x10] sm:$0xff]
    %v2602 = vld [vmem:[%s2598 + $0x18] sm:$0xff]
    %v2604 = vsel %vm255, %v2597, 0
    %2606 = vmatpush.msra.mxu0 0.0
    %2607 = vmatpush.msra.mxu0 0.0
    %2608 = vmatpush.msra.mxu0 0.0
    %2609 = vmatpush.msra.mxu0 0.0
    %2610 = vmatpush.msra.mxu0 0.0
    %2611 = vmatpush.msra.mxu0 0.0
    %2612 = vmatpush.msra.mxu0 0.0
    %2613 = vmatpush.msra.mxu0 0.0
    %2614 = vmatpush.msra.mxu0 0.0
    %2615 = vmatpush.msra.mxu0 0.0
    %2616 = vmatpush.msra.mxu0 0.0
    %2617 = vmatpush.msra.mxu0 0.0
    %2618 = vmatpush.msra.mxu0 %v2602
    %2619 = vmatpush.msra.mxu0 %v2601
    %2620 = vmatpush.msra.mxu0 %v2600
    %2621 = vmatpush.msra.mxu0 %v2599
    %2622 = vmatmul.f32.gmra.mxu0 %v2604
    %v2623 = vpop.f32.mrf.mxu0
    %v2624 = vadd.f32 0.0, %v2623
    %2625 = vdwg.mxu0
    %v2626 = vadd.f32 %v2585, %v2624
    %s2627 = scalar_lea.vmem [#allocation2], 28
    %v2628 = vld [vmem:[%s2627] ss:$32 sm:$0x1]
    %v2629 = vld [vmem:[%s2627] ss:$32 sm:$0x2]
    %v2630 = vor.u32 %v2628, %v2629
    %v2631 = vld [vmem:[%s2627] ss:$32 sm:$0x4]
    %v2632 = vor.u32 %v2630, %v2631
    %v2633 = vld [vmem:[%s2627] ss:$32 sm:$0x8]
    %v2634 = vor.u32 %v2632, %v2633
    %v2635 = vld [vmem:[%s2627] ss:$32 sm:$0x10]
    %v2636 = vor.u32 %v2634, %v2635
    %v2637 = vld [vmem:[%s2627] ss:$32 sm:$0x20]
    %v2638 = vor.u32 %v2636, %v2637
    %s2639 = scalar_lea.vmem [#allocation6], 896
    %v2640 = vld [vmem:[%s2639] sm:$0xff]
    %v2641 = vld [vmem:[%s2639 + $0x8] sm:$0xff]
    %v2642 = vld [vmem:[%s2639 + $0x10] sm:$0xff]
    %v2643 = vld [vmem:[%s2639 + $0x18] sm:$0xff]
    %v2645 = vsel %vm255, %v2638, 0
    %2647 = vmatpush.msra.mxu0 0.0
    %2648 = vmatpush.msra.mxu0 0.0
    %2649 = vmatpush.msra.mxu0 0.0
    %2650 = vmatpush.msra.mxu0 0.0
    %2651 = vmatpush.msra.mxu0 0.0
    %2652 = vmatpush.msra.mxu0 0.0
    %2653 = vmatpush.msra.mxu0 0.0
    %2654 = vmatpush.msra.mxu0 0.0
    %2655 = vmatpush.msra.mxu0 0.0
    %2656 = vmatpush.msra.mxu0 0.0
    %2657 = vmatpush.msra.mxu0 0.0
    %2658 = vmatpush.msra.mxu0 0.0
    %2659 = vmatpush.msra.mxu0 %v2643
    %2660 = vmatpush.msra.mxu0 %v2642
    %2661 = vmatpush.msra.mxu0 %v2641
    %2662 = vmatpush.msra.mxu0 %v2640
    %2663 = vmatmul.f32.gmra.mxu0 %v2645
    %v2664 = vpop.f32.mrf.mxu0
    %v2665 = vadd.f32 0.0, %v2664
    %2666 = vdwg.mxu0
    %v2667 = vadd.f32 %v2626, %v2665
    %s2668 = scalar_lea.vmem [#allocation2], 29
    %v2669 = vld [vmem:[%s2668] ss:$32 sm:$0x1]
    %v2670 = vld [vmem:[%s2668] ss:$32 sm:$0x2]
    %v2671 = vor.u32 %v2669, %v2670
    %v2672 = vld [vmem:[%s2668] ss:$32 sm:$0x4]
    %v2673 = vor.u32 %v2671, %v2672
    %v2674 = vld [vmem:[%s2668] ss:$32 sm:$0x8]
    %v2675 = vor.u32 %v2673, %v2674
    %v2676 = vld [vmem:[%s2668] ss:$32 sm:$0x10]
    %v2677 = vor.u32 %v2675, %v2676
    %v2678 = vld [vmem:[%s2668] ss:$32 sm:$0x20]
    %v2679 = vor.u32 %v2677, %v2678
    %s2680 = scalar_lea.vmem [#allocation6], 928
    %v2681 = vld [vmem:[%s2680] sm:$0xff]
    %v2682 = vld [vmem:[%s2680 + $0x8] sm:$0xff]
    %v2683 = vld [vmem:[%s2680 + $0x10] sm:$0xff]
    %v2684 = vld [vmem:[%s2680 + $0x18] sm:$0xff]
    %v2686 = vsel %vm255, %v2679, 0
    %2688 = vmatpush.msra.mxu0 0.0
    %2689 = vmatpush.msra.mxu0 0.0
    %2690 = vmatpush.msra.mxu0 0.0
    %2691 = vmatpush.msra.mxu0 0.0
    %2692 = vmatpush.msra.mxu0 0.0
    %2693 = vmatpush.msra.mxu0 0.0
    %2694 = vmatpush.msra.mxu0 0.0
    %2695 = vmatpush.msra.mxu0 0.0
    %2696 = vmatpush.msra.mxu0 0.0
    %2697 = vmatpush.msra.mxu0 0.0
    %2698 = vmatpush.msra.mxu0 0.0
    %2699 = vmatpush.msra.mxu0 0.0
    %2700 = vmatpush.msra.mxu0 %v2684
    %2701 = vmatpush.msra.mxu0 %v2683
    %2702 = vmatpush.msra.mxu0 %v2682
    %2703 = vmatpush.msra.mxu0 %v2681
    %2704 = vmatmul.f32.gmra.mxu0 %v2686
    %v2705 = vpop.f32.mrf.mxu0
    %v2706 = vadd.f32 0.0, %v2705
    %2707 = vdwg.mxu0
    %v2708 = vadd.f32 %v2667, %v2706
    %s2709 = scalar_lea.vmem [#allocation2], 30
    %v2710 = vld [vmem:[%s2709] ss:$32 sm:$0x1]
    %v2711 = vld [vmem:[%s2709] ss:$32 sm:$0x2]
    %v2712 = vor.u32 %v2710, %v2711
    %v2713 = vld [vmem:[%s2709] ss:$32 sm:$0x4]
    %v2714 = vor.u32 %v2712, %v2713
    %v2715 = vld [vmem:[%s2709] ss:$32 sm:$0x8]
    %v2716 = vor.u32 %v2714, %v2715
    %v2717 = vld [vmem:[%s2709] ss:$32 sm:$0x10]
    %v2718 = vor.u32 %v2716, %v2717
    %v2719 = vld [vmem:[%s2709] ss:$32 sm:$0x20]
    %v2720 = vor.u32 %v2718, %v2719
    %s2721 = scalar_lea.vmem [#allocation6], 960
    %v2722 = vld [vmem:[%s2721] sm:$0xff]
    %v2723 = vld [vmem:[%s2721 + $0x8] sm:$0xff]
    %v2724 = vld [vmem:[%s2721 + $0x10] sm:$0xff]
    %v2725 = vld [vmem:[%s2721 + $0x18] sm:$0xff]
    %v2727 = vsel %vm255, %v2720, 0
    %2729 = vmatpush.msra.mxu0 0.0
    %2730 = vmatpush.msra.mxu0 0.0
    %2731 = vmatpush.msra.mxu0 0.0
    %2732 = vmatpush.msra.mxu0 0.0
    %2733 = vmatpush.msra.mxu0 0.0
    %2734 = vmatpush.msra.mxu0 0.0
    %2735 = vmatpush.msra.mxu0 0.0
    %2736 = vmatpush.msra.mxu0 0.0
    %2737 = vmatpush.msra.mxu0 0.0
    %2738 = vmatpush.msra.mxu0 0.0
    %2739 = vmatpush.msra.mxu0 0.0
    %2740 = vmatpush.msra.mxu0 0.0
    %2741 = vmatpush.msra.mxu0 %v2725
    %2742 = vmatpush.msra.mxu0 %v2724
    %2743 = vmatpush.msra.mxu0 %v2723
    %2744 = vmatpush.msra.mxu0 %v2722
    %2745 = vmatmul.f32.gmra.mxu0 %v2727
    %v2746 = vpop.f32.mrf.mxu0
    %v2747 = vadd.f32 0.0, %v2746
    %2748 = vdwg.mxu0
    %v2749 = vadd.f32 %v2708, %v2747
    %s2750 = scalar_lea.vmem [#allocation2], 31
    %v2751 = vld [vmem:[%s2750] ss:$32 sm:$0x1]
    %v2752 = vld [vmem:[%s2750] ss:$32 sm:$0x2]
    %v2753 = vor.u32 %v2751, %v2752
    %v2754 = vld [vmem:[%s2750] ss:$32 sm:$0x4]
    %v2755 = vor.u32 %v2753, %v2754
    %v2756 = vld [vmem:[%s2750] ss:$32 sm:$0x8]
    %v2757 = vor.u32 %v2755, %v2756
    %v2758 = vld [vmem:[%s2750] ss:$32 sm:$0x10]
    %v2759 = vor.u32 %v2757, %v2758
    %v2760 = vld [vmem:[%s2750] ss:$32 sm:$0x20]
    %v2761 = vor.u32 %v2759, %v2760
    %s2762 = scalar_lea.vmem [#allocation6], 992
    %v2763 = vld [vmem:[%s2762] sm:$0xff]
    %v2764 = vld [vmem:[%s2762 + $0x8] sm:$0xff]
    %v2765 = vld [vmem:[%s2762 + $0x10] sm:$0xff]
    %v2766 = vld [vmem:[%s2762 + $0x18] sm:$0xff]
    %v2768 = vsel %vm255, %v2761, 0
    %2770 = vmatpush.msra.mxu0 0.0
    %2771 = vmatpush.msra.mxu0 0.0
    %2772 = vmatpush.msra.mxu0 0.0
    %2773 = vmatpush.msra.mxu0 0.0
    %2774 = vmatpush.msra.mxu0 0.0
    %2775 = vmatpush.msra.mxu0 0.0
    %2776 = vmatpush.msra.mxu0 0.0
    %2777 = vmatpush.msra.mxu0 0.0
    %2778 = vmatpush.msra.mxu0 0.0
    %2779 = vmatpush.msra.mxu0 0.0
    %2780 = vmatpush.msra.mxu0 0.0
    %2781 = vmatpush.msra.mxu0 0.0
    %2782 = vmatpush.msra.mxu0 %v2766
    %2783 = vmatpush.msra.mxu0 %v2765
    %2784 = vmatpush.msra.mxu0 %v2764
    %2785 = vmatpush.msra.mxu0 %v2763
    %2786 = vmatmul.f32.gmra.mxu0 %v2768
    %v2787 = vpop.f32.mrf.mxu0
    %v2788 = vadd.f32 0.0, %v2787
    %2789 = vdwg.mxu0
    %v2790 = vadd.f32 %v2749, %v2788
    %vm2791 = vcmask 259072
    %2792 = vst.msk [vmem:[#allocation3] sm:$0x3f] %vm2791, %v2790
    %v2793 = vld [vmem:[%s10] sm:$0x1]
    %v2794 = vld [vmem:[%s11] sm:$0xff]
    %v2795 = vld [vmem:[%s11 + $0x8] sm:$0xff]
    %v2796 = vld [vmem:[%s11 + $0x10] sm:$0xff]
    %v2797 = vld [vmem:[%s11 + $0x18] sm:$0xff]
    %v2798 = vld [vmem:[%s12] sm:$0xff]
    %v2799 = vld [vmem:[%s12 + $0x8] sm:$0xff]
    %v2800 = vld [vmem:[%s12 + $0x10] sm:$0xff]
    %v2801 = vld [vmem:[%s12 + $0x18] sm:$0xff]
    %v2802 = vld [vmem:[%s13] sm:$0x1]
    %v2803 = vld [vmem:[%s14] sm:$0xff]
    %v2804 = vld [vmem:[%s14 + $0x8] sm:$0xff]
    %v2805 = vld [vmem:[%s14 + $0x10] sm:$0xff]
    %v2806 = vld [vmem:[%s14 + $0x18] sm:$0xff]
    %v2807 = vld [vmem:[%s15] sm:$0xff]
    %v2808 = vld [vmem:[%s15 + $0x8] sm:$0xff]
    %v2809 = vld [vmem:[%s15 + $0x10] sm:$0xff]
    %v2810 = vld [vmem:[%s15 + $0x18] sm:$0xff]
    %v2811 = vld [vmem:[%s15 + $0x20] sm:$0xff]
    %v2812 = vld [vmem:[%s15 + $0x28] sm:$0xff]
    %v2813 = vld [vmem:[%s15 + $0x30] sm:$0xff]
    %v2814 = vld [vmem:[%s15 + $0x38] sm:$0xff]
    %v2815 = vld [vmem:[%s16] sm:$0x1]
    %v2816 = vld [vmem:[%s17] sm:$0xff]
    %v2817 = vld [vmem:[%s17 + $0x8] sm:$0xff]
    %v2818 = vld [vmem:[%s17 + $0x10] sm:$0xff]
    %v2819 = vld [vmem:[%s17 + $0x18] sm:$0xff]
    %v2820 = vld [vmem:[%s18] sm:$0xff]
    %v2821 = vld [vmem:[%s18 + $0x8] sm:$0xff]
    %v2822 = vld [vmem:[%s18 + $0x10] sm:$0xff]
    %v2823 = vld [vmem:[%s18 + $0x18] sm:$0xff]
    %v2824 = vld [vmem:[%s19] sm:$0x1]
    %v2825 = vld [vmem:[%s20] sm:$0xff]
    %v2826 = vld [vmem:[%s20 + $0x8] sm:$0xff]
    %v2827 = vld [vmem:[%s20 + $0x10] sm:$0xff]
    %v2828 = vld [vmem:[%s20 + $0x18] sm:$0xff]
    %v2829 = vld [vmem:[%s21] sm:$0xff]
    %v2830 = vld [vmem:[%s21 + $0x8] sm:$0xff]
    %v2831 = vld [vmem:[%s21 + $0x10] sm:$0xff]
    %v2832 = vld [vmem:[%s21 + $0x18] sm:$0xff]
    %v2833 = vld [vmem:[%s21 + $0x20] sm:$0xff]
    %v2834 = vld [vmem:[%s21 + $0x28] sm:$0xff]
    %v2835 = vld [vmem:[%s21 + $0x30] sm:$0xff]
    %v2836 = vld [vmem:[%s21 + $0x38] sm:$0xff]
    %v2837 = vld [vmem:[%s22] sm:$0x1]
    %v2838 = vld [vmem:[%s23] sm:$0x1]
    %v2839 = vld [vmem:[%s24] sm:$0xff]
    %v2840 = vld [vmem:[%s24 + $0x8] sm:$0xff]
    %v2841 = vld [vmem:[%s24 + $0x10] sm:$0xff]
    %v2842 = vld [vmem:[%s24 + $0x18] sm:$0xff]
    %v2843 = vld [vmem:[%s25] sm:$0x1]
    %v2844 = vld [vmem:[%s8] sm:$0x1]
    %v2845 = vld [vmem:[%s9] sm:$0x1]
    %v2846 = vadd.f32 %v2844, %v2845
    %vm2847 = vcmask 253952
    %2848 = vst.msk [vmem:[#allocation4] sm:$0x1] %vm2847, %v2846
    %v2849 = vld [vmem:[#allocation3] sm:$0x7]
    %v2850 = vld [vmem:[%s9 + $0x1] sm:$0x7]
    %v2851 = vadd.f32 %v2849, %v2850
    %vm2852 = vcmask 256000
    %2853 = vst.msk [vmem:[#allocation4 + $0x1] sm:$0x7] %vm2852, %v2851
    %v2854 = vld [vmem:[#allocation4] sm:$0xf]
    %vm2855 = vcmask 257024
    %v2856 = vsel %vm2855, %v2854, 0.0
    %2857 = vadd.xlane.f32.xlu0 %v2856
    %v2858 = vpop.xlane.xlu0 %2857
    %v2859 = vrcp.pop 32.0
    %v2860 = vmul.f32 32.0, %v2859
    %v2861 = vsub.f32 1.0, %v2860
    %v2862 = vmul.f32 %v2859, %v2861
    %v2863 = vadd.f32 %v2859, %v2862
    %vm2864 = vweird.f32 %v2859
    %v2865 = vsel %vm2864, %v2859, %v2863
    %v2866 = vmul.f32 %v2858, %v2865
    %v2867 = vsub.f32 %v2854, %v2866
    %v2868 = vmul.f32 %v2867, %v2867
    %v2869 = vsel %vm2855, %v2868, 0.0
    %2870 = vadd.xlane.f32.xlu0 %v2869
    %v2871 = vpop.xlane.xlu0 %2870
    %v2872 = vmul.f32 %v2871, %v2865
    %v2873 = vadd.f32 %v2872, 1e-05
    %v2874 = vrsqrt.pop %v2873
    %v2875 = vmul.f32 %v2874, %v2873
    %v2876 = vmul.f32 %v2875, %v2874
    %v2877 = vmul.f32 0.5, %v2876
    %v2878 = vsub.f32 1.5, %v2877
    %v2879 = vmul.f32 %v2874, %v2878
    %vm2880 = vweird.f32 %v2873
    %vm2881 = vweird.f32 %v2874
    %vm2882 = vmor %vm2880, %vm2881
    %v2883 = vsel %vm2882, %v2874, %v2879
    %v2884 = vmul.f32 %v2867, %v2883
    %v2886 = vperm.slane %v2793, 0
    %v2888 = vmul.f32 %v2884, %v2886
    %v2890 = vsel %vm255, %v2888, 0
    %2892 = vmatpush.msra.mxu0 0.0
    %2893 = vmatpush.msra.mxu0 0.0
    %2894 = vmatpush.msra.mxu0 0.0
    %2895 = vmatpush.msra.mxu0 0.0
    %2896 = vmatpush.msra.mxu0 0.0
    %2897 = vmatpush.msra.mxu0 0.0
    %2898 = vmatpush.msra.mxu0 0.0
    %2899 = vmatpush.msra.mxu0 0.0
    %2900 = vmatpush.msra.mxu0 0.0
    %2901 = vmatpush.msra.mxu0 0.0
    %2902 = vmatpush.msra.mxu0 0.0
    %2903 = vmatpush.msra.mxu0 0.0
    %2904 = vmatpush.msra.mxu0 %v2797
    %2905 = vmatpush.msra.mxu0 %v2796
    %2906 = vmatpush.msra.mxu0 %v2795
    %2907 = vmatpush.msra.mxu0 %v2794
    %2908 = vmatmul.f32.gmra.mxu0 %v2890
    %v2909 = vpop.f32.mrf.mxu0
    %v2910 = vadd.f32 0.0, %v2909
    %2911 = vdwg.mxu0
    %2913 = vrot.lane.b32.xlu0 %v2910, 96
    %v2914 = vpop.permute.xlu0 %2913
    %vm2915 = vcmask 130048
    %v2916 = vsel %vm2915, %v2910, 0
    %v2918 = vsel %vm2915, %v2914, 0
    %2920 = vmatpush.xpose.msra.mxu0 0.0
    %2921 = vmatpush.xpose.msra.mxu0 0.0
    %2922 = vmatpush.xpose.msra.mxu0 0.0
    %2923 = vmatpush.xpose.msra.mxu0 0.0
    %2924 = vmatpush.xpose.msra.mxu0 0.0
    %2925 = vmatpush.xpose.msra.mxu0 0.0
    %2926 = vmatpush.xpose.msra.mxu0 0.0
    %2927 = vmatpush.xpose.msra.mxu0 0.0
    %2928 = vmatpush.xpose.msra.mxu0 0.0
    %2929 = vmatpush.xpose.msra.mxu0 0.0
    %2930 = vmatpush.xpose.msra.mxu0 0.0
    %2931 = vmatpush.xpose.msra.mxu0 0.0
    %2932 = vmatpush.xpose.msra.mxu0 0.0
    %2933 = vmatpush.xpose.msra.mxu0 0.0
    %2934 = vmatpush.xpose.msra.mxu0 0.0
    %2935 = vmatpush.xpose.msra.mxu0 %v2918
    %2936 = vmatmul.f32.gmra.mxu0 %v2916
    %v2937 = vpop.f32.mrf.mxu0
    %v2938 = vadd.f32 0.0, %v2937
    %2939 = vdwg.mxu0
    %v2940 = vmul.f32 %v2938, 0.25
    %vm2941 = vcmask 27648
    %v2942 = vsel %vm2941, %v2940, -inf
    %2943 = vmax.xlane.f32.xlu0 %v2942
    %v2944 = vpop.xlane.xlu0 %2943
    %v2945 = vsub.f32 %v2940, %v2944
    %v2946 = vmul.f32 %v2945, 1.442695
    %v2947 = vpow.pop %v2946
    %v2948 = vsel %vm2941, %v2947, 0.0
    %2949 = vadd.xlane.f32.xlu0 %v2948
    %v2950 = vpop.xlane.xlu0 %2949
    %v2951 = vrcp.pop %v2950
    %v2952 = vmul.f32 %v2950, %v2951
    %v2953 = vsub.f32 1.0, %v2952
    %v2954 = vmul.f32 %v2951, %v2953
    %v2955 = vadd.f32 %v2951, %v2954
    %vm2956 = vweird.f32 %v2950
    %vm2957 = vweird.f32 %v2951
    %vm2958 = vmor %vm2956, %vm2957
    %v2959 = vsel %vm2958, %v2951, %v2955
    %v2960 = vand.u32 2147483647, %v2950
    %vm2961 = vcmp.eq.f32.partialorder %v2960, 8.507059e+37
    %v2962 = vand.u32 %v2950, 2147483648
    %v2963 = vor.u32 1.1754944e-38, %v2962
    %v2964 = vsel %vm2961, %v2963, %v2959
    %v2965 = vmul.f32 %v2947, %v2964
    %2966 = vrot.lane.b32.xlu0 %v2910, 64
    %v2967 = vpop.permute.xlu0 %2966
    %v2969 = vsel %vm201, %v2965, 0
    %vm2971 = vcmask 1043456
    %v2972 = vsel %vm2971, %v2967, 0
    %2974 = vmatpush.msra.mxu0 0.0
    %2975 = vmatpush.msra.mxu0 0.0
    %2976 = vmatpush.msra.mxu0 0.0
    %2977 = vmatpush.msra.mxu0 0.0
    %2978 = vmatpush.msra.mxu0 0.0
    %2979 = vmatpush.msra.mxu0 0.0
    %2980 = vmatpush.msra.mxu0 0.0
    %2981 = vmatpush.msra.mxu0 0.0
    %2982 = vmatpush.msra.mxu0 0.0
    %2983 = vmatpush.msra.mxu0 0.0
    %2984 = vmatpush.msra.mxu0 0.0
    %2985 = vmatpush.msra.mxu0 0.0
    %2986 = vmatpush.msra.mxu0 0.0
    %2987 = vmatpush.msra.mxu0 0.0
    %2988 = vmatpush.msra.mxu0 0.0
    %2989 = vmatpush.msra.mxu0 %v2972
    %2990 = vmatmul.f32.gmra.mxu0 %v2969
    %v2991 = vpop.f32.mrf.mxu0
    %v2992 = vadd.f32 0.0, %v2991
    %2993 = vdwg.mxu0
    %vm2994 = vcmask 125952
    %2995 = vst.msk [vmem:[#allocation5] sm:$0xf] %vm2994, %v2992
    %2996 = vrot.lane.b32.xlu0 %v2910, 112
    %v2997 = vpop.permute.xlu0 %2996
    %2998 = vrot.lane.b32.xlu0 %v2910, 80
    %v2999 = vpop.permute.xlu0 %2998
    %v3000 = vsel %vm2915, %v2997, 0
    %v3002 = vsel %vm2915, %v2999, 0
    %3004 = vmatpush.xpose.msra.mxu0 0.0
    %3005 = vmatpush.xpose.msra.mxu0 0.0
    %3006 = vmatpush.xpose.msra.mxu0 0.0
    %3007 = vmatpush.xpose.msra.mxu0 0.0
    %3008 = vmatpush.xpose.msra.mxu0 0.0
    %3009 = vmatpush.xpose.msra.mxu0 0.0
    %3010 = vmatpush.xpose.msra.mxu0 0.0
    %3011 = vmatpush.xpose.msra.mxu0 0.0
    %3012 = vmatpush.xpose.msra.mxu0 0.0
    %3013 = vmatpush.xpose.msra.mxu0 0.0
    %3014 = vmatpush.xpose.msra.mxu0 0.0
    %3015 = vmatpush.xpose.msra.mxu0 0.0
    %3016 = vmatpush.xpose.msra.mxu0 0.0
    %3017 = vmatpush.xpose.msra.mxu0 0.0
    %3018 = vmatpush.xpose.msra.mxu0 0.0
    %3019 = vmatpush.xpose.msra.mxu0 %v3002
    %3020 = vmatmul.f32.gmra.mxu0 %v3000
    %v3021 = vpop.f32.mrf.mxu0
    %v3022 = vadd.f32 0.0, %v3021
    %3023 = vdwg.mxu0
    %v3024 = vmul.f32 %v3022, 0.25
    %v3025 = vsel %vm2941, %v3024, -inf
    %3026 = vmax.xlane.f32.xlu0 %v3025
    %v3027 = vpop.xlane.xlu0 %3026
    %v3028 = vsub.f32 %v3024, %v3027
    %v3029 = vmul.f32 %v3028, 1.442695
    %v3030 = vpow.pop %v3029
    %v3031 = vsel %vm2941, %v3030, 0.0
    %3032 = vadd.xlane.f32.xlu0 %v3031
    %v3033 = vpop.xlane.xlu0 %3032
    %v3034 = vrcp.pop %v3033
    %v3035 = vmul.f32 %v3033, %v3034
    %v3036 = vsub.f32 1.0, %v3035
    %v3037 = vmul.f32 %v3034, %v3036
    %v3038 = vadd.f32 %v3034, %v3037
    %vm3039 = vweird.f32 %v3033
    %vm3040 = vweird.f32 %v3034
    %vm3041 = vmor %vm3039, %vm3040
    %v3042 = vsel %vm3041, %v3034, %v3038
    %v3043 = vand.u32 2147483647, %v3033
    %vm3044 = vcmp.eq.f32.partialorder %v3043, 8.507059e+37
    %v3045 = vand.u32 %v3033, 2147483648
    %v3046 = vor.u32 1.1754944e-38, %v3045
    %v3047 = vsel %vm3044, %v3046, %v3042
    %v3048 = vmul.f32 %v3030, %v3047
    %3049 = vrot.lane.b32.xlu0 %v2910, 48
    %v3050 = vpop.permute.xlu0 %3049
    %v3052 = vsel %vm201, %v3048, 0
    %v3054 = vsel %vm2971, %v3050, 0
    %3056 = vmatpush.msra.mxu0 0.0
    %3057 = vmatpush.msra.mxu0 0.0
    %3058 = vmatpush.msra.mxu0 0.0
    %3059 = vmatpush.msra.mxu0 0.0
    %3060 = vmatpush.msra.mxu0 0.0
    %3061 = vmatpush.msra.mxu0 0.0
    %3062 = vmatpush.msra.mxu0 0.0
    %3063 = vmatpush.msra.mxu0 0.0
    %3064 = vmatpush.msra.mxu0 0.0
    %3065 = vmatpush.msra.mxu0 0.0
    %3066 = vmatpush.msra.mxu0 0.0
    %3067 = vmatpush.msra.mxu0 0.0
    %3068 = vmatpush.msra.mxu0 0.0
    %3069 = vmatpush.msra.mxu0 0.0
    %3070 = vmatpush.msra.mxu0 0.0
    %3071 = vmatpush.msra.mxu0 %v3054
    %3072 = vmatmul.f32.gmra.mxu0 %v3052
    %v3073 = vpop.f32.mrf.mxu0
    %v3074 = vadd.f32 0.0, %v3073
    %3075 = vdwg.mxu0
    %3077 = vrot.lane.b32.xlu0 %v3074, 16
    %v3078 = vpop.permute.xlu0 %3077
    %vm3080 = vcmask 257152
    %3081 = vst.msk [vmem:[#allocation5] sm:$0xf] %vm3080, %v3078
    %v3082 = vld [vmem:[#allocation5] sm:$0xf]
    %v3084 = vsel %vm255, %v3082, 0
    %3086 = vmatpush.msra.mxu0 0.0
    %3087 = vmatpush.msra.mxu0 0.0
    %3088 = vmatpush.msra.mxu0 0.0
    %3089 = vmatpush.msra.mxu0 0.0
    %3090 = vmatpush.msra.mxu0 0.0
    %3091 = vmatpush.msra.mxu0 0.0
    %3092 = vmatpush.msra.mxu0 0.0
    %3093 = vmatpush.msra.mxu0 0.0
    %3094 = vmatpush.msra.mxu0 0.0
    %3095 = vmatpush.msra.mxu0 0.0
    %3096 = vmatpush.msra.mxu0 0.0
    %3097 = vmatpush.msra.mxu0 0.0
    %3098 = vmatpush.msra.mxu0 %v2801
    %3099 = vmatpush.msra.mxu0 %v2800
    %3100 = vmatpush.msra.mxu0 %v2799
    %3101 = vmatpush.msra.mxu0 %v2798
    %3102 = vmatmul.f32.gmra.mxu0 %v3084
    %v3103 = vpop.f32.mrf.mxu0
    %v3104 = vadd.f32 0.0, %v3103
    %3105 = vdwg.mxu0
    %v3106 = vadd.f32 %v2854, %v3104
    %v3107 = vsel %vm2855, %v3106, 0.0
    %3108 = vadd.xlane.f32.xlu0 %v3107
    %v3109 = vpop.xlane.xlu0 %3108
    %v3110 = vmul.f32 %v3109, %v2865
    %v3111 = vsub.f32 %v3106, %v3110
    %v3112 = vmul.f32 %v3111, %v3111
    %v3113 = vsel %vm2855, %v3112, 0.0
    %3114 = vadd.xlane.f32.xlu0 %v3113
    %v3115 = vpop.xlane.xlu0 %3114
    %v3116 = vmul.f32 %v3115, %v2865
    %v3117 = vadd.f32 %v3116, 1e-05
    %v3118 = vrsqrt.pop %v3117
    %v3119 = vmul.f32 %v3118, %v3117
    %v3120 = vmul.f32 %v3119, %v3118
    %v3121 = vmul.f32 0.5, %v3120
    %v3122 = vsub.f32 1.5, %v3121
    %v3123 = vmul.f32 %v3118, %v3122
    %vm3124 = vweird.f32 %v3117
    %vm3125 = vweird.f32 %v3118
    %vm3126 = vmor %vm3124, %vm3125
    %v3127 = vsel %vm3126, %v3118, %v3123
    %v3128 = vmul.f32 %v3111, %v3127
    %v3130 = vperm.slane %v2802, 0
    %v3132 = vmul.f32 %v3128, %v3130
    %v3134 = vsel %vm255, %v3132, 0
    %3136 = vmatpush.msra.mxu0 0.0
    %3137 = vmatpush.msra.mxu0 0.0
    %3138 = vmatpush.msra.mxu0 0.0
    %3139 = vmatpush.msra.mxu0 0.0
    %3140 = vmatpush.msra.mxu0 0.0
    %3141 = vmatpush.msra.mxu0 0.0
    %3142 = vmatpush.msra.mxu0 0.0
    %3143 = vmatpush.msra.mxu0 0.0
    %3144 = vmatpush.msra.mxu0 0.0
    %3145 = vmatpush.msra.mxu0 0.0
    %3146 = vmatpush.msra.mxu0 0.0
    %3147 = vmatpush.msra.mxu0 0.0
    %3148 = vmatpush.msra.mxu0 %v2806
    %3149 = vmatpush.msra.mxu0 %v2805
    %3150 = vmatpush.msra.mxu0 %v2804
    %3151 = vmatpush.msra.mxu0 %v2803
    %3152 = vmatmul.f32.gmra.mxu0 %v3134
    %v3153 = vpop.f32.mrf.mxu0
    %v3154 = vadd.f32 0.0, %v3153
    %3155 = vdwg.mxu0
    %v3156 = vmax.f32 %v3154, 0.0
    %vm3157 = vcmask 523264
    %v3159 = vsel %vm3157, %v3156, 0
    %3161 = vmatpush.msra.mxu0 0.0
    %3162 = vmatpush.msra.mxu0 0.0
    %3163 = vmatpush.msra.mxu0 0.0
    %3164 = vmatpush.msra.mxu0 0.0
    %3165 = vmatpush.msra.mxu0 0.0
    %3166 = vmatpush.msra.mxu0 0.0
    %3167 = vmatpush.msra.mxu0 0.0
    %3168 = vmatpush.msra.mxu0 0.0
    %3169 = vmatpush.msra.mxu0 %v2814
    %3170 = vmatpush.msra.mxu0 %v2813
    %3171 = vmatpush.msra.mxu0 %v2812
    %3172 = vmatpush.msra.mxu0 %v2811
    %3173 = vmatpush.msra.mxu0 %v2810
    %3174 = vmatpush.msra.mxu0 %v2809
    %3175 = vmatpush.msra.mxu0 %v2808
    %3176 = vmatpush.msra.mxu0 %v2807
    %3177 = vmatmul.f32.gmra.mxu0 %v3159
    %v3178 = vpop.f32.mrf.mxu0
    %v3179 = vadd.f32 0.0, %v3178
    %3180 = vdwg.mxu0
    %v3181 = vadd.f32 %v3106, %v3179
    %v3182 = vsel %vm2855, %v3181, 0.0
    %3183 = vadd.xlane.f32.xlu0 %v3182
    %v3184 = vpop.xlane.xlu0 %3183
    %v3185 = vmul.f32 %v3184, %v2865
    %v3186 = vsub.f32 %v3181, %v3185
    %v3187 = vmul.f32 %v3186, %v3186
    %v3188 = vsel %vm2855, %v3187, 0.0
    %3189 = vadd.xlane.f32.xlu0 %v3188
    %v3190 = vpop.xlane.xlu0 %3189
    %v3191 = vmul.f32 %v3190, %v2865
    %v3192 = vadd.f32 %v3191, 1e-05
    %v3193 = vrsqrt.pop %v3192
    %v3194 = vmul.f32 %v3193, %v3192
    %v3195 = vmul.f32 %v3194, %v3193
    %v3196 = vmul.f32 0.5, %v3195
    %v3197 = vsub.f32 1.5, %v3196
    %v3198 = vmul.f32 %v3193, %v3197
    %vm3199 = vweird.f32 %v3192
    %vm3200 = vweird.f32 %v3193
    %vm3201 = vmor %vm3199, %vm3200
    %v3202 = vsel %vm3201, %v3193, %v3198
    %v3203 = vmul.f32 %v3186, %v3202
    %v3205 = vperm.slane %v2815, 0
    %v3207 = vmul.f32 %v3203, %v3205
    %v3209 = vsel %vm255, %v3207, 0
    %3211 = vmatpush.msra.mxu0 0.0
    %3212 = vmatpush.msra.mxu0 0.0
    %3213 = vmatpush.msra.mxu0 0.0
    %3214 = vmatpush.msra.mxu0 0.0
    %3215 = vmatpush.msra.mxu0 0.0
    %3216 = vmatpush.msra.mxu0 0.0
    %3217 = vmatpush.msra.mxu0 0.0
    %3218 = vmatpush.msra.mxu0 0.0
    %3219 = vmatpush.msra.mxu0 0.0
    %3220 = vmatpush.msra.mxu0 0.0
    %3221 = vmatpush.msra.mxu0 0.0
    %3222 = vmatpush.msra.mxu0 0.0
    %3223 = vmatpush.msra.mxu0 %v2819
    %3224 = vmatpush.msra.mxu0 %v2818
    %3225 = vmatpush.msra.mxu0 %v2817
    %3226 = vmatpush.msra.mxu0 %v2816
    %3227 = vmatmul.f32.gmra.mxu0 %v3209
    %v3228 = vpop.f32.mrf.mxu0
    %v3229 = vadd.f32 0.0, %v3228
    %3230 = vdwg.mxu0
    %3232 = vrot.lane.b32.xlu0 %v3229, 96
    %v3233 = vpop.permute.xlu0 %3232
    %v3234 = vsel %vm2915, %v3229, 0
    %v3236 = vsel %vm2915, %v3233, 0
    %3238 = vmatpush.xpose.msra.mxu0 0.0
    %3239 = vmatpush.xpose.msra.mxu0 0.0
    %3240 = vmatpush.xpose.msra.mxu0 0.0
    %3241 = vmatpush.xpose.msra.mxu0 0.0
    %3242 = vmatpush.xpose.msra.mxu0 0.0
    %3243 = vmatpush.xpose.msra.mxu0 0.0
    %3244 = vmatpush.xpose.msra.mxu0 0.0
    %3245 = vmatpush.xpose.msra.mxu0 0.0
    %3246 = vmatpush.xpose.msra.mxu0 0.0
    %3247 = vmatpush.xpose.msra.mxu0 0.0
    %3248 = vmatpush.xpose.msra.mxu0 0.0
    %3249 = vmatpush.xpose.msra.mxu0 0.0
    %3250 = vmatpush.xpose.msra.mxu0 0.0
    %3251 = vmatpush.xpose.msra.mxu0 0.0
    %3252 = vmatpush.xpose.msra.mxu0 0.0
    %3253 = vmatpush.xpose.msra.mxu0 %v3236
    %3254 = vmatmul.f32.gmra.mxu0 %v3234
    %v3255 = vpop.f32.mrf.mxu0
    %v3256 = vadd.f32 0.0, %v3255
    %3257 = vdwg.mxu0
    %v3258 = vmul.f32 %v3256, 0.25
    %v3259 = vsel %vm2941, %v3258, -inf
    %3260 = vmax.xlane.f32.xlu0 %v3259
    %v3261 = vpop.xlane.xlu0 %3260
    %v3262 = vsub.f32 %v3258, %v3261
    %v3263 = vmul.f32 %v3262, 1.442695
    %v3264 = vpow.pop %v3263
    %v3265 = vsel %vm2941, %v3264, 0.0
    %3266 = vadd.xlane.f32.xlu0 %v3265
    %v3267 = vpop.xlane.xlu0 %3266
    %v3268 = vrcp.pop %v3267
    %v3269 = vmul.f32 %v3267, %v3268
    %v3270 = vsub.f32 1.0, %v3269
    %v3271 = vmul.f32 %v3268, %v3270
    %v3272 = vadd.f32 %v3268, %v3271
    %vm3273 = vweird.f32 %v3267
    %vm3274 = vweird.f32 %v3268
    %vm3275 = vmor %vm3273, %vm3274
    %v3276 = vsel %vm3275, %v3268, %v3272
    %v3277 = vand.u32 2147483647, %v3267
    %vm3278 = vcmp.eq.f32.partialorder %v3277, 8.507059e+37
    %v3279 = vand.u32 %v3267, 2147483648
    %v3280 = vor.u32 1.1754944e-38, %v3279
    %v3281 = vsel %vm3278, %v3280, %v3276
    %v3282 = vmul.f32 %v3264, %v3281
    %3283 = vrot.lane.b32.xlu0 %v3229, 64
    %v3284 = vpop.permute.xlu0 %3283
    %v3286 = vsel %vm201, %v3282, 0
    %v3288 = vsel %vm2971, %v3284, 0
    %3290 = vmatpush.msra.mxu0 0.0
    %3291 = vmatpush.msra.mxu0 0.0
    %3292 = vmatpush.msra.mxu0 0.0
    %3293 = vmatpush.msra.mxu0 0.0
    %3294 = vmatpush.msra.mxu0 0.0
    %3295 = vmatpush.msra.mxu0 0.0
    %3296 = vmatpush.msra.mxu0 0.0
    %3297 = vmatpush.msra.mxu0 0.0
    %3298 = vmatpush.msra.mxu0 0.0
    %3299 = vmatpush.msra.mxu0 0.0
    %3300 = vmatpush.msra.mxu0 0.0
    %3301 = vmatpush.msra.mxu0 0.0
    %3302 = vmatpush.msra.mxu0 0.0
    %3303 = vmatpush.msra.mxu0 0.0
    %3304 = vmatpush.msra.mxu0 0.0
    %3305 = vmatpush.msra.mxu0 %v3288
    %3306 = vmatmul.f32.gmra.mxu0 %v3286
    %v3307 = vpop.f32.mrf.mxu0
    %v3308 = vadd.f32 0.0, %v3307
    %3309 = vdwg.mxu0
    %3310 = vst.msk [vmem:[#allocation5] sm:$0xf] %vm2994, %v3308
    %3311 = vrot.lane.b32.xlu0 %v3229, 112
    %v3312 = vpop.permute.xlu0 %3311
    %3313 = vrot.lane.b32.xlu0 %v3229, 80
    %v3314 = vpop.permute.xlu0 %3313
    %v3315 = vsel %vm2915, %v3312, 0
    %v3317 = vsel %vm2915, %v3314, 0
    %3319 = vmatpush.xpose.msra.mxu0 0.0
    %3320 = vmatpush.xpose.msra.mxu0 0.0
    %3321 = vmatpush.xpose.msra.mxu0 0.0
    %3322 = vmatpush.xpose.msra.mxu0 0.0
    %3323 = vmatpush.xpose.msra.mxu0 0.0
    %3324 = vmatpush.xpose.msra.mxu0 0.0
    %3325 = vmatpush.xpose.msra.mxu0 0.0
    %3326 = vmatpush.xpose.msra.mxu0 0.0
    %3327 = vmatpush.xpose.msra.mxu0 0.0
    %3328 = vmatpush.xpose.msra.mxu0 0.0
    %3329 = vmatpush.xpose.msra.mxu0 0.0
    %3330 = vmatpush.xpose.msra.mxu0 0.0
    %3331 = vmatpush.xpose.msra.mxu0 0.0
    %3332 = vmatpush.xpose.msra.mxu0 0.0
    %3333 = vmatpush.xpose.msra.mxu0 0.0
    %3334 = vmatpush.xpose.msra.mxu0 %v3317
    %3335 = vmatmul.f32.gmra.mxu0 %v3315
    %v3336 = vpop.f32.mrf.mxu0
    %v3337 = vadd.f32 0.0, %v3336
    %3338 = vdwg.mxu0
    %v3339 = vmul.f32 %v3337, 0.25
    %v3340 = vsel %vm2941, %v3339, -inf
    %3341 = vmax.xlane.f32.xlu0 %v3340
    %v3342 = vpop.xlane.xlu0 %3341
    %v3343 = vsub.f32 %v3339, %v3342
    %v3344 = vmul.f32 %v3343, 1.442695
    %v3345 = vpow.pop %v3344
    %v3346 = vsel %vm2941, %v3345, 0.0
    %3347 = vadd.xlane.f32.xlu0 %v3346
    %v3348 = vpop.xlane.xlu0 %3347
    %v3349 = vrcp.pop %v3348
    %v3350 = vmul.f32 %v3348, %v3349
    %v3351 = vsub.f32 1.0, %v3350
    %v3352 = vmul.f32 %v3349, %v3351
    %v3353 = vadd.f32 %v3349, %v3352
    %vm3354 = vweird.f32 %v3348
    %vm3355 = vweird.f32 %v3349
    %vm3356 = vmor %vm3354, %vm3355
    %v3357 = vsel %vm3356, %v3349, %v3353
    %v3358 = vand.u32 2147483647, %v3348
    %vm3359 = vcmp.eq.f32.partialorder %v3358, 8.507059e+37
    %v3360 = vand.u32 %v3348, 2147483648
    %v3361 = vor.u32 1.1754944e-38, %v3360
    %v3362 = vsel %vm3359, %v3361, %v3357
    %v3363 = vmul.f32 %v3345, %v3362
    %3364 = vrot.lane.b32.xlu0 %v3229, 48
    %v3365 = vpop.permute.xlu0 %3364
    %v3367 = vsel %vm201, %v3363, 0
    %v3369 = vsel %vm2971, %v3365, 0
    %3371 = vmatpush.msra.mxu0 0.0
    %3372 = vmatpush.msra.mxu0 0.0
    %3373 = vmatpush.msra.mxu0 0.0
    %3374 = vmatpush.msra.mxu0 0.0
    %3375 = vmatpush.msra.mxu0 0.0
    %3376 = vmatpush.msra.mxu0 0.0
    %3377 = vmatpush.msra.mxu0 0.0
    %3378 = vmatpush.msra.mxu0 0.0
    %3379 = vmatpush.msra.mxu0 0.0
    %3380 = vmatpush.msra.mxu0 0.0
    %3381 = vmatpush.msra.mxu0 0.0
    %3382 = vmatpush.msra.mxu0 0.0
    %3383 = vmatpush.msra.mxu0 0.0
    %3384 = vmatpush.msra.mxu0 0.0
    %3385 = vmatpush.msra.mxu0 0.0
    %3386 = vmatpush.msra.mxu0 %v3369
    %3387 = vmatmul.f32.gmra.mxu0 %v3367
    %v3388 = vpop.f32.mrf.mxu0
    %v3389 = vadd.f32 0.0, %v3388
    %3390 = vdwg.mxu0
    %3392 = vrot.lane.b32.xlu0 %v3389, 16
    %v3393 = vpop.permute.xlu0 %3392
    %3395 = vst.msk [vmem:[#allocation5] sm:$0xf] %vm3080, %v3393
    %v3396 = vld [vmem:[#allocation5] sm:$0xf]
    %v3398 = vsel %vm255, %v3396, 0
    %3400 = vmatpush.msra.mxu0 0.0
    %3401 = vmatpush.msra.mxu0 0.0
    %3402 = vmatpush.msra.mxu0 0.0
    %3403 = vmatpush.msra.mxu0 0.0
    %3404 = vmatpush.msra.mxu0 0.0
    %3405 = vmatpush.msra.mxu0 0.0
    %3406 = vmatpush.msra.mxu0 0.0
    %3407 = vmatpush.msra.mxu0 0.0
    %3408 = vmatpush.msra.mxu0 0.0
    %3409 = vmatpush.msra.mxu0 0.0
    %3410 = vmatpush.msra.mxu0 0.0
    %3411 = vmatpush.msra.mxu0 0.0
    %3412 = vmatpush.msra.mxu0 %v2823
    %3413 = vmatpush.msra.mxu0 %v2822
    %3414 = vmatpush.msra.mxu0 %v2821
    %3415 = vmatpush.msra.mxu0 %v2820
    %3416 = vmatmul.f32.gmra.mxu0 %v3398
    %v3417 = vpop.f32.mrf.mxu0
    %v3418 = vadd.f32 0.0, %v3417
    %3419 = vdwg.mxu0
    %v3420 = vadd.f32 %v3181, %v3418
    %v3421 = vsel %vm2855, %v3420, 0.0
    %3422 = vadd.xlane.f32.xlu0 %v3421
    %v3423 = vpop.xlane.xlu0 %3422
    %v3424 = vmul.f32 %v3423, %v2865
    %v3425 = vsub.f32 %v3420, %v3424
    %v3426 = vmul.f32 %v3425, %v3425
    %v3427 = vsel %vm2855, %v3426, 0.0
    %3428 = vadd.xlane.f32.xlu0 %v3427
    %v3429 = vpop.xlane.xlu0 %3428
    %v3430 = vmul.f32 %v3429, %v2865
    %v3431 = vadd.f32 %v3430, 1e-05
    %v3432 = vrsqrt.pop %v3431
    %v3433 = vmul.f32 %v3432, %v3431
    %v3434 = vmul.f32 %v3433, %v3432
    %v3435 = vmul.f32 0.5, %v3434
    %v3436 = vsub.f32 1.5, %v3435
    %v3437 = vmul.f32 %v3432, %v3436
    %vm3438 = vweird.f32 %v3431
    %vm3439 = vweird.f32 %v3432
    %vm3440 = vmor %vm3438, %vm3439
    %v3441 = vsel %vm3440, %v3432, %v3437
    %v3442 = vmul.f32 %v3425, %v3441
    %v3444 = vperm.slane %v2824, 0
    %v3446 = vmul.f32 %v3442, %v3444
    %v3448 = vsel %vm255, %v3446, 0
    %3450 = vmatpush.msra.mxu0 0.0
    %3451 = vmatpush.msra.mxu0 0.0
    %3452 = vmatpush.msra.mxu0 0.0
    %3453 = vmatpush.msra.mxu0 0.0
    %3454 = vmatpush.msra.mxu0 0.0
    %3455 = vmatpush.msra.mxu0 0.0
    %3456 = vmatpush.msra.mxu0 0.0
    %3457 = vmatpush.msra.mxu0 0.0
    %3458 = vmatpush.msra.mxu0 0.0
    %3459 = vmatpush.msra.mxu0 0.0
    %3460 = vmatpush.msra.mxu0 0.0
    %3461 = vmatpush.msra.mxu0 0.0
    %3462 = vmatpush.msra.mxu0 %v2828
    %3463 = vmatpush.msra.mxu0 %v2827
    %3464 = vmatpush.msra.mxu0 %v2826
    %3465 = vmatpush.msra.mxu0 %v2825
    %3466 = vmatmul.f32.gmra.mxu0 %v3448
    %v3467 = vpop.f32.mrf.mxu0
    %v3468 = vadd.f32 0.0, %v3467
    %3469 = vdwg.mxu0
    %v3470 = vmax.f32 %v3468, 0.0
    %v3472 = vsel %vm3157, %v3470, 0
    %3474 = vmatpush.msra.mxu0 0.0
    %3475 = vmatpush.msra.mxu0 0.0
    %3476 = vmatpush.msra.mxu0 0.0
    %3477 = vmatpush.msra.mxu0 0.0
    %3478 = vmatpush.msra.mxu0 0.0
    %3479 = vmatpush.msra.mxu0 0.0
    %3480 = vmatpush.msra.mxu0 0.0
    %3481 = vmatpush.msra.mxu0 0.0
    %3482 = vmatpush.msra.mxu0 %v2836
    %3483 = vmatpush.msra.mxu0 %v2835
    %3484 = vmatpush.msra.mxu0 %v2834
    %3485 = vmatpush.msra.mxu0 %v2833
    %3486 = vmatpush.msra.mxu0 %v2832
    %3487 = vmatpush.msra.mxu0 %v2831
    %3488 = vmatpush.msra.mxu0 %v2830
    %3489 = vmatpush.msra.mxu0 %v2829
    %3490 = vmatmul.f32.gmra.mxu0 %v3472
    %v3491 = vpop.f32.mrf.mxu0
    %v3492 = vadd.f32 0.0, %v3491
    %3493 = vdwg.mxu0
    %v3494 = vadd.f32 %v3420, %v3492
    %3495 = vst.msk [vmem:[#allocation4] sm:$0xf] %vm2855, %v3494
    %v3496 = vld [vmem:[#allocation4] sm:$0x1]
    %v3497 = vsel %vm2847, %v3496, 0.0
    %3498 = vadd.xlane.f32.xlu0 %v3497
    %v3499 = vpop.xlane.xlu0 %3498
    %v3500 = vmul.f32 %v3499, %v2865
    %v3501 = vsub.f32 %v3496, %v3500
    %v3502 = vmul.f32 %v3501, %v3501
    %v3503 = vsel %vm2847, %v3502, 0.0
    %3504 = vadd.xlane.f32.xlu0 %v3503
    %v3505 = vpop.xlane.xlu0 %3504
    %v3506 = vmul.f32 %v3505, %v2865
    %v3507 = vadd.f32 %v3506, 1e-05
    %v3508 = vrsqrt.pop %v3507
    %v3509 = vmul.f32 %v3508, %v3507
    %v3510 = vmul.f32 %v3509, %v3508
    %v3511 = vmul.f32 0.5, %v3510
    %v3512 = vsub.f32 1.5, %v3511
    %v3513 = vmul.f32 %v3508, %v3512
    %vm3514 = vweird.f32 %v3507
    %vm3515 = vweird.f32 %v3508
    %vm3516 = vmor %vm3514, %vm3515
    %v3517 = vsel %vm3516, %v3508, %v3513
    %v3518 = vmul.f32 %v3501, %v3517
    %v3519 = vmul.f32 %v3518, %v2837
    %v3520 = vadd.f32 %v3519, %v2838
    %v3522 = vsel %vm255, %v3520, 0
    %3524 = vmatpush.msra.mxu0 0.0
    %3525 = vmatpush.msra.mxu0 0.0
    %3526 = vmatpush.msra.mxu0 0.0
    %3527 = vmatpush.msra.mxu0 0.0
    %3528 = vmatpush.msra.mxu0 0.0
    %3529 = vmatpush.msra.mxu0 0.0
    %3530 = vmatpush.msra.mxu0 0.0
    %3531 = vmatpush.msra.mxu0 0.0
    %3532 = vmatpush.msra.mxu0 0.0
    %3533 = vmatpush.msra.mxu0 0.0
    %3534 = vmatpush.msra.mxu0 0.0
    %3535 = vmatpush.msra.mxu0 0.0
    %3536 = vmatpush.msra.mxu0 %v2842
    %3537 = vmatpush.msra.mxu0 %v2841
    %3538 = vmatpush.msra.mxu0 %v2840
    %3539 = vmatpush.msra.mxu0 %v2839
    %3540 = vmatmul.f32.gmra.mxu0 %v3522
    %v3541 = vpop.f32.mrf.mxu0
    %v3542 = vadd.f32 %v2843, %v3541
    %3543 = vdwg.mxu0
    %vm3544 = vcmask 57344
    %3545 = vst.msk [vmem:[#allocation9] sm:$0x1] %vm3544, %v3542
    %3546 = vst.msk [vmem:[#allocation4] sm:$0x1] %vm2847, %v2846
    %v3547 = vld [vmem:[#allocation3 + $0x3] sm:$0x7]
    %v3548 = vld [vmem:[%s9 + $0x1] sm:$0x7]
    %v3549 = vadd.f32 %v3547, %v3548
    %3550 = vst.msk [vmem:[#allocation4 + $0x1] sm:$0x7] %vm2852, %v3549
    %v3551 = vld [vmem:[#allocation4] sm:$0xf]
    %v3552 = vsel %vm2855, %v3551, 0.0
    %3553 = vadd.xlane.f32.xlu0 %v3552
    %v3554 = vpop.xlane.xlu0 %3553
    %v3555 = vmul.f32 %v3554, %v2865
    %v3556 = vsub.f32 %v3551, %v3555
    %v3557 = vmul.f32 %v3556, %v3556
    %v3558 = vsel %vm2855, %v3557, 0.0
    %3559 = vadd.xlane.f32.xlu0 %v3558
    %v3560 = vpop.xlane.xlu0 %3559
    %v3561 = vmul.f32 %v3560, %v2865
    %v3562 = vadd.f32 %v3561, 1e-05
    %v3563 = vrsqrt.pop %v3562
    %v3564 = vmul.f32 %v3563, %v3562
    %v3565 = vmul.f32 %v3564, %v3563
    %v3566 = vmul.f32 0.5, %v3565
    %v3567 = vsub.f32 1.5, %v3566
    %v3568 = vmul.f32 %v3563, %v3567
    %vm3569 = vweird.f32 %v3562
    %vm3570 = vweird.f32 %v3563
    %vm3571 = vmor %vm3569, %vm3570
    %v3572 = vsel %vm3571, %v3563, %v3568
    %v3573 = vmul.f32 %v3556, %v3572
    %v3574 = vmul.f32 %v3573, %v2886
    %v3576 = vsel %vm255, %v3574, 0
    %3578 = vmatpush.msra.mxu0 0.0
    %3579 = vmatpush.msra.mxu0 0.0
    %3580 = vmatpush.msra.mxu0 0.0
    %3581 = vmatpush.msra.mxu0 0.0
    %3582 = vmatpush.msra.mxu0 0.0
    %3583 = vmatpush.msra.mxu0 0.0
    %3584 = vmatpush.msra.mxu0 0.0
    %3585 = vmatpush.msra.mxu0 0.0
    %3586 = vmatpush.msra.mxu0 0.0
    %3587 = vmatpush.msra.mxu0 0.0
    %3588 = vmatpush.msra.mxu0 0.0
    %3589 = vmatpush.msra.mxu0 0.0
    %3590 = vmatpush.msra.mxu0 %v2797
    %3591 = vmatpush.msra.mxu0 %v2796
    %3592 = vmatpush.msra.mxu0 %v2795
    %3593 = vmatpush.msra.mxu0 %v2794
    %3594 = vmatmul.f32.gmra.mxu0 %v3576
    %v3595 = vpop.f32.mrf.mxu0
    %v3596 = vadd.f32 0.0, %v3595
    %3597 = vdwg.mxu0
    %3599 = vrot.lane.b32.xlu0 %v3596, 96
    %v3600 = vpop.permute.xlu0 %3599
    %v3601 = vsel %vm2915, %v3596, 0
    %v3603 = vsel %vm2915, %v3600, 0
    %3605 = vmatpush.xpose.msra.mxu0 0.0
    %3606 = vmatpush.xpose.msra.mxu0 0.0
    %3607 = vmatpush.xpose.msra.mxu0 0.0
    %3608 = vmatpush.xpose.msra.mxu0 0.0
    %3609 = vmatpush.xpose.msra.mxu0 0.0
    %3610 = vmatpush.xpose.msra.mxu0 0.0
    %3611 = vmatpush.xpose.msra.mxu0 0.0
    %3612 = vmatpush.xpose.msra.mxu0 0.0
    %3613 = vmatpush.xpose.msra.mxu0 0.0
    %3614 = vmatpush.xpose.msra.mxu0 0.0
    %3615 = vmatpush.xpose.msra.mxu0 0.0
    %3616 = vmatpush.xpose.msra.mxu0 0.0
    %3617 = vmatpush.xpose.msra.mxu0 0.0
    %3618 = vmatpush.xpose.msra.mxu0 0.0
    %3619 = vmatpush.xpose.msra.mxu0 0.0
    %3620 = vmatpush.xpose.msra.mxu0 %v3603
    %3621 = vmatmul.f32.gmra.mxu0 %v3601
    %v3622 = vpop.f32.mrf.mxu0
    %v3623 = vadd.f32 0.0, %v3622
    %3624 = vdwg.mxu0
    %v3625 = vmul.f32 %v3623, 0.25
    %v3626 = vsel %vm2941, %v3625, -inf
    %3627 = vmax.xlane.f32.xlu0 %v3626
    %v3628 = vpop.xlane.xlu0 %3627
    %v3629 = vsub.f32 %v3625, %v3628
    %v3630 = vmul.f32 %v3629, 1.442695
    %v3631 = vpow.pop %v3630
    %v3632 = vsel %vm2941, %v3631, 0.0
    %3633 = vadd.xlane.f32.xlu0 %v3632
    %v3634 = vpop.xlane.xlu0 %3633
    %v3635 = vrcp.pop %v3634
    %v3636 = vmul.f32 %v3634, %v3635
    %v3637 = vsub.f32 1.0, %v3636
    %v3638 = vmul.f32 %v3635, %v3637
    %v3639 = vadd.f32 %v3635, %v3638
    %vm3640 = vweird.f32 %v3634
    %vm3641 = vweird.f32 %v3635
    %vm3642 = vmor %vm3640, %vm3641
    %v3643 = vsel %vm3642, %v3635, %v3639
    %v3644 = vand.u32 2147483647, %v3634
    %vm3645 = vcmp.eq.f32.partialorder %v3644, 8.507059e+37
    %v3646 = vand.u32 %v3634, 2147483648
    %v3647 = vor.u32 1.1754944e-38, %v3646
    %v3648 = vsel %vm3645, %v3647, %v3643
    %v3649 = vmul.f32 %v3631, %v3648
    %3650 = vrot.lane.b32.xlu0 %v3596, 64
    %v3651 = vpop.permute.xlu0 %3650
    %v3653 = vsel %vm201, %v3649, 0
    %v3655 = vsel %vm2971, %v3651, 0
    %3657 = vmatpush.msra.mxu0 0.0
    %3658 = vmatpush.msra.mxu0 0.0
    %3659 = vmatpush.msra.mxu0 0.0
    %3660 = vmatpush.msra.mxu0 0.0
    %3661 = vmatpush.msra.mxu0 0.0
    %3662 = vmatpush.msra.mxu0 0.0
    %3663 = vmatpush.msra.mxu0 0.0
    %3664 = vmatpush.msra.mxu0 0.0
    %3665 = vmatpush.msra.mxu0 0.0
    %3666 = vmatpush.msra.mxu0 0.0
    %3667 = vmatpush.msra.mxu0 0.0
    %3668 = vmatpush.msra.mxu0 0.0
    %3669 = vmatpush.msra.mxu0 0.0
    %3670 = vmatpush.msra.mxu0 0.0
    %3671 = vmatpush.msra.mxu0 0.0
    %3672 = vmatpush.msra.mxu0 %v3655
    %3673 = vmatmul.f32.gmra.mxu0 %v3653
    %v3674 = vpop.f32.mrf.mxu0
    %v3675 = vadd.f32 0.0, %v3674
    %3676 = vdwg.mxu0
    %3677 = vst.msk [vmem:[#allocation5] sm:$0xf] %vm2994, %v3675
    %3678 = vrot.lane.b32.xlu0 %v3596, 112
    %v3679 = vpop.permute.xlu0 %3678
    %3680 = vrot.lane.b32.xlu0 %v3596, 80
    %v3681 = vpop.permute.xlu0 %3680
    %v3682 = vsel %vm2915, %v3679, 0
    %v3684 = vsel %vm2915, %v3681, 0
    %3686 = vmatpush.xpose.msra.mxu0 0.0
    %3687 = vmatpush.xpose.msra.mxu0 0.0
    %3688 = vmatpush.xpose.msra.mxu0 0.0
    %3689 = vmatpush.xpose.msra.mxu0 0.0
    %3690 = vmatpush.xpose.msra.mxu0 0.0
    %3691 = vmatpush.xpose.msra.mxu0 0.0
    %3692 = vmatpush.xpose.msra.mxu0 0.0
    %3693 = vmatpush.xpose.msra.mxu0 0.0
    %3694 = vmatpush.xpose.msra.mxu0 0.0
    %3695 = vmatpush.xpose.msra.mxu0 0.0
    %3696 = vmatpush.xpose.msra.mxu0 0.0
    %3697 = vmatpush.xpose.msra.mxu0 0.0
    %3698 = vmatpush.xpose.msra.mxu0 0.0
    %3699 = vmatpush.xpose.msra.mxu0 0.0
    %3700 = vmatpush.xpose.msra.mxu0 0.0
    %3701 = vmatpush.xpose.msra.mxu0 %v3684
    %3702 = vmatmul.f32.gmra.mxu0 %v3682
    %v3703 = vpop.f32.mrf.mxu0
    %v3704 = vadd.f32 0.0, %v3703
    %3705 = vdwg.mxu0
    %v3706 = vmul.f32 %v3704, 0.25
    %v3707 = vsel %vm2941, %v3706, -inf
    %3708 = vmax.xlane.f32.xlu0 %v3707
    %v3709 = vpop.xlane.xlu0 %3708
    %v3710 = vsub.f32 %v3706, %v3709
    %v3711 = vmul.f32 %v3710, 1.442695
    %v3712 = vpow.pop %v3711
    %v3713 = vsel %vm2941, %v3712, 0.0
    %3714 = vadd.xlane.f32.xlu0 %v3713
    %v3715 = vpop.xlane.xlu0 %3714
    %v3716 = vrcp.pop %v3715
    %v3717 = vmul.f32 %v3715, %v3716
    %v3718 = vsub.f32 1.0, %v3717
    %v3719 = vmul.f32 %v3716, %v3718
    %v3720 = vadd.f32 %v3716, %v3719
    %vm3721 = vweird.f32 %v3715
    %vm3722 = vweird.f32 %v3716
    %vm3723 = vmor %vm3721, %vm3722
    %v3724 = vsel %vm3723, %v3716, %v3720
    %v3725 = vand.u32 2147483647, %v3715
    %vm3726 = vcmp.eq.f32.partialorder %v3725, 8.507059e+37
    %v3727 = vand.u32 %v3715, 2147483648
    %v3728 = vor.u32 1.1754944e-38, %v3727
    %v3729 = vsel %vm3726, %v3728, %v3724
    %v3730 = vmul.f32 %v3712, %v3729
    %3731 = vrot.lane.b32.xlu0 %v3596, 48
    %v3732 = vpop.permute.xlu0 %3731
    %v3734 = vsel %vm201, %v3730, 0
    %v3736 = vsel %vm2971, %v3732, 0
    %3738 = vmatpush.msra.mxu0 0.0
    %3739 = vmatpush.msra.mxu0 0.0
    %3740 = vmatpush.msra.mxu0 0.0
    %3741 = vmatpush.msra.mxu0 0.0
    %3742 = vmatpush.msra.mxu0 0.0
    %3743 = vmatpush.msra.mxu0 0.0
    %3744 = vmatpush.msra.mxu0 0.0
    %3745 = vmatpush.msra.mxu0 0.0
    %3746 = vmatpush.msra.mxu0 0.0
    %3747 = vmatpush.msra.mxu0 0.0
    %3748 = vmatpush.msra.mxu0 0.0
    %3749 = vmatpush.msra.mxu0 0.0
    %3750 = vmatpush.msra.mxu0 0.0
    %3751 = vmatpush.msra.mxu0 0.0
    %3752 = vmatpush.msra.mxu0 0.0
    %3753 = vmatpush.msra.mxu0 %v3736
    %3754 = vmatmul.f32.gmra.mxu0 %v3734
    %v3755 = vpop.f32.mrf.mxu0
    %v3756 = vadd.f32 0.0, %v3755
    %3757 = vdwg.mxu0
    %3759 = vrot.lane.b32.xlu0 %v3756, 16
    %v3760 = vpop.permute.xlu0 %3759
    %3762 = vst.msk [vmem:[#allocation5] sm:$0xf] %vm3080, %v3760
    %v3763 = vld [vmem:[#allocation5] sm:$0xf]
    %v3765 = vsel %vm255, %v3763, 0
    %3767 = vmatpush.msra.mxu0 0.0
    %3768 = vmatpush.msra.mxu0 0.0
    %3769 = vmatpush.msra.mxu0 0.0
    %3770 = vmatpush.msra.mxu0 0.0
    %3771 = vmatpush.msra.mxu0 0.0
    %3772 = vmatpush.msra.mxu0 0.0
    %3773 = vmatpush.msra.mxu0 0.0
    %3774 = vmatpush.msra.mxu0 0.0
    %3775 = vmatpush.msra.mxu0 0.0
    %3776 = vmatpush.msra.mxu0 0.0
    %3777 = vmatpush.msra.mxu0 0.0
    %3778 = vmatpush.msra.mxu0 0.0
    %3779 = vmatpush.msra.mxu0 %v2801
    %3780 = vmatpush.msra.mxu0 %v2800
    %3781 = vmatpush.msra.mxu0 %v2799
    %3782 = vmatpush.msra.mxu0 %v2798
    %3783 = vmatmul.f32.gmra.mxu0 %v3765
    %v3784 = vpop.f32.mrf.mxu0
    %v3785 = vadd.f32 0.0, %v3784
    %3786 = vdwg.mxu0
    %v3787 = vadd.f32 %v3551, %v3785
    %v3788 = vsel %vm2855, %v3787, 0.0
    %3789 = vadd.xlane.f32.xlu0 %v3788
    %v3790 = vpop.xlane.xlu0 %3789
    %v3791 = vmul.f32 %v3790, %v2865
    %v3792 = vsub.f32 %v3787, %v3791
    %v3793 = vmul.f32 %v3792, %v3792
    %v3794 = vsel %vm2855, %v3793, 0.0
    %3795 = vadd.xlane.f32.xlu0 %v3794
    %v3796 = vpop.xlane.xlu0 %3795
    %v3797 = vmul.f32 %v3796, %v2865
    %v3798 = vadd.f32 %v3797, 1e-05
    %v3799 = vrsqrt.pop %v3798
    %v3800 = vmul.f32 %v3799, %v3798
    %v3801 = vmul.f32 %v3800, %v3799
    %v3802 = vmul.f32 0.5, %v3801
    %v3803 = vsub.f32 1.5, %v3802
    %v3804 = vmul.f32 %v3799, %v3803
    %vm3805 = vweird.f32 %v3798
    %vm3806 = vweird.f32 %v3799
    %vm3807 = vmor %vm3805, %vm3806
    %v3808 = vsel %vm3807, %v3799, %v3804
    %v3809 = vmul.f32 %v3792, %v3808
    %v3810 = vmul.f32 %v3809, %v3130
    %v3812 = vsel %vm255, %v3810, 0
    %3814 = vmatpush.msra.mxu0 0.0
    %3815 = vmatpush.msra.mxu0 0.0
    %3816 = vmatpush.msra.mxu0 0.0
    %3817 = vmatpush.msra.mxu0 0.0
    %3818 = vmatpush.msra.mxu0 0.0
    %3819 = vmatpush.msra.mxu0 0.0
    %3820 = vmatpush.msra.mxu0 0.0
    %3821 = vmatpush.msra.mxu0 0.0
    %3822 = vmatpush.msra.mxu0 0.0
    %3823 = vmatpush.msra.mxu0 0.0
    %3824 = vmatpush.msra.mxu0 0.0
    %3825 = vmatpush.msra.mxu0 0.0
    %3826 = vmatpush.msra.mxu0 %v2806
    %3827 = vmatpush.msra.mxu0 %v2805
    %3828 = vmatpush.msra.mxu0 %v2804
    %3829 = vmatpush.msra.mxu0 %v2803
    %3830 = vmatmul.f32.gmra.mxu0 %v3812
    %v3831 = vpop.f32.mrf.mxu0
    %v3832 = vadd.f32 0.0, %v3831
    %3833 = vdwg.mxu0
    %v3834 = vmax.f32 %v3832, 0.0
    %v3836 = vsel %vm3157, %v3834, 0
    %3838 = vmatpush.msra.mxu0 0.0
    %3839 = vmatpush.msra.mxu0 0.0
    %3840 = vmatpush.msra.mxu0 0.0
    %3841 = vmatpush.msra.mxu0 0.0
    %3842 = vmatpush.msra.mxu0 0.0
    %3843 = vmatpush.msra.mxu0 0.0
    %3844 = vmatpush.msra.mxu0 0.0
    %3845 = vmatpush.msra.mxu0 0.0
    %3846 = vmatpush.msra.mxu0 %v2814
    %3847 = vmatpush.msra.mxu0 %v2813
    %3848 = vmatpush.msra.mxu0 %v2812
    %3849 = vmatpush.msra.mxu0 %v2811
    %3850 = vmatpush.msra.mxu0 %v2810
    %3851 = vmatpush.msra.mxu0 %v2809
    %3852 = vmatpush.msra.mxu0 %v2808
    %3853 = vmatpush.msra.mxu0 %v2807
    %3854 = vmatmul.f32.gmra.mxu0 %v3836
    %v3855 = vpop.f32.mrf.mxu0
    %v3856 = vadd.f32 0.0, %v3855
    %3857 = vdwg.mxu0
    %v3858 = vadd.f32 %v3787, %v3856
    %v3859 = vsel %vm2855, %v3858, 0.0
    %3860 = vadd.xlane.f32.xlu0 %v3859
    %v3861 = vpop.xlane.xlu0 %3860
    %v3862 = vmul.f32 %v3861, %v2865
    %v3863 = vsub.f32 %v3858, %v3862
    %v3864 = vmul.f32 %v3863, %v3863
    %v3865 = vsel %vm2855, %v3864, 0.0
    %3866 = vadd.xlane.f32.xlu0 %v3865
    %v3867 = vpop.xlane.xlu0 %3866
    %v3868 = vmul.f32 %v3867, %v2865
    %v3869 = vadd.f32 %v3868, 1e-05
    %v3870 = vrsqrt.pop %v3869
    %v3871 = vmul.f32 %v3870, %v3869
    %v3872 = vmul.f32 %v3871, %v3870
    %v3873 = vmul.f32 0.5, %v3872
    %v3874 = vsub.f32 1.5, %v3873
    %v3875 = vmul.f32 %v3870, %v3874
    %vm3876 = vweird.f32 %v3869
    %vm3877 = vweird.f32 %v3870
    %vm3878 = vmor %vm3876, %vm3877
    %v3879 = vsel %vm3878, %v3870, %v3875
    %v3880 = vmul.f32 %v3863, %v3879
    %v3881 = vmul.f32 %v3880, %v3205
    %v3883 = vsel %vm255, %v3881, 0
    %3885 = vmatpush.msra.mxu0 0.0
    %3886 = vmatpush.msra.mxu0 0.0
    %3887 = vmatpush.msra.mxu0 0.0
    %3888 = vmatpush.msra.mxu0 0.0
    %3889 = vmatpush.msra.mxu0 0.0
    %3890 = vmatpush.msra.mxu0 0.0
    %3891 = vmatpush.msra.mxu0 0.0
    %3892 = vmatpush.msra.mxu0 0.0
    %3893 = vmatpush.msra.mxu0 0.0
    %3894 = vmatpush.msra.mxu0 0.0
    %3895 = vmatpush.msra.mxu0 0.0
    %3896 = vmatpush.msra.mxu0 0.0
    %3897 = vmatpush.msra.mxu0 %v2819
    %3898 = vmatpush.msra.mxu0 %v2818
    %3899 = vmatpush.msra.mxu0 %v2817
    %3900 = vmatpush.msra.mxu0 %v2816
    %3901 = vmatmul.f32.gmra.mxu0 %v3883
    %v3902 = vpop.f32.mrf.mxu0
    %v3903 = vadd.f32 0.0, %v3902
    %3904 = vdwg.mxu0
    %3906 = vrot.lane.b32.xlu0 %v3903, 96
    %v3907 = vpop.permute.xlu0 %3906
    %v3908 = vsel %vm2915, %v3903, 0
    %v3910 = vsel %vm2915, %v3907, 0
    %3912 = vmatpush.xpose.msra.mxu0 0.0
    %3913 = vmatpush.xpose.msra.mxu0 0.0
    %3914 = vmatpush.xpose.msra.mxu0 0.0
    %3915 = vmatpush.xpose.msra.mxu0 0.0
    %3916 = vmatpush.xpose.msra.mxu0 0.0
    %3917 = vmatpush.xpose.msra.mxu0 0.0
    %3918 = vmatpush.xpose.msra.mxu0 0.0
    %3919 = vmatpush.xpose.msra.mxu0 0.0
    %3920 = vmatpush.xpose.msra.mxu0 0.0
    %3921 = vmatpush.xpose.msra.mxu0 0.0
    %3922 = vmatpush.xpose.msra.mxu0 0.0
    %3923 = vmatpush.xpose.msra.mxu0 0.0
    %3924 = vmatpush.xpose.msra.mxu0 0.0
    %3925 = vmatpush.xpose.msra.mxu0 0.0
    %3926 = vmatpush.xpose.msra.mxu0 0.0
    %3927 = vmatpush.xpose.msra.mxu0 %v3910
    %3928 = vmatmul.f32.gmra.mxu0 %v3908
    %v3929 = vpop.f32.mrf.mxu0
    %v3930 = vadd.f32 0.0, %v3929
    %3931 = vdwg.mxu0
    %v3932 = vmul.f32 %v3930, 0.25
    %v3933 = vsel %vm2941, %v3932, -inf
    %3934 = vmax.xlane.f32.xlu0 %v3933
    %v3935 = vpop.xlane.xlu0 %3934
    %v3936 = vsub.f32 %v3932, %v3935
    %v3937 = vmul.f32 %v3936, 1.442695
    %v3938 = vpow.pop %v3937
    %v3939 = vsel %vm2941, %v3938, 0.0
    %3940 = vadd.xlane.f32.xlu0 %v3939
    %v3941 = vpop.xlane.xlu0 %3940
    %v3942 = vrcp.pop %v3941
    %v3943 = vmul.f32 %v3941, %v3942
    %v3944 = vsub.f32 1.0, %v3943
    %v3945 = vmul.f32 %v3942, %v3944
    %v3946 = vadd.f32 %v3942, %v3945
    %vm3947 = vweird.f32 %v3941
    %vm3948 = vweird.f32 %v3942
    %vm3949 = vmor %vm3947, %vm3948
    %v3950 = vsel %vm3949, %v3942, %v3946
    %v3951 = vand.u32 2147483647, %v3941
    %vm3952 = vcmp.eq.f32.partialorder %v3951, 8.507059e+37
    %v3953 = vand.u32 %v3941, 2147483648
    %v3954 = vor.u32 1.1754944e-38, %v3953
    %v3955 = vsel %vm3952, %v3954, %v3950
    %v3956 = vmul.f32 %v3938, %v3955
    %3957 = vrot.lane.b32.xlu0 %v3903, 64
    %v3958 = vpop.permute.xlu0 %3957
    %v3960 = vsel %vm201, %v3956, 0
    %v3962 = vsel %vm2971, %v3958, 0
    %3964 = vmatpush.msra.mxu0 0.0
    %3965 = vmatpush.msra.mxu0 0.0
    %3966 = vmatpush.msra.mxu0 0.0
    %3967 = vmatpush.msra.mxu0 0.0
    %3968 = vmatpush.msra.mxu0 0.0
    %3969 = vmatpush.msra.mxu0 0.0
    %3970 = vmatpush.msra.mxu0 0.0
    %3971 = vmatpush.msra.mxu0 0.0
    %3972 = vmatpush.msra.mxu0 0.0
    %3973 = vmatpush.msra.mxu0 0.0
    %3974 = vmatpush.msra.mxu0 0.0
    %3975 = vmatpush.msra.mxu0 0.0
    %3976 = vmatpush.msra.mxu0 0.0
    %3977 = vmatpush.msra.mxu0 0.0
    %3978 = vmatpush.msra.mxu0 0.0
    %3979 = vmatpush.msra.mxu0 %v3962
    %3980 = vmatmul.f32.gmra.mxu0 %v3960
    %v3981 = vpop.f32.mrf.mxu0
    %v3982 = vadd.f32 0.0, %v3981
    %3983 = vdwg.mxu0
    %3984 = vst.msk [vmem:[#allocation5] sm:$0xf] %vm2994, %v3982
    %3985 = vrot.lane.b32.xlu0 %v3903, 112
    %v3986 = vpop.permute.xlu0 %3985
    %3987 = vrot.lane.b32.xlu0 %v3903, 80
    %v3988 = vpop.permute.xlu0 %3987
    %v3989 = vsel %vm2915, %v3986, 0
    %v3991 = vsel %vm2915, %v3988, 0
    %3993 = vmatpush.xpose.msra.mxu0 0.0
    %3994 = vmatpush.xpose.msra.mxu0 0.0
    %3995 = vmatpush.xpose.msra.mxu0 0.0
    %3996 = vmatpush.xpose.msra.mxu0 0.0
    %3997 = vmatpush.xpose.msra.mxu0 0.0
    %3998 = vmatpush.xpose.msra.mxu0 0.0
    %3999 = vmatpush.xpose.msra.mxu0 0.0
    %4000 = vmatpush.xpose.msra.mxu0 0.0
    %4001 = vmatpush.xpose.msra.mxu0 0.0
    %4002 = vmatpush.xpose.msra.mxu0 0.0
    %4003 = vmatpush.xpose.msra.mxu0 0.0
    %4004 = vmatpush.xpose.msra.mxu0 0.0
    %4005 = vmatpush.xpose.msra.mxu0 0.0
    %4006 = vmatpush.xpose.msra.mxu0 0.0
    %4007 = vmatpush.xpose.msra.mxu0 0.0
    %4008 = vmatpush.xpose.msra.mxu0 %v3991
    %4009 = vmatmul.f32.gmra.mxu0 %v3989
    %v4010 = vpop.f32.mrf.mxu0
    %v4011 = vadd.f32 0.0, %v4010
    %4012 = vdwg.mxu0
    %v4013 = vmul.f32 %v4011, 0.25
    %v4014 = vsel %vm2941, %v4013, -inf
    %4015 = vmax.xlane.f32.xlu0 %v4014
    %v4016 = vpop.xlane.xlu0 %4015
    %v4017 = vsub.f32 %v4013, %v4016
    %v4018 = vmul.f32 %v4017, 1.442695
    %v4019 = vpow.pop %v4018
    %v4020 = vsel %vm2941, %v4019, 0.0
    %4021 = vadd.xlane.f32.xlu0 %v4020
    %v4022 = vpop.xlane.xlu0 %4021
    %v4023 = vrcp.pop %v4022
    %v4024 = vmul.f32 %v4022, %v4023
    %v4025 = vsub.f32 1.0, %v4024
    %v4026 = vmul.f32 %v4023, %v4025
    %v4027 = vadd.f32 %v4023, %v4026
    %vm4028 = vweird.f32 %v4022
    %vm4029 = vweird.f32 %v4023
    %vm4030 = vmor %vm4028, %vm4029
    %v4031 = vsel %vm4030, %v4023, %v4027
    %v4032 = vand.u32 2147483647, %v4022
    %vm4033 = vcmp.eq.f32.partialorder %v4032, 8.507059e+37
    %v4034 = vand.u32 %v4022, 2147483648
    %v4035 = vor.u32 1.1754944e-38, %v4034
    %v4036 = vsel %vm4033, %v4035, %v4031
    %v4037 = vmul.f32 %v4019, %v4036
    %4038 = vrot.lane.b32.xlu0 %v3903, 48
    %v4039 = vpop.permute.xlu0 %4038
    %v4041 = vsel %vm201, %v4037, 0
    %v4043 = vsel %vm2971, %v4039, 0
    %4045 = vmatpush.msra.mxu0 0.0
    %4046 = vmatpush.msra.mxu0 0.0
    %4047 = vmatpush.msra.mxu0 0.0
    %4048 = vmatpush.msra.mxu0 0.0
    %4049 = vmatpush.msra.mxu0 0.0
    %4050 = vmatpush.msra.mxu0 0.0
    %4051 = vmatpush.msra.mxu0 0.0
    %4052 = vmatpush.msra.mxu0 0.0
    %4053 = vmatpush.msra.mxu0 0.0
    %4054 = vmatpush.msra.mxu0 0.0
    %4055 = vmatpush.msra.mxu0 0.0
    %4056 = vmatpush.msra.mxu0 0.0
    %4057 = vmatpush.msra.mxu0 0.0
    %4058 = vmatpush.msra.mxu0 0.0
    %4059 = vmatpush.msra.mxu0 0.0
    %4060 = vmatpush.msra.mxu0 %v4043
    %4061 = vmatmul.f32.gmra.mxu0 %v4041
    %v4062 = vpop.f32.mrf.mxu0
    %v4063 = vadd.f32 0.0, %v4062
    %4064 = vdwg.mxu0
    %4066 = vrot.lane.b32.xlu0 %v4063, 16
    %v4067 = vpop.permute.xlu0 %4066
    %4069 = vst.msk [vmem:[#allocation5] sm:$0xf] %vm3080, %v4067
    %v4070 = vld [vmem:[#allocation5] sm:$0xf]
    %v4072 = vsel %vm255, %v4070, 0
    %4074 = vmatpush.msra.mxu0 0.0
    %4075 = vmatpush.msra.mxu0 0.0
    %4076 = vmatpush.msra.mxu0 0.0
    %4077 = vmatpush.msra.mxu0 0.0
    %4078 = vmatpush.msra.mxu0 0.0
    %4079 = vmatpush.msra.mxu0 0.0
    %4080 = vmatpush.msra.mxu0 0.0
    %4081 = vmatpush.msra.mxu0 0.0
    %4082 = vmatpush.msra.mxu0 0.0
    %4083 = vmatpush.msra.mxu0 0.0
    %4084 = vmatpush.msra.mxu0 0.0
    %4085 = vmatpush.msra.mxu0 0.0
    %4086 = vmatpush.msra.mxu0 %v2823
    %4087 = vmatpush.msra.mxu0 %v2822
    %4088 = vmatpush.msra.mxu0 %v2821
    %4089 = vmatpush.msra.mxu0 %v2820
    %4090 = vmatmul.f32.gmra.mxu0 %v4072
    %v4091 = vpop.f32.mrf.mxu0
    %v4092 = vadd.f32 0.0, %v4091
    %4093 = vdwg.mxu0
    %v4094 = vadd.f32 %v3858, %v4092
    %v4095 = vsel %vm2855, %v4094, 0.0
    %4096 = vadd.xlane.f32.xlu0 %v4095
    %v4097 = vpop.xlane.xlu0 %4096
    %v4098 = vmul.f32 %v4097, %v2865
    %v4099 = vsub.f32 %v4094, %v4098
    %v4100 = vmul.f32 %v4099, %v4099
    %v4101 = vsel %vm2855, %v4100, 0.0
    %4102 = vadd.xlane.f32.xlu0 %v4101
    %v4103 = vpop.xlane.xlu0 %4102
    %v4104 = vmul.f32 %v4103, %v2865
    %v4105 = vadd.f32 %v4104, 1e-05
    %v4106 = vrsqrt.pop %v4105
    %v4107 = vmul.f32 %v4106, %v4105
    %v4108 = vmul.f32 %v4107, %v4106
    %v4109 = vmul.f32 0.5, %v4108
    %v4110 = vsub.f32 1.5, %v4109
    %v4111 = vmul.f32 %v4106, %v4110
    %vm4112 = vweird.f32 %v4105
    %vm4113 = vweird.f32 %v4106
    %vm4114 = vmor %vm4112, %vm4113
    %v4115 = vsel %vm4114, %v4106, %v4111
    %v4116 = vmul.f32 %v4099, %v4115
    %v4117 = vmul.f32 %v4116, %v3444
    %v4119 = vsel %vm255, %v4117, 0
    %4121 = vmatpush.msra.mxu0 0.0
    %4122 = vmatpush.msra.mxu0 0.0
    %4123 = vmatpush.msra.mxu0 0.0
    %4124 = vmatpush.msra.mxu0 0.0
    %4125 = vmatpush.msra.mxu0 0.0
    %4126 = vmatpush.msra.mxu0 0.0
    %4127 = vmatpush.msra.mxu0 0.0
    %4128 = vmatpush.msra.mxu0 0.0
    %4129 = vmatpush.msra.mxu0 0.0
    %4130 = vmatpush.msra.mxu0 0.0
    %4131 = vmatpush.msra.mxu0 0.0
    %4132 = vmatpush.msra.mxu0 0.0
    %4133 = vmatpush.msra.mxu0 %v2828
    %4134 = vmatpush.msra.mxu0 %v2827
    %4135 = vmatpush.msra.mxu0 %v2826
    %4136 = vmatpush.msra.mxu0 %v2825
    %4137 = vmatmul.f32.gmra.mxu0 %v4119
    %v4138 = vpop.f32.mrf.mxu0
    %v4139 = vadd.f32 0.0, %v4138
    %4140 = vdwg.mxu0
    %v4141 = vmax.f32 %v4139, 0.0
    %v4143 = vsel %vm3157, %v4141, 0
    %4145 = vmatpush.msra.mxu0 0.0
    %4146 = vmatpush.msra.mxu0 0.0
    %4147 = vmatpush.msra.mxu0 0.0
    %4148 = vmatpush.msra.mxu0 0.0
    %4149 = vmatpush.msra.mxu0 0.0
    %4150 = vmatpush.msra.mxu0 0.0
    %4151 = vmatpush.msra.mxu0 0.0
    %4152 = vmatpush.msra.mxu0 0.0
    %4153 = vmatpush.msra.mxu0 %v2836
    %4154 = vmatpush.msra.mxu0 %v2835
    %4155 = vmatpush.msra.mxu0 %v2834
    %4156 = vmatpush.msra.mxu0 %v2833
    %4157 = vmatpush.msra.mxu0 %v2832
    %4158 = vmatpush.msra.mxu0 %v2831
    %4159 = vmatpush.msra.mxu0 %v2830
    %4160 = vmatpush.msra.mxu0 %v2829
    %4161 = vmatmul.f32.gmra.mxu0 %v4143
    %v4162 = vpop.f32.mrf.mxu0
    %v4163 = vadd.f32 0.0, %v4162
    %4164 = vdwg.mxu0
    %v4165 = vadd.f32 %v4094, %v4163
    %4166 = vst.msk [vmem:[#allocation4] sm:$0xf] %vm2855, %v4165
    %v4167 = vld [vmem:[#allocation4] sm:$0x1]
    %v4168 = vsel %vm2847, %v4167, 0.0
    %4169 = vadd.xlane.f32.xlu0 %v4168
    %v4170 = vpop.xlane.xlu0 %4169
    %v4171 = vmul.f32 %v4170, %v2865
    %v4172 = vsub.f32 %v4167, %v4171
    %v4173 = vmul.f32 %v4172, %v4172
    %v4174 = vsel %vm2847, %v4173, 0.0
    %4175 = vadd.xlane.f32.xlu0 %v4174
    %v4176 = vpop.xlane.xlu0 %4175
    %v4177 = vmul.f32 %v4176, %v2865
    %v4178 = vadd.f32 %v4177, 1e-05
    %v4179 = vrsqrt.pop %v4178
    %v4180 = vmul.f32 %v4179, %v4178
    %v4181 = vmul.f32 %v4180, %v4179
    %v4182 = vmul.f32 0.5, %v4181
    %v4183 = vsub.f32 1.5, %v4182
    %v4184 = vmul.f32 %v4179, %v4183
    %vm4185 = vweird.f32 %v4178
    %vm4186 = vweird.f32 %v4179
    %vm4187 = vmor %vm4185, %vm4186
    %v4188 = vsel %vm4187, %v4179, %v4184
    %v4189 = vmul.f32 %v4172, %v4188
    %v4190 = vmul.f32 %v4189, %v2837
    %v4191 = vadd.f32 %v4190, %v2838
    %v4193 = vsel %vm255, %v4191, 0
    %4195 = vmatpush.msra.mxu0 0.0
    %4196 = vmatpush.msra.mxu0 0.0
    %4197 = vmatpush.msra.mxu0 0.0
    %4198 = vmatpush.msra.mxu0 0.0
    %4199 = vmatpush.msra.mxu0 0.0
    %4200 = vmatpush.msra.mxu0 0.0
    %4201 = vmatpush.msra.mxu0 0.0
    %4202 = vmatpush.msra.mxu0 0.0
    %4203 = vmatpush.msra.mxu0 0.0
    %4204 = vmatpush.msra.mxu0 0.0
    %4205 = vmatpush.msra.mxu0 0.0
    %4206 = vmatpush.msra.mxu0 0.0
    %4207 = vmatpush.msra.mxu0 %v2842
    %4208 = vmatpush.msra.mxu0 %v2841
    %4209 = vmatpush.msra.mxu0 %v2840
    %4210 = vmatpush.msra.mxu0 %v2839
    %4211 = vmatmul.f32.gmra.mxu0 %v4193
    %v4212 = vpop.f32.mrf.mxu0
    %v4213 = vadd.f32 %v2843, %v4212
    %4214 = vdwg.mxu0
    %4215 = vst.msk [vmem:[#allocation9 + $0x1] sm:$0x1] %vm3544, %v4213
    // Predicated region
    $region110: #{tpu_custom_call.1} parent=1 // pred_check
      _
    $region111: #{tpu_custom_call.1} parent=1 // pred_check_branch
      %4217 = sbr.rel (0) target = $region113
    $region112: #{tpu_custom_call.1} parent=1 // pred_region
      %4219 = vsyncadd [#allocation8], 0
      %s4221 = sshll.u32 [#allocation9], 4
      %s4222 = int_to_ptr.vmem [resolvable:$true] %s4221
      %s4223 = sshll.u32 %s26, 4
      %s4224 = int_to_ptr.hbm [resolvable:$true] %s4223
      %4226 = dma.vmem_to_hbm [thread:$0]  %s4222, 32, %s4224, [#allocation8]
    $region113: #{tpu_custom_call.1} parent=1 // pred_fallthru
      _
    // Predicated region
    $region114: #{tpu_custom_call.1} parent=1 // pred_check
      _
    $region115: #{tpu_custom_call.1} parent=1 // pred_check_branch
      %4228 = sbr.rel (0) target = $region117
    $region116: #{tpu_custom_call.1} parent=1 // pred_region
      %4230 = dma.done [#allocation8], 32
    $region117: #{tpu_custom_call.1} parent=1 // pred_fallthru
      _
    %4231 = vsyncpa [#allocation7], 1
    %4232 = vsyncpa [#allocation8], 1

</llo_original>
